<compile_context>
chip_gen: v7x
topology: tpu7x:2x2x1
jax: 0.10.0
libtpu: 0.0.40
codegen_flags: <defaults>
</compile_context>

<pallas_src>
from itertools import count

import jax
import jax.numpy as jnp
import numpy as np
from jax import lax
from jax.experimental import pallas as pl
from jax.experimental.pallas import tpu as pltpu

BN_EPS = 1e-5
LANE = 128
VMEM_LIMIT = 48 * 1024 * 1024   # safe on v5e/v6e (128 MiB) and v7x (64 MiB)


# ----------------------------- Mish variants -------------------------------

def _mish(x):
    # reference form: x * tanh(softplus(x)), torch Softplus threshold=20
    sp = jnp.where(x > 20.0, x, jnp.log1p(jnp.exp(jnp.minimum(x, 20.0))))
    return x * jnp.tanh(sp)


def _mish_fast(x):
    # kernel form: one EUP exp + approx reciprocal.
    # tanh(softplus(x)) = ((1+e^x)^2 - 1) / ((1+e^x)^2 + 1)
    t = jnp.exp(jnp.minimum(x, 20.0))
    u = 1.0 + t
    n = u * u
    r = (n - 1.0) * pl.reciprocal(n + 1.0, approx=True)
    return jnp.where(x > 20.0, x, x * r)


# ----------------------------- Pallas kernels ------------------------------

def _conv1_kernel(x_ref, wa_ref, ba_ref, wb_ref, bb_ref, oa_ref, ob_ref):
    # 1x1 conv (+folded BN) + Mish, emitting the two split halves directly.
    x = x_ref[...]                                              # (tm, Cin) bf16
    ya = jnp.dot(x, wa_ref[...], preferred_element_type=jnp.float32) + ba_ref[...]
    yb = jnp.dot(x, wb_ref[...], preferred_element_type=jnp.float32) + bb_ref[...]
    oa_ref[...] = _mish_fast(ya).astype(oa_ref.dtype)
    ob_ref[...] = _mish_fast(yb).astype(ob_ref.dtype)


def _make_block_kernel(H, W, K, Mp):
    """Fused DepthBottleneckUni: pw1 -> depthwise KxK -> pw2 (each + Mish)."""
    p = K // 2
    wpl = ((p + 7) // 8) * 8        # sublane-aligned left pad for the W axis
    HW = H * W

    def kernel(x_ref, w1_ref, b1_ref, wdw_ref, bdw_ref, w2_ref, b2_ref,
               o_ref, ypad_ref):
        # ---- pw1: 1x1 conv + Mish (bf16 MXU, f32 accumulate) ----
        y1 = jnp.dot(x_ref[...], w1_ref[...],
                     preferred_element_type=jnp.float32) + b1_ref[...]
        y1 = _mish_fast(y1)                                     # (HW, Mp) f32

        # ---- stage into zero-padded VMEM scratch (no host pad / HBM trip) ----
        ypad_ref[...] = jnp.zeros_like(ypad_ref)
        ypad_ref[p:p + H, wpl:wpl + W, :] = y1.reshape(H, W, Mp)

        # ---- depthwise KxK (merged reparam kernel) on the VPU, f32 ----
        wdw = wdw_ref[...]                                      # (K*K, Mp) f32
        acc = None
        for j in range(K):                      # hoist the sublane (W) shifts
            xj = ypad_ref[:, wpl - p + j: wpl - p + j + W, :]   # (H+2p, W, Mp)
            for i in range(K):
                tap = xj[i:i + H, :, :] * wdw[i * K + j]
                acc = tap if acc is None else acc + tap
        acc = acc + bdw_ref[...]
        y2 = _mish_fast(acc)                                    # (H, W, Mp) f32

        # ---- pw2 (one_conv): 1x1 conv + Mish, back on the MXU ----
        y3 = jnp.dot(y2.reshape(HW, Mp).astype(jnp.bfloat16), w2_ref[...],
                     preferred_element_type=jnp.float32) + b2_ref[...]
        o_ref[...] = _mish_fast(y3).astype(o_ref.dtype)

    return kernel


def _make_conv2_kernel(num_segments):
    S = num_segments

    def kernel(*refs):
        seg_refs = refs[:S]
        w_refs = refs[S:2 * S]
        b_ref = refs[2 * S]
        o_ref = refs[2 * S + 1]
        acc = jnp.dot(seg_refs[0][...], w_refs[0][...],
                      preferred_element_type=jnp.float32)
        for s in range(1, S):
            acc = acc + jnp.dot(seg_refs[s][...], w_refs[s][...],
                                preferred_element_type=jnp.float32)
        acc = acc + b_ref[...]
        o_ref[...] = _mish_fast(acc).astype(o_ref.dtype)

    return kernel


# ---------------------------- pallas_call wrappers --------------------------

def _row_tile(M, target=1024):
    """Largest row tile <= target that divides M (mult. of 8 preferred)."""
    for cand in (min(target, M), 512, 256, 128, 64, 32, 16, 8):
        if cand <= M and M % cand == 0:
            return cand
    return min(target, M)     # ragged tail: Pallas masks boundary block stores


def conv1_pallas(x_m, wa, ba, wb, bb):
    M, Cin = x_m.shape
    Cp = wa.shape[1]
    tm = _row_tile(M)
    grid = (pl.cdiv(M, tm),)
    return pl.pallas_call(
        _conv1_kernel,
        out_shape=(jax.ShapeDtypeStruct((M, Cp), jnp.bfloat16),
                   jax.ShapeDtypeStruct((M, Cp), jnp.bfloat16)),
        grid=grid,
        in_specs=[
            pl.BlockSpec((tm, Cin), lambda i: (i, 0)),
            pl.BlockSpec((Cin, Cp), lambda i: (0, 0)),
            pl.BlockSpec((1, Cp), lambda i: (0, 0)),
            pl.BlockSpec((Cin, Cp), lambda i: (0, 0)),
            pl.BlockSpec((1, Cp), lambda i: (0, 0)),
        ],
        out_specs=(pl.BlockSpec((tm, Cp), lambda i: (i, 0)),
                   pl.BlockSpec((tm, Cp), lambda i: (i, 0))),
        compiler_params=pltpu.CompilerParams(
            dimension_semantics=("parallel",),
            vmem_limit_bytes=VMEM_LIMIT),
    )(x_m, wa, ba, wb, bb)


def block_pallas(x_m, bp, N, H, W, K):
    # TODO(synk): for very large H*W (v7x 64 MiB VMEM) tile over H with a K-1
    # halo instead of one whole image per grid step.
    M, Cp = x_m.shape
    Mp = bp["w1"].shape[1]
    HW = H * W
    p = K // 2
    wpl = ((p + 7) // 8) * 8
    return pl.pallas_call(
        _make_block_kernel(H, W, K, Mp),
        out_shape=jax.ShapeDtypeStruct((M, Cp), jnp.bfloat16),
        grid=(N,),
        in_specs=[
            pl.BlockSpec((HW, Cp), lambda n: (n, 0)),
            pl.BlockSpec((Cp, Mp), lambda n: (0, 0)),
            pl.BlockSpec((1, Mp), lambda n: (0, 0)),
            pl.BlockSpec((K * K, Mp), lambda n: (0, 0)),
            pl.BlockSpec((1, Mp), lambda n: (0, 0)),
            pl.BlockSpec((Mp, Cp), lambda n: (0, 0)),
            pl.BlockSpec((1, Cp), lambda n: (0, 0)),
        ],
        out_specs=pl.BlockSpec((HW, Cp), lambda n: (n, 0)),
        scratch_shapes=[pltpu.VMEM((H + 2 * p, 2 * wpl + W, Mp), jnp.float32)],
        compiler_params=pltpu.CompilerParams(
            dimension_semantics=("parallel",),
            vmem_limit_bytes=VMEM_LIMIT),
    )(x_m, bp["w1"], bp["b1"], bp["wdw"], bp["bdw"], bp["w2"], bp["b2"])


def conv2_pallas(seg_list, w_list, bias):
    S = len(seg_list)
    M, Cp = seg_list[0].shape
    Op = w_list[0].shape[1]
    tm = _row_tile(M)
    grid = (pl.cdiv(M, tm),)
    in_specs = ([pl.BlockSpec((tm, Cp), lambda i: (i, 0)) for _ in range(S)]
                + [pl.BlockSpec((Cp, Op), lambda i: (0, 0)) for _ in range(S)]
                + [pl.BlockSpec((1, Op), lambda i: (0, 0))])
    return pl.pallas_call(
        _make_conv2_kernel(S),
        out_shape=jax.ShapeDtypeStruct((M, Op), jnp.float32),
        grid=grid,
        in_specs=in_specs,
        out_specs=pl.BlockSpec((tm, Op), lambda i: (i, 0)),
        compiler_params=pltpu.CompilerParams(
            dimension_semantics=("parallel",),
            vmem_limit_bytes=VMEM_LIMIT),
    )(*seg_list, *w_list, bias)


# ------------------------- parameters & BN folding -------------------------

def _dil_config(kernel_size):
    table = {
        17: ([5, 9, 3, 3, 3], [1, 2, 4, 5, 7]),
        15: ([5, 7, 3, 3, 3], [1, 2, 3, 5, 7]),
        13: ([5, 7, 3, 3, 3], [1, 2, 3, 4, 5]),
        11: ([5, 5, 3, 3, 3], [1, 2, 3, 4, 5]),
        9: ([7, 5, 3], [1, 1, 1]),
        7: ([5, 3], [1, 1]),
        5: ([3, 1], [1, 1]),
        3: ([3, 1], [1, 1]),
    }
    return table[kernel_size]


def _init_bn(key, c):
    k1, k2, k3, k4 = jax.random.split(key, 4)
    return {
        "gamma": 1.0 + 0.1 * jax.random.normal(k1, (c,), jnp.float32),
        "beta": 0.1 * jax.random.normal(k2, (c,), jnp.float32),
        "mean": 0.1 * jax.random.normal(k3, (c,), jnp.float32),
        "var": 1.0 + 0.1 * jnp.abs(jax.random.normal(k4, (c,), jnp.float32)),
    }


def init_rephdw_params(key, in_channels, out_channels, depth,
                       expansion=0.5, kersize=5, depth_expansion=1):
    c_ = int(out_channels * expansion)
    c1 = 2 * c_
    mid = int(c_ * depth_expansion)
    ks, dils = _dil_config(kersize)
    ctr = count()

    def nk():
        return jax.random.fold_in(key, next(ctr))

    def conv_w(cout, cin, k):
        return 0.2 * jax.random.normal(nk(), (cout, cin, k, k), jnp.float32)

    raw = {"conv1": {"w": conv_w(c1, in_channels, 1), "bn": _init_bn(nk(), c1)},
           "blocks": []}
    for _ in range(depth):
        blk = {"pw1": {"w": conv_w(mid, c_, 1), "bn": _init_bn(nk(), mid)}}
        dw = {"w_lk": 0.2 * jax.random.normal(nk(), (mid, 1, kersize, kersize),
                                              jnp.float32),
              "bn_lk": _init_bn(nk(), mid),
              "branches": [],
              "norm": _init_bn(nk(), mid)}
        for k_, r_ in zip(ks, dils):
            dw["branches"].append(
                {"k": k_, "r": r_,
                 "w": 0.2 * jax.random.normal(nk(), (mid, 1, k_, k_), jnp.float32),
                 "bn": _init_bn(nk(), mid)})
        blk["dw"] = dw
        blk["pw2"] = {"w": conv_w(c_, mid, 1), "bn": _init_bn(nk(), c_)}
        raw["blocks"].append(blk)
    raw["conv2"] = {"w": conv_w(out_channels, c_ * (depth + 2), 1),
                    "bn": _init_bn(nk(), out_channels)}
    return raw, c_


def _bn_scale_bias(bn):
    s = bn["gamma"] / jnp.sqrt(bn["var"] + BN_EPS)
    return s, bn["beta"] - bn["mean"] * s


def _fold_pw(p):
    s, b = _bn_scale_bias(p["bn"])
    w = p["w"][:, :, 0, 0]                     # (Cout, Cin) torch layout
    w_io = (w * s[:, None]).T                  # (Cin, Cout)
    return w_io, b


def _fold_dw(dw, K):
    # Fuse lk_origin with origin_bn, then merge dilated branches (exact).
    s, b = _bn_scale_bias(dw["bn_lk"])
    kmerge = dw["w_lk"][:, 0] * s[:, None, None]     # (C, K, K)
    bmerge = b
    for br in dw["branches"]:
        sb, bb = _bn_scale_bias(br["bn"])
        wk = br["w"][:, 0] * sb[:, None, None]       # (C, k, k)
        k_, r_ = br["k"], br["r"]
        eq = r_ * (k_ - 1) + 1
        if r_ > 1:
            dil = jnp.zeros((wk.shape[0], eq, eq), wk.dtype)
            dil = dil.at[:, ::r_, ::r_].set(wk)
        else:
            dil = wk
        pad = K // 2 - eq // 2
        kmerge = kmerge + jnp.pad(dil, ((0, 0), (pad, pad), (pad, pad)))
        bmerge = bmerge + bb
    # fold UniRepLKNetBlock.norm (BN applied after the sum)
    sn = dw["norm"]["gamma"] / jnp.sqrt(dw["norm"]["var"] + BN_EPS)
    kmerge = kmerge * sn[:, None, None]
    bmerge = (bmerge - dw["norm"]["mean"]) * sn + dw["norm"]["beta"]
    return jnp.transpose(kmerge, (1, 2, 0)), bmerge   # (K, K, C), (C,)


def fold_params(raw, kersize):
    return {"conv1": _fold_pw(raw["conv1"]),
            "conv2": _fold_pw(raw["conv2"]),
            "blocks": [{"pw1": _fold_pw(b["pw1"]),
                        "dw": _fold_dw(b["dw"], kersize),
                        "pw2": _fold_pw(b["pw2"])} for b in raw["blocks"]]}


# ------------------ lane-dense padding / bf16 weight prep ------------------

def _pad_lane(c):
    return ((c + LANE - 1) // LANE) * LANE


def _pad2(a, r, c):
    return jnp.pad(a, ((0, r - a.shape[0]), (0, c - a.shape[1])))


def _pad1(v, n):
    return jnp.pad(v, (0, n - v.shape[0]))


def prepare_pallas_params(folded, c_, out_channels, kersize):
    K = kersize
    Cp = _pad_lane(c_)
    Op = _pad_lane(out_channels)

    w1, b1 = folded["conv1"]                     # (Cin, 2c_), (2c_,)
    Cin = w1.shape[0]
    conv1 = {
        "wa": _pad2(w1[:, :c_], Cin, Cp).astype(jnp.bfloat16),
        "ba": _pad1(b1[:c_], Cp).reshape(1, Cp).astype(jnp.float32),
        "wb": _pad2(w1[:, c_:], Cin, Cp).astype(jnp.bfloat16),
        "bb": _pad1(b1[c_:], Cp).reshape(1, Cp).astype(jnp.float32),
    }

    blocks = []
    for blk in folded["blocks"]:
        pw1_w, pw1_b = blk["pw1"]                # (c_, mid), (mid,)
        dw_w, dw_b = blk["dw"]                   # (K, K, mid), (mid,)
        pw2_w, pw2_b = blk["pw2"]                # (mid, c_), (c_,)
        mid = pw1_w.shape[1]
        Mp = _pad_lane(mid)
        blocks.append({
            "w1": _pad2(pw1_w, Cp, Mp).astype(jnp.bfloat16),
            "b1": _pad1(pw1_b, Mp).reshape(1, Mp).astype(jnp.float32),
            "wdw": _pad2(dw_w.reshape(K * K, mid), K * K, Mp).astype(jnp.float32),
            "bdw": _pad1(dw_b, Mp).reshape(1, Mp).astype(jnp.float32),
            "w2": _pad2(pw2_w, Mp, Cp).astype(jnp.bfloat16),
            "b2": _pad1(pw2_b, Cp).reshape(1, Cp).astype(jnp.float32),
        })

    w2c, b2c = folded["conv2"]                   # (S*c_, out), (out,)
    S = len(folded["blocks"]) + 2
    conv2 = {
        "ws": [_pad2(w2c[s * c_:(s + 1) * c_, :], Cp, Op).astype(jnp.bfloat16)
               for s in range(S)],
        "b": _pad1(b2c, Op).reshape(1, Op).astype(jnp.float32),
    }
    return {"conv1": conv1, "blocks": blocks, "conv2": conv2,
            "c_": c_, "out_channels": out_channels, "K": K}


# ------------------------------ forward pass -------------------------------

def rephdw_forward_pallas(x_nchw, params):
    N, Cin, H, W = x_nchw.shape
    M = N * H * W
    K = params["K"]

    # boundary layout change: NCHW -> flat (N*H*W, Cin), bf16 activations
    x = jnp.transpose(x_nchw, (0, 2, 3, 1)).reshape(M, Cin).astype(jnp.bfloat16)

    c1 = params["conv1"]
    xa, xb = conv1_pallas(x, c1["wa"], c1["ba"], c1["wb"], c1["bb"])

    outs = [xa, xb]                              # torch .split((c_, c_), dim=1)
    for bp in params["blocks"]:
        outs.append(block_pallas(outs[-1], bp, N, H, W, K))

    c2 = params["conv2"]
    y = conv2_pallas(outs, c2["ws"], c2["b"])    # concat-free segment accumulate
    Op = y.shape[1]
    y = y.reshape(N, H, W, Op)[..., :params["out_channels"]]
    return jnp.transpose(y, (0, 3, 1, 2))        # NHWC -> NCHW, f32


# -------------------- plain-JAX reference (unmerged form) ------------------

def _bn_ref(x, bn):
    s, b = _bn_scale_bias(bn)
    return x * s + b


def _conv_block_ref(x, p):     # Conv: 1x1 conv + BN + Mish
    y = jnp.einsum("nhwc,oc->nhwo", x, p["w"][:, :, 0, 0])
    return _mish(_bn_ref(y, p["bn"]))


def _dwconv_ref(x, w_torch, k, r):
    C = x.shape[-1]
    kern = jnp.transpose(w_torch, (2, 3, 1, 0))       # (k,k,1,C) HWIO
    pad = (r * (k - 1) + 1) // 2
    return lax.conv_general_dilated(
        x, kern, (1, 1), [(pad, pad), (pad, pad)], rhs_dilation=(r, r),
        dimension_numbers=("NHWC", "HWIO", "NHWC"), feature_group_count=C)


def rephdw_forward_ref(x_nchw, raw, c_, kersize):
    x = jnp.transpose(x_nchw, (0, 2, 3, 1))
    x = _conv_block_ref(x, raw["conv1"])
    outs = [x[..., :c_], x[..., c_:]]
    for blk in raw["blocks"]:
        y = _conv_block_ref(outs[-1], blk["pw1"])
        dw = blk["dw"]
        z = _bn_ref(_dwconv_ref(y, dw["w_lk"], kersize, 1), dw["bn_lk"])
        for br in dw["branches"]:
            z = z + _bn_ref(_dwconv_ref(y, br["w"], br["k"], br["r"]), br["bn"])
        z = _bn_ref(z, dw["norm"])
        y = _mish(z)
        y = _conv_block_ref(y, blk["pw2"])
        outs.append(y)
    y = jnp.concatenate(outs, axis=-1)
    y = _conv_block_ref(y, raw["conv2"])
    return jnp.transpose(y, (0, 3, 1, 2))


# ----------------------------------- main ----------------------------------

if __name__ == "__main__":
    key = jax.random.PRNGKey(0)
    in_channels, out_channels, depth, kersize = 4, 8, 2, 5
    N, H, W = 2, 16, 16

    kx, kp = jax.random.split(key)
    x = jax.random.normal(kx, (N, in_channels, H, W), jnp.float32)

    raw, c_ = init_rephdw_params(kp, in_channels, out_channels, depth,
                                 expansion=0.5, kersize=kersize,
                                 depth_expansion=1)
    folded = fold_params(raw, kersize)
    params = prepare_pallas_params(folded, c_, out_channels, kersize)

    out = rephdw_forward_pallas(x, params)
    out = jax.block_until_ready(out)

    ref = jax.block_until_ready(rephdw_forward_ref(x, raw, c_, kersize))

    assert out.shape == (N, out_channels, H, W)
    # bf16 MXU operands + bf16 inter-stage activations -> relaxed tolerance.
    np.testing.assert_allclose(np.asarray(out), np.asarray(ref),
                               rtol=5e-2, atol=5e-2)
    print("KERNEL_OK")
</pallas_src>

<mosaic_0001>
module attributes {stable_mosaic.version = 11 : i64} {
  func.func @_conv1_kernel(%arg0: i32, %arg1: memref<512x4xbf16, #tpu.memory_space<vmem>>, %arg2: memref<4x128xbf16, #tpu.memory_space<vmem>>, %arg3: memref<1x128xf32, #tpu.memory_space<vmem>>, %arg4: memref<4x128xbf16, #tpu.memory_space<vmem>>, %arg5: memref<1x128xf32, #tpu.memory_space<vmem>>, %arg6: memref<512x128xbf16, #tpu.memory_space<vmem>>, %arg7: memref<512x128xbf16, #tpu.memory_space<vmem>>) attributes {dimension_semantics = [#tpu.dimension_semantics<parallel>], iteration_bounds = array<i64: 1>, scalar_prefetch = 0 : i64, scratch_operands = 0 : i64, tpu.core_type = #tpu.core_type<tc>, window_params = [{transform_indices = @transform_0, window_bounds = array<i64: 512, 4>}, {pipeline_mode = #tpu.pipeline_mode<synchronous>, transform_indices = @transform_1, window_bounds = array<i64: 4, 128>}, {pipeline_mode = #tpu.pipeline_mode<synchronous>, transform_indices = @transform_2, window_bounds = array<i64: 1, 128>}, {pipeline_mode = #tpu.pipeline_mode<synchronous>, transform_indices = @transform_3, window_bounds = array<i64: 4, 128>}, {pipeline_mode = #tpu.pipeline_mode<synchronous>, transform_indices = @transform_4, window_bounds = array<i64: 1, 128>}, {transform_indices = @transform_5, window_bounds = array<i64: 512, 128>}, {transform_indices = @transform_6, window_bounds = array<i64: 512, 128>}]} {
    %c0 = arith.constant 0 : index
    %c0_0 = arith.constant 0 : index
    %0 = vector.load %arg1[%c0, %c0_0] : memref<512x4xbf16, #tpu.memory_space<vmem>>, vector<512x4xbf16>
    %c0_1 = arith.constant 0 : index
    %c0_2 = arith.constant 0 : index
    %1 = vector.load %arg2[%c0_1, %c0_2] : memref<4x128xbf16, #tpu.memory_space<vmem>>, vector<4x128xbf16>
    %cst = arith.constant dense<0.000000e+00> : vector<512x128xf32>
    %2 = tpu.matmul %0, %1, %cst {dimension_numbers = #tpu.dot_dimension_numbers<[1], [0], [0], [1], [0, 0, 1, 1], [], []>} : vector<512x4xbf16>, vector<4x128xbf16>, vector<512x128xf32> -> vector<512x128xf32>
    %c0_3 = arith.constant 0 : index
    %c0_4 = arith.constant 0 : index
    %3 = vector.load %arg3[%c0_3, %c0_4] : memref<1x128xf32, #tpu.memory_space<vmem>>, vector<1x128xf32>
    %4 = vector.broadcast %3 : vector<1x128xf32> to vector<512x128xf32>
    %5 = arith.addf %2, %4 : vector<512x128xf32>
    %c0_5 = arith.constant 0 : index
    %c0_6 = arith.constant 0 : index
    %6 = vector.load %arg4[%c0_5, %c0_6] : memref<4x128xbf16, #tpu.memory_space<vmem>>, vector<4x128xbf16>
    %cst_7 = arith.constant dense<0.000000e+00> : vector<512x128xf32>
    %7 = tpu.matmul %0, %6, %cst_7 {dimension_numbers = #tpu.dot_dimension_numbers<[1], [0], [0], [1], [0, 0, 1, 1], [], []>} : vector<512x4xbf16>, vector<4x128xbf16>, vector<512x128xf32> -> vector<512x128xf32>
    %c0_8 = arith.constant 0 : index
    %c0_9 = arith.constant 0 : index
    %8 = vector.load %arg5[%c0_8, %c0_9] : memref<1x128xf32, #tpu.memory_space<vmem>>, vector<1x128xf32>
    %9 = vector.broadcast %8 : vector<1x128xf32> to vector<512x128xf32>
    %10 = arith.addf %7, %9 : vector<512x128xf32>
    %cst_10 = arith.constant 2.000000e+01 : f32
    %11 = vector.broadcast %cst_10 : f32 to vector<512x128xf32>
    %12 = arith.minimumf %5, %11 : vector<512x128xf32>
    %13 = math.exp %12 : vector<512x128xf32>
    %cst_11 = arith.constant 1.000000e+00 : f32
    %14 = vector.broadcast %cst_11 : f32 to vector<512x128xf32>
    %15 = arith.addf %14, %13 : vector<512x128xf32>
    %16 = arith.mulf %15, %15 : vector<512x128xf32>
    %cst_12 = arith.constant 1.000000e+00 : f32
    %17 = vector.broadcast %cst_12 : f32 to vector<512x128xf32>
    %18 = arith.subf %16, %17 : vector<512x128xf32>
    %cst_13 = arith.constant 1.000000e+00 : f32
    %19 = vector.broadcast %cst_13 : f32 to vector<512x128xf32>
    %20 = arith.addf %16, %19 : vector<512x128xf32>
    %21 = tpu.reciprocal %20 {approx = true} : vector<512x128xf32> -> vector<512x128xf32>
    %22 = arith.mulf %18, %21 : vector<512x128xf32>
    %cst_14 = arith.constant 2.000000e+01 : f32
    %23 = vector.broadcast %cst_14 : f32 to vector<512x128xf32>
    %24 = arith.cmpf ogt, %5, %23 : vector<512x128xf32>
    %25 = arith.mulf %5, %22 : vector<512x128xf32>
    %26 = arith.select %24, %5, %25 : vector<512x128xi1>, vector<512x128xf32>
    %27 = arith.truncf %26 : vector<512x128xf32> to vector<512x128xbf16>
    %c0_15 = arith.constant 0 : index
    %c0_16 = arith.constant 0 : index
    %28 = vector.load %arg6[%c0_15, %c0_16] : memref<512x128xbf16, #tpu.memory_space<vmem>>, vector<512x128xbf16>
    tpu.vector_store %arg6[%c0_15, %c0_16], %27 {strides = array<i32>} : memref<512x128xbf16, #tpu.memory_space<vmem>>, vector<512x128xbf16>,
    %cst_17 = arith.constant 2.000000e+01 : f32
    %29 = vector.broadcast %cst_17 : f32 to vector<512x128xf32>
    %30 = arith.minimumf %10, %29 : vector<512x128xf32>
    %31 = math.exp %30 : vector<512x128xf32>
    %cst_18 = arith.constant 1.000000e+00 : f32
    %32 = vector.broadcast %cst_18 : f32 to vector<512x128xf32>
    %33 = arith.addf %32, %31 : vector<512x128xf32>
    %34 = arith.mulf %33, %33 : vector<512x128xf32>
    %cst_19 = arith.constant 1.000000e+00 : f32
    %35 = vector.broadcast %cst_19 : f32 to vector<512x128xf32>
    %36 = arith.subf %34, %35 : vector<512x128xf32>
    %cst_20 = arith.constant 1.000000e+00 : f32
    %37 = vector.broadcast %cst_20 : f32 to vector<512x128xf32>
    %38 = arith.addf %34, %37 : vector<512x128xf32>
    %39 = tpu.reciprocal %38 {approx = true} : vector<512x128xf32> -> vector<512x128xf32>
    %40 = arith.mulf %36, %39 : vector<512x128xf32>
    %cst_21 = arith.constant 2.000000e+01 : f32
    %41 = vector.broadcast %cst_21 : f32 to vector<512x128xf32>
    %42 = arith.cmpf ogt, %10, %41 : vector<512x128xf32>
    %43 = arith.mulf %10, %40 : vector<512x128xf32>
    %44 = arith.select %42, %10, %43 : vector<512x128xi1>, vector<512x128xf32>
    %45 = arith.truncf %44 : vector<512x128xf32> to vector<512x128xbf16>
    %c0_22 = arith.constant 0 : index
    %c0_23 = arith.constant 0 : index
    %46 = vector.load %arg7[%c0_22, %c0_23] : memref<512x128xbf16, #tpu.memory_space<vmem>>, vector<512x128xbf16>
    tpu.vector_store %arg7[%c0_22, %c0_23], %45 {strides = array<i32>} : memref<512x128xbf16, #tpu.memory_space<vmem>>, vector<512x128xbf16>,
    return
  }
  func.func @transform_0(%arg0: i32) -> (i32, i32) {
    %c0_i32 = arith.constant 0 : i32
    %c0_i32_0 = arith.constant 0 : i32
    return %arg0, %c0_i32 : i32, i32
  }
  func.func @transform_1(%arg0: i32) -> (i32, i32) {
    %c0_i32 = arith.constant 0 : i32
    %c0_i32_0 = arith.constant 0 : i32
    %c0_i32_1 = arith.constant 0 : i32
    return %c0_i32, %c0_i32_0 : i32, i32
  }
  func.func @transform_2(%arg0: i32) -> (i32, i32) {
    %c0_i32 = arith.constant 0 : i32
    %c0_i32_0 = arith.constant 0 : i32
    %c0_i32_1 = arith.constant 0 : i32
    return %c0_i32, %c0_i32_0 : i32, i32
  }
  func.func @transform_3(%arg0: i32) -> (i32, i32) {
    %c0_i32 = arith.constant 0 : i32
    %c0_i32_0 = arith.constant 0 : i32
    %c0_i32_1 = arith.constant 0 : i32
    return %c0_i32, %c0_i32_0 : i32, i32
  }
  func.func @transform_4(%arg0: i32) -> (i32, i32) {
    %c0_i32 = arith.constant 0 : i32
    %c0_i32_0 = arith.constant 0 : i32
    %c0_i32_1 = arith.constant 0 : i32
    return %c0_i32, %c0_i32_0 : i32, i32
  }
  func.func @transform_5(%arg0: i32) -> (i32, i32) {
    %c0_i32 = arith.constant 0 : i32
    %c0_i32_0 = arith.constant 0 : i32
    return %arg0, %c0_i32 : i32, i32
  }
  func.func @transform_6(%arg0: i32) -> (i32, i32) {
    %c0_i32 = arith.constant 0 : i32
    %c0_i32_0 = arith.constant 0 : i32
    return %arg0, %c0_i32 : i32, i32
  }
}

</mosaic_0001>

<llo_original>
// kernel: tpu_custom_call.1
$region0: #{tpu_custom_call.1}
  #allocation0 [shape = 'u32[]', space=smem, size = 0x4, offset = 0x4, fixed_abs, tag = 'smem constant byte address 0x4 - core index']
  #allocation1 [shape = 'u32[144,128]{1,0:T(1,128)}', space=vmem, size = 0x12000, scoped, tag = 'internal scratch']
  %s0 = inlined_call_operand.vmem [shape: bf16[512,4], index: 0, kind: input, shape index: {}]
  %s1 = inlined_call_operand.vmem [shape: bf16[4,128], index: 1, kind: input, shape index: {}]
  %s2 = inlined_call_operand.vmem [shape: f32[1,128], index: 2, kind: input, shape index: {}]
  %s3 = inlined_call_operand.vmem [shape: bf16[4,128], index: 3, kind: input, shape index: {}]
  %s4 = inlined_call_operand.vmem [shape: f32[1,128], index: 4, kind: input, shape index: {}]
  %s5 = inlined_call_operand.hbm [shape: bf16[512,128], index: 5, kind: output, shape index: {0}]
  %s6 = inlined_call_operand.hbm [shape: bf16[512,128], index: 6, kind: output, shape index: {1}]
  %7 = xla_tuple %s5, %s6
  %s8 = sld [smem:[#allocation0]]
  $region38: #{tpu_custom_call.1} parent=0
    _
  %s10 = ssub.s32 1, %s8
  %s11 = scalar_select 0, %s10, %s8
  $region1: #{tpu_custom_call.1} parent=0
    #allocation2 [shape = 'u8[131072]{0}', space=vmem, size = 0x20000, scoped, tag = 'output window, operand 0, single buffered']
    #allocation3 [shape = 's32[1]{0}', space=sflag, size = 0x4, scoped, tag = 'scoped memory for tpu_custom_call.1']
    #allocation4 [shape = 'u8[131072]{0}', space=vmem, size = 0x20000, scoped, tag = 'output window, operand 1, single buffered']
    #allocation5 [shape = 's32[1]{0}', space=sflag, size = 0x4, scoped, tag = 'scoped memory for tpu_custom_call.1']
    %12 = vsyncpa [#allocation3], 0
    %13 = vsyncpa [#allocation5], 0
    // Predicated region
    $region2: #{tpu_custom_call.1} parent=1 // pred_check
      _
    $region3: #{tpu_custom_call.1} parent=1 // pred_check_branch
      %15 = sbr.rel (0) target = $region5
    $region4: #{tpu_custom_call.1} parent=1 // pred_region
      _
    $region5: #{tpu_custom_call.1} parent=1 // pred_fallthru
      _
    // Predicated region
    $region6: #{tpu_custom_call.1} parent=1 // pred_check
      _
    $region7: #{tpu_custom_call.1} parent=1 // pred_check_branch
      %17 = sbr.rel (0) target = $region9
    $region8: #{tpu_custom_call.1} parent=1 // pred_region
      _
    $region9: #{tpu_custom_call.1} parent=1 // pred_fallthru
      _
    // Predicated region
    $region10: #{tpu_custom_call.1} parent=1 // pred_check
      _
    $region11: #{tpu_custom_call.1} parent=1 // pred_check_branch
      %19 = sbr.rel (0) target = $region13
    $region12: #{tpu_custom_call.1} parent=1 // pred_region
      _
    $region13: #{tpu_custom_call.1} parent=1 // pred_fallthru
      _
    // Predicated region
    $region14: #{tpu_custom_call.1} parent=1 // pred_check
      _
    $region15: #{tpu_custom_call.1} parent=1 // pred_check_branch
      %21 = sbr.rel (0) target = $region17
    $region16: #{tpu_custom_call.1} parent=1 // pred_region
      _
    $region17: #{tpu_custom_call.1} parent=1 // pred_fallthru
      _
    // Predicated region
    $region18: #{tpu_custom_call.1} parent=1 // pred_check
      _
    $region19: #{tpu_custom_call.1} parent=1 // pred_check_branch
      %23 = sbr.rel (0) target = $region21
    $region20: #{tpu_custom_call.1} parent=1 // pred_region
      _
    $region21: #{tpu_custom_call.1} parent=1 // pred_fallthru
      _
    %v25 = vld [vmem:[%s0] sm:$0xf]
    %v26 = vld [vmem:[%s0 + $0x4] sm:$0xf]
    %v27 = vld [vmem:[%s0 + $0x8] sm:$0xf]
    %v28 = vld [vmem:[%s0 + $0xc] sm:$0xf]
    %v29 = vld [vmem:[%s0 + $0x10] sm:$0xf]
    %v30 = vld [vmem:[%s0 + $0x14] sm:$0xf]
    %v31 = vld [vmem:[%s0 + $0x18] sm:$0xf]
    %v32 = vld [vmem:[%s0 + $0x1c] sm:$0xf]
    %v33 = vld [vmem:[%s0 + $0x20] sm:$0xf]
    %v34 = vld [vmem:[%s0 + $0x24] sm:$0xf]
    %v35 = vld [vmem:[%s0 + $0x28] sm:$0xf]
    %v36 = vld [vmem:[%s0 + $0x2c] sm:$0xf]
    %v37 = vld [vmem:[%s0 + $0x30] sm:$0xf]
    %v38 = vld [vmem:[%s0 + $0x34] sm:$0xf]
    %v39 = vld [vmem:[%s0 + $0x38] sm:$0xf]
    %v40 = vld [vmem:[%s0 + $0x3c] sm:$0xf]
    %v41 = vld [vmem:[%s0 + $0x40] sm:$0xf]
    %v42 = vld [vmem:[%s0 + $0x44] sm:$0xf]
    %v43 = vld [vmem:[%s0 + $0x48] sm:$0xf]
    %v44 = vld [vmem:[%s0 + $0x4c] sm:$0xf]
    %v45 = vld [vmem:[%s0 + $0x50] sm:$0xf]
    %v46 = vld [vmem:[%s0 + $0x54] sm:$0xf]
    %v47 = vld [vmem:[%s0 + $0x58] sm:$0xf]
    %v48 = vld [vmem:[%s0 + $0x5c] sm:$0xf]
    %v49 = vld [vmem:[%s0 + $0x60] sm:$0xf]
    %v50 = vld [vmem:[%s0 + $0x64] sm:$0xf]
    %v51 = vld [vmem:[%s0 + $0x68] sm:$0xf]
    %v52 = vld [vmem:[%s0 + $0x6c] sm:$0xf]
    %v53 = vld [vmem:[%s0 + $0x70] sm:$0xf]
    %v54 = vld [vmem:[%s0 + $0x74] sm:$0xf]
    %v55 = vld [vmem:[%s0 + $0x78] sm:$0xf]
    %v56 = vld [vmem:[%s0 + $0x7c] sm:$0xf]
    %v57 = vld [vmem:[%s0 + $0x80] sm:$0xf]
    %v58 = vld [vmem:[%s0 + $0x84] sm:$0xf]
    %v59 = vld [vmem:[%s0 + $0x88] sm:$0xf]
    %v60 = vld [vmem:[%s0 + $0x8c] sm:$0xf]
    %v61 = vld [vmem:[%s0 + $0x90] sm:$0xf]
    %v62 = vld [vmem:[%s0 + $0x94] sm:$0xf]
    %v63 = vld [vmem:[%s0 + $0x98] sm:$0xf]
    %v64 = vld [vmem:[%s0 + $0x9c] sm:$0xf]
    %v65 = vld [vmem:[%s0 + $0xa0] sm:$0xf]
    %v66 = vld [vmem:[%s0 + $0xa4] sm:$0xf]
    %v67 = vld [vmem:[%s0 + $0xa8] sm:$0xf]
    %v68 = vld [vmem:[%s0 + $0xac] sm:$0xf]
    %v69 = vld [vmem:[%s0 + $0xb0] sm:$0xf]
    %v70 = vld [vmem:[%s0 + $0xb4] sm:$0xf]
    %v71 = vld [vmem:[%s0 + $0xb8] sm:$0xf]
    %v72 = vld [vmem:[%s0 + $0xbc] sm:$0xf]
    %v73 = vld [vmem:[%s0 + $0xc0] sm:$0xf]
    %v74 = vld [vmem:[%s0 + $0xc4] sm:$0xf]
    %v75 = vld [vmem:[%s0 + $0xc8] sm:$0xf]
    %v76 = vld [vmem:[%s0 + $0xcc] sm:$0xf]
    %v77 = vld [vmem:[%s0 + $0xd0] sm:$0xf]
    %v78 = vld [vmem:[%s0 + $0xd4] sm:$0xf]
    %v79 = vld [vmem:[%s0 + $0xd8] sm:$0xf]
    %v80 = vld [vmem:[%s0 + $0xdc] sm:$0xf]
    %v81 = vld [vmem:[%s0 + $0xe0] sm:$0xf]
    %v82 = vld [vmem:[%s0 + $0xe4] sm:$0xf]
    %v83 = vld [vmem:[%s0 + $0xe8] sm:$0xf]
    %v84 = vld [vmem:[%s0 + $0xec] sm:$0xf]
    %v85 = vld [vmem:[%s0 + $0xf0] sm:$0xf]
    %v86 = vld [vmem:[%s0 + $0xf4] sm:$0xf]
    %v87 = vld [vmem:[%s0 + $0xf8] sm:$0xf]
    %v88 = vld [vmem:[%s0 + $0xfc] sm:$0xf]
    %v89 = vld [vmem:[%s1] sm:$0x3]
    %v90 = vld [vmem:[%s2] sm:$0x1]
    %v92 = vlaneseq
    %v93 = vshrl.u32 %v92, 7
    %v94 = vsub.s32 0, %v93
    %v95 = vrot.slane %v90, %v94
    %v161 = vunpack.c.l.b16 %v25
    %v162 = vunpack.c.l.b16 %v26
    %v163 = vunpack.c.l.b16 %v27
    %v164 = vunpack.c.l.b16 %v28
    %v165 = vunpack.c.l.b16 %v29
    %v166 = vunpack.c.l.b16 %v30
    %v167 = vunpack.c.l.b16 %v31
    %v168 = vunpack.c.l.b16 %v32
    %v169 = vunpack.c.l.b16 %v33
    %v170 = vunpack.c.l.b16 %v34
    %v171 = vunpack.c.l.b16 %v35
    %v172 = vunpack.c.l.b16 %v36
    %v173 = vunpack.c.l.b16 %v37
    %v174 = vunpack.c.l.b16 %v38
    %v175 = vunpack.c.l.b16 %v39
    %v176 = vunpack.c.l.b16 %v40
    %v177 = vunpack.c.l.b16 %v41
    %v178 = vunpack.c.l.b16 %v42
    %v179 = vunpack.c.l.b16 %v43
    %v180 = vunpack.c.l.b16 %v44
    %v181 = vunpack.c.l.b16 %v45
    %v182 = vunpack.c.l.b16 %v46
    %v183 = vunpack.c.l.b16 %v47
    %v184 = vunpack.c.l.b16 %v48
    %v185 = vunpack.c.l.b16 %v49
    %v186 = vunpack.c.l.b16 %v50
    %v187 = vunpack.c.l.b16 %v51
    %v188 = vunpack.c.l.b16 %v52
    %v189 = vunpack.c.l.b16 %v53
    %v190 = vunpack.c.l.b16 %v54
    %v191 = vunpack.c.l.b16 %v55
    %v192 = vunpack.c.l.b16 %v56
    %v193 = vunpack.c.l.b16 %v57
    %v194 = vunpack.c.l.b16 %v58
    %v195 = vunpack.c.l.b16 %v59
    %v196 = vunpack.c.l.b16 %v60
    %v197 = vunpack.c.l.b16 %v61
    %v198 = vunpack.c.l.b16 %v62
    %v199 = vunpack.c.l.b16 %v63
    %v200 = vunpack.c.l.b16 %v64
    %v201 = vunpack.c.l.b16 %v65
    %v202 = vunpack.c.l.b16 %v66
    %v203 = vunpack.c.l.b16 %v67
    %v204 = vunpack.c.l.b16 %v68
    %v205 = vunpack.c.l.b16 %v69
    %v206 = vunpack.c.l.b16 %v70
    %v207 = vunpack.c.l.b16 %v71
    %v208 = vunpack.c.l.b16 %v72
    %v209 = vunpack.c.l.b16 %v73
    %v210 = vunpack.c.l.b16 %v74
    %v211 = vunpack.c.l.b16 %v75
    %v212 = vunpack.c.l.b16 %v76
    %v213 = vunpack.c.l.b16 %v77
    %v214 = vunpack.c.l.b16 %v78
    %v215 = vunpack.c.l.b16 %v79
    %v216 = vunpack.c.l.b16 %v80
    %v217 = vunpack.c.l.b16 %v81
    %v218 = vunpack.c.l.b16 %v82
    %v219 = vunpack.c.l.b16 %v83
    %v220 = vunpack.c.l.b16 %v84
    %v221 = vunpack.c.l.b16 %v85
    %v222 = vunpack.c.l.b16 %v86
    %v223 = vunpack.c.l.b16 %v87
    %v224 = vunpack.c.l.b16 %v88
    %v225 = vpack.c.b16 %v162, %v161
    %v226 = vpack.c.b16 %v164, %v163
    %v227 = vpack.c.b16 %v166, %v165
    %v228 = vpack.c.b16 %v168, %v167
    %v229 = vpack.c.b16 %v170, %v169
    %v230 = vpack.c.b16 %v172, %v171
    %v231 = vpack.c.b16 %v174, %v173
    %v232 = vpack.c.b16 %v176, %v175
    %v233 = vpack.c.b16 %v178, %v177
    %v234 = vpack.c.b16 %v180, %v179
    %v235 = vpack.c.b16 %v182, %v181
    %v236 = vpack.c.b16 %v184, %v183
    %v237 = vpack.c.b16 %v186, %v185
    %v238 = vpack.c.b16 %v188, %v187
    %v239 = vpack.c.b16 %v190, %v189
    %v240 = vpack.c.b16 %v192, %v191
    %v241 = vpack.c.b16 %v194, %v193
    %v242 = vpack.c.b16 %v196, %v195
    %v243 = vpack.c.b16 %v198, %v197
    %v244 = vpack.c.b16 %v200, %v199
    %v245 = vpack.c.b16 %v202, %v201
    %v246 = vpack.c.b16 %v204, %v203
    %v247 = vpack.c.b16 %v206, %v205
    %v248 = vpack.c.b16 %v208, %v207
    %v249 = vpack.c.b16 %v210, %v209
    %v250 = vpack.c.b16 %v212, %v211
    %v251 = vpack.c.b16 %v214, %v213
    %v252 = vpack.c.b16 %v216, %v215
    %v253 = vpack.c.b16 %v218, %v217
    %v254 = vpack.c.b16 %v220, %v219
    %v255 = vpack.c.b16 %v222, %v221
    %v256 = vpack.c.b16 %v224, %v223
    %vm257 = vcmask 31744
    %v259 = vsel %vm257, %v225, 0
    %v262 = vsel %vm257, %v226, 0
    %v265 = vsel %vm257, %v227, 0
    %v268 = vsel %vm257, %v228, 0
    %v271 = vsel %vm257, %v229, 0
    %v274 = vsel %vm257, %v230, 0
    %v277 = vsel %vm257, %v231, 0
    %v280 = vsel %vm257, %v232, 0
    %v283 = vsel %vm257, %v233, 0
    %v286 = vsel %vm257, %v234, 0
    %v289 = vsel %vm257, %v235, 0
    %v292 = vsel %vm257, %v236, 0
    %v295 = vsel %vm257, %v237, 0
    %v298 = vsel %vm257, %v238, 0
    %v301 = vsel %vm257, %v239, 0
    %v304 = vsel %vm257, %v240, 0
    %v307 = vsel %vm257, %v241, 0
    %v310 = vsel %vm257, %v242, 0
    %v313 = vsel %vm257, %v243, 0
    %v316 = vsel %vm257, %v244, 0
    %v319 = vsel %vm257, %v245, 0
    %v322 = vsel %vm257, %v246, 0
    %v325 = vsel %vm257, %v247, 0
    %v328 = vsel %vm257, %v248, 0
    %v331 = vsel %vm257, %v249, 0
    %v334 = vsel %vm257, %v250, 0
    %v337 = vsel %vm257, %v251, 0
    %v340 = vsel %vm257, %v252, 0
    %v343 = vsel %vm257, %v253, 0
    %v346 = vsel %vm257, %v254, 0
    %v349 = vsel %vm257, %v255, 0
    %v352 = vsel %vm257, %v256, 0
    %vm354 = vcmask 1041408
    %v356 = vsel %vm354, %v89, 0
    %358 = vmatprep.subr.bf16.mxu0 0
    %359 = vmatpush1.bf16.msra.mxu0 %v356
    %360 = vmatprep.subr.bf16.mxu0 0
    %361 = vmatpush1.bf16.msra.mxu0 0
    %362 = vmatprep.subr.bf16.mxu0 0
    %363 = vmatpush1.bf16.msra.mxu0 0
    %364 = vmatprep.subr.bf16.mxu0 0
    %365 = vmatpush1.bf16.msra.mxu0 0
    %366 = vmatprep.subr.bf16.mxu0 0
    %367 = vmatpush1.bf16.msra.mxu0 0
    %368 = vmatprep.subr.bf16.mxu0 0
    %369 = vmatpush1.bf16.msra.mxu0 0
    %370 = vmatprep.subr.bf16.mxu0 0
    %371 = vmatpush1.bf16.msra.mxu0 0
    %372 = vmatprep.subr.bf16.mxu0 0
    %373 = vmatpush1.bf16.msra.mxu0 0
    %374 = vmatprep.subr.bf16.mxu0 0
    %375 = vmatpush1.bf16.msra.mxu0 0
    %376 = vmatprep.subr.bf16.mxu0 0
    %377 = vmatpush1.bf16.msra.mxu0 0
    %378 = vmatprep.subr.bf16.mxu0 0
    %379 = vmatpush1.bf16.msra.mxu0 0
    %380 = vmatprep.subr.bf16.mxu0 0
    %381 = vmatpush1.bf16.msra.mxu0 0
    %382 = vmatprep.subr.bf16.mxu0 0
    %383 = vmatpush1.bf16.msra.mxu0 0
    %384 = vmatprep.subr.bf16.mxu0 0
    %385 = vmatpush1.bf16.msra.mxu0 0
    %386 = vmatprep.subr.bf16.mxu0 0
    %387 = vmatpush1.bf16.msra.mxu0 0
    %388 = vmatprep.subr.bf16.mxu0 0
    %389 = vmatpush1.bf16.msra.mxu0 0
    %390 = vmatprep.mubr.bf16.mxu0 0
    %391 = vmatmul.mubr.bf16.gmra.mrb[0].mxu0 %v259
    %v392 = vpop.f32.mrb[0].mxu0
    %v393 = vadd.f32 %v95, %v392
    %v394 = vpop.f32.mrb[0].mxu0
    %v395 = vpop.f32.mrb[0].mxu0
    %v396 = vadd.f32 %v95, %v395
    %v397 = vpop.f32.mrb[0].mxu0
    %398 = vmatprep.mubr.bf16.mxu0 0
    %399 = vmatmul.mubr.bf16.gmra.mrb[0].mxu0 %v262
    %v400 = vpop.f32.mrb[0].mxu0
    %v401 = vadd.f32 %v95, %v400
    %v402 = vpop.f32.mrb[0].mxu0
    %v403 = vpop.f32.mrb[0].mxu0
    %v404 = vadd.f32 %v95, %v403
    %v405 = vpop.f32.mrb[0].mxu0
    %406 = vmatprep.mubr.bf16.mxu0 0
    %407 = vmatmul.mubr.bf16.gmra.mrb[0].mxu0 %v265
    %v408 = vpop.f32.mrb[0].mxu0
    %v409 = vadd.f32 %v95, %v408
    %v410 = vpop.f32.mrb[0].mxu0
    %v411 = vpop.f32.mrb[0].mxu0
    %v412 = vadd.f32 %v95, %v411
    %v413 = vpop.f32.mrb[0].mxu0
    %414 = vmatprep.mubr.bf16.mxu0 0
    %415 = vmatmul.mubr.bf16.gmra.mrb[0].mxu0 %v268
    %v416 = vpop.f32.mrb[0].mxu0
    %v417 = vadd.f32 %v95, %v416
    %v418 = vpop.f32.mrb[0].mxu0
    %v419 = vpop.f32.mrb[0].mxu0
    %v420 = vadd.f32 %v95, %v419
    %v421 = vpop.f32.mrb[0].mxu0
    %422 = vmatprep.mubr.bf16.mxu0 0
    %423 = vmatmul.mubr.bf16.gmra.mrb[0].mxu0 %v271
    %v424 = vpop.f32.mrb[0].mxu0
    %v425 = vadd.f32 %v95, %v424
    %v426 = vpop.f32.mrb[0].mxu0
    %v427 = vpop.f32.mrb[0].mxu0
    %v428 = vadd.f32 %v95, %v427
    %v429 = vpop.f32.mrb[0].mxu0
    %430 = vmatprep.mubr.bf16.mxu0 0
    %431 = vmatmul.mubr.bf16.gmra.mrb[0].mxu0 %v274
    %v432 = vpop.f32.mrb[0].mxu0
    %v433 = vadd.f32 %v95, %v432
    %v434 = vpop.f32.mrb[0].mxu0
    %v435 = vpop.f32.mrb[0].mxu0
    %v436 = vadd.f32 %v95, %v435
    %v437 = vpop.f32.mrb[0].mxu0
    %438 = vmatprep.mubr.bf16.mxu0 0
    %439 = vmatmul.mubr.bf16.gmra.mrb[0].mxu0 %v277
    %v440 = vpop.f32.mrb[0].mxu0
    %v441 = vadd.f32 %v95, %v440
    %v442 = vpop.f32.mrb[0].mxu0
    %v443 = vpop.f32.mrb[0].mxu0
    %v444 = vadd.f32 %v95, %v443
    %v445 = vpop.f32.mrb[0].mxu0
    %446 = vmatprep.mubr.bf16.mxu0 0
    %447 = vmatmul.mubr.bf16.gmra.mrb[0].mxu0 %v280
    %v448 = vpop.f32.mrb[0].mxu0
    %v449 = vadd.f32 %v95, %v448
    %v450 = vpop.f32.mrb[0].mxu0
    %v451 = vpop.f32.mrb[0].mxu0
    %v452 = vadd.f32 %v95, %v451
    %v453 = vpop.f32.mrb[0].mxu0
    %454 = vmatprep.mubr.bf16.mxu0 0
    %455 = vmatmul.mubr.bf16.gmra.mrb[0].mxu0 %v283
    %v456 = vpop.f32.mrb[0].mxu0
    %v457 = vadd.f32 %v95, %v456
    %v458 = vpop.f32.mrb[0].mxu0
    %v459 = vpop.f32.mrb[0].mxu0
    %v460 = vadd.f32 %v95, %v459
    %v461 = vpop.f32.mrb[0].mxu0
    %462 = vmatprep.mubr.bf16.mxu0 0
    %463 = vmatmul.mubr.bf16.gmra.mrb[0].mxu0 %v286
    %v464 = vpop.f32.mrb[0].mxu0
    %v465 = vadd.f32 %v95, %v464
    %v466 = vpop.f32.mrb[0].mxu0
    %v467 = vpop.f32.mrb[0].mxu0
    %v468 = vadd.f32 %v95, %v467
    %v469 = vpop.f32.mrb[0].mxu0
    %470 = vmatprep.mubr.bf16.mxu0 0
    %471 = vmatmul.mubr.bf16.gmra.mrb[0].mxu0 %v289
    %v472 = vpop.f32.mrb[0].mxu0
    %v473 = vadd.f32 %v95, %v472
    %v474 = vpop.f32.mrb[0].mxu0
    %v475 = vpop.f32.mrb[0].mxu0
    %v476 = vadd.f32 %v95, %v475
    %v477 = vpop.f32.mrb[0].mxu0
    %478 = vmatprep.mubr.bf16.mxu0 0
    %479 = vmatmul.mubr.bf16.gmra.mrb[0].mxu0 %v292
    %v480 = vpop.f32.mrb[0].mxu0
    %v481 = vadd.f32 %v95, %v480
    %v482 = vpop.f32.mrb[0].mxu0
    %v483 = vpop.f32.mrb[0].mxu0
    %v484 = vadd.f32 %v95, %v483
    %v485 = vpop.f32.mrb[0].mxu0
    %486 = vmatprep.mubr.bf16.mxu0 0
    %487 = vmatmul.mubr.bf16.gmra.mrb[0].mxu0 %v295
    %v488 = vpop.f32.mrb[0].mxu0
    %v489 = vadd.f32 %v95, %v488
    %v490 = vpop.f32.mrb[0].mxu0
    %v491 = vpop.f32.mrb[0].mxu0
    %v492 = vadd.f32 %v95, %v491
    %v493 = vpop.f32.mrb[0].mxu0
    %494 = vmatprep.mubr.bf16.mxu0 0
    %495 = vmatmul.mubr.bf16.gmra.mrb[0].mxu0 %v298
    %v496 = vpop.f32.mrb[0].mxu0
    %v497 = vadd.f32 %v95, %v496
    %v498 = vpop.f32.mrb[0].mxu0
    %v499 = vpop.f32.mrb[0].mxu0
    %v500 = vadd.f32 %v95, %v499
    %v501 = vpop.f32.mrb[0].mxu0
    %502 = vmatprep.mubr.bf16.mxu0 0
    %503 = vmatmul.mubr.bf16.gmra.mrb[0].mxu0 %v301
    %v504 = vpop.f32.mrb[0].mxu0
    %v505 = vadd.f32 %v95, %v504
    %v506 = vpop.f32.mrb[0].mxu0
    %v507 = vpop.f32.mrb[0].mxu0
    %v508 = vadd.f32 %v95, %v507
    %v509 = vpop.f32.mrb[0].mxu0
    %510 = vmatprep.mubr.bf16.mxu0 0
    %511 = vmatmul.mubr.bf16.gmra.mrb[0].mxu0 %v304
    %v512 = vpop.f32.mrb[0].mxu0
    %v513 = vadd.f32 %v95, %v512
    %v514 = vpop.f32.mrb[0].mxu0
    %v515 = vpop.f32.mrb[0].mxu0
    %v516 = vadd.f32 %v95, %v515
    %v517 = vpop.f32.mrb[0].mxu0
    %518 = vmatprep.mubr.bf16.mxu0 0
    %519 = vmatmul.mubr.bf16.gmra.mrb[0].mxu0 %v307
    %v520 = vpop.f32.mrb[0].mxu0
    %v521 = vadd.f32 %v95, %v520
    %v522 = vpop.f32.mrb[0].mxu0
    %v523 = vpop.f32.mrb[0].mxu0
    %v524 = vadd.f32 %v95, %v523
    %v525 = vpop.f32.mrb[0].mxu0
    %526 = vmatprep.mubr.bf16.mxu0 0
    %527 = vmatmul.mubr.bf16.gmra.mrb[0].mxu0 %v310
    %v528 = vpop.f32.mrb[0].mxu0
    %v529 = vadd.f32 %v95, %v528
    %v530 = vpop.f32.mrb[0].mxu0
    %v531 = vpop.f32.mrb[0].mxu0
    %v532 = vadd.f32 %v95, %v531
    %v533 = vpop.f32.mrb[0].mxu0
    %534 = vmatprep.mubr.bf16.mxu0 0
    %535 = vmatmul.mubr.bf16.gmra.mrb[0].mxu0 %v313
    %v536 = vpop.f32.mrb[0].mxu0
    %v537 = vadd.f32 %v95, %v536
    %v538 = vpop.f32.mrb[0].mxu0
    %v539 = vpop.f32.mrb[0].mxu0
    %v540 = vadd.f32 %v95, %v539
    %v541 = vpop.f32.mrb[0].mxu0
    %542 = vmatprep.mubr.bf16.mxu0 0
    %543 = vmatmul.mubr.bf16.gmra.mrb[0].mxu0 %v316
    %v544 = vpop.f32.mrb[0].mxu0
    %v545 = vadd.f32 %v95, %v544
    %v546 = vpop.f32.mrb[0].mxu0
    %v547 = vpop.f32.mrb[0].mxu0
    %v548 = vadd.f32 %v95, %v547
    %v549 = vpop.f32.mrb[0].mxu0
    %550 = vmatprep.mubr.bf16.mxu0 0
    %551 = vmatmul.mubr.bf16.gmra.mrb[0].mxu0 %v319
    %v552 = vpop.f32.mrb[0].mxu0
    %v553 = vadd.f32 %v95, %v552
    %v554 = vpop.f32.mrb[0].mxu0
    %v555 = vpop.f32.mrb[0].mxu0
    %v556 = vadd.f32 %v95, %v555
    %v557 = vpop.f32.mrb[0].mxu0
    %558 = vmatprep.mubr.bf16.mxu0 0
    %559 = vmatmul.mubr.bf16.gmra.mrb[0].mxu0 %v322
    %v560 = vpop.f32.mrb[0].mxu0
    %v561 = vadd.f32 %v95, %v560
    %v562 = vpop.f32.mrb[0].mxu0
    %v563 = vpop.f32.mrb[0].mxu0
    %v564 = vadd.f32 %v95, %v563
    %v565 = vpop.f32.mrb[0].mxu0
    %566 = vmatprep.mubr.bf16.mxu0 0
    %567 = vmatmul.mubr.bf16.gmra.mrb[0].mxu0 %v325
    %v568 = vpop.f32.mrb[0].mxu0
    %v569 = vadd.f32 %v95, %v568
    %v570 = vpop.f32.mrb[0].mxu0
    %v571 = vpop.f32.mrb[0].mxu0
    %v572 = vadd.f32 %v95, %v571
    %v573 = vpop.f32.mrb[0].mxu0
    %574 = vmatprep.mubr.bf16.mxu0 0
    %575 = vmatmul.mubr.bf16.gmra.mrb[0].mxu0 %v328
    %v576 = vpop.f32.mrb[0].mxu0
    %v577 = vadd.f32 %v95, %v576
    %v578 = vpop.f32.mrb[0].mxu0
    %v579 = vpop.f32.mrb[0].mxu0
    %v580 = vadd.f32 %v95, %v579
    %v581 = vpop.f32.mrb[0].mxu0
    %582 = vmatprep.mubr.bf16.mxu0 0
    %583 = vmatmul.mubr.bf16.gmra.mrb[0].mxu0 %v331
    %v584 = vpop.f32.mrb[0].mxu0
    %v585 = vadd.f32 %v95, %v584
    %v586 = vpop.f32.mrb[0].mxu0
    %v587 = vpop.f32.mrb[0].mxu0
    %v588 = vadd.f32 %v95, %v587
    %v589 = vpop.f32.mrb[0].mxu0
    %590 = vmatprep.mubr.bf16.mxu0 0
    %591 = vmatmul.mubr.bf16.gmra.mrb[0].mxu0 %v334
    %v592 = vpop.f32.mrb[0].mxu0
    %v593 = vadd.f32 %v95, %v592
    %v594 = vpop.f32.mrb[0].mxu0
    %v595 = vpop.f32.mrb[0].mxu0
    %v596 = vadd.f32 %v95, %v595
    %v597 = vpop.f32.mrb[0].mxu0
    %598 = vmatprep.mubr.bf16.mxu0 0
    %599 = vmatmul.mubr.bf16.gmra.mrb[0].mxu0 %v337
    %v600 = vpop.f32.mrb[0].mxu0
    %v601 = vadd.f32 %v95, %v600
    %v602 = vpop.f32.mrb[0].mxu0
    %v603 = vpop.f32.mrb[0].mxu0
    %v604 = vadd.f32 %v95, %v603
    %v605 = vpop.f32.mrb[0].mxu0
    %606 = vmatprep.mubr.bf16.mxu0 0
    %607 = vmatmul.mubr.bf16.gmra.mrb[0].mxu0 %v340
    %v608 = vpop.f32.mrb[0].mxu0
    %v609 = vadd.f32 %v95, %v608
    %v610 = vpop.f32.mrb[0].mxu0
    %v611 = vpop.f32.mrb[0].mxu0
    %v612 = vadd.f32 %v95, %v611
    %v613 = vpop.f32.mrb[0].mxu0
    %614 = vmatprep.mubr.bf16.mxu0 0
    %615 = vmatmul.mubr.bf16.gmra.mrb[0].mxu0 %v343
    %v616 = vpop.f32.mrb[0].mxu0
    %v617 = vadd.f32 %v95, %v616
    %v618 = vpop.f32.mrb[0].mxu0
    %v619 = vpop.f32.mrb[0].mxu0
    %v620 = vadd.f32 %v95, %v619
    %v621 = vpop.f32.mrb[0].mxu0
    %622 = vmatprep.mubr.bf16.mxu0 0
    %623 = vmatmul.mubr.bf16.gmra.mrb[0].mxu0 %v346
    %v624 = vpop.f32.mrb[0].mxu0
    %v625 = vadd.f32 %v95, %v624
    %v626 = vpop.f32.mrb[0].mxu0
    %v627 = vpop.f32.mrb[0].mxu0
    %v628 = vadd.f32 %v95, %v627
    %v629 = vpop.f32.mrb[0].mxu0
    %630 = vmatprep.mubr.bf16.mxu0 0
    %631 = vmatmul.mubr.bf16.gmra.mrb[0].mxu0 %v349
    %v632 = vpop.f32.mrb[0].mxu0
    %v633 = vadd.f32 %v95, %v632
    %v634 = vpop.f32.mrb[0].mxu0
    %v635 = vpop.f32.mrb[0].mxu0
    %v636 = vadd.f32 %v95, %v635
    %v637 = vpop.f32.mrb[0].mxu0
    %638 = vmatprep.mubr.bf16.mxu0 0
    %639 = vmatmul.mubr.bf16.gmra.mrb[0].mxu0 %v352
    %v640 = vpop.f32.mrb[0].mxu0
    %v641 = vadd.f32 %v95, %v640
    %v642 = vpop.f32.mrb[0].mxu0
    %v643 = vpop.f32.mrb[0].mxu0
    %v644 = vadd.f32 %v95, %v643
    %v645 = vpop.f32.mrb[0].mxu0
    %646 = vdwg.mxu0
    %v647 = vld [vmem:[%s3] sm:$0x3]
    %v648 = vld [vmem:[%s4] sm:$0x1]
    %v650 = vlaneseq
    %v651 = vshrl.u32 %v650, 7
    %v652 = vsub.s32 0, %v651
    %v653 = vrot.slane %v648, %v652
    %v656 = vsel %vm354, %v647, 0
    %658 = vmatprep.subr.bf16.mxu0 0
    %659 = vmatpush1.bf16.msra.mxu0 %v656
    %660 = vmatprep.subr.bf16.mxu0 0
    %661 = vmatpush1.bf16.msra.mxu0 0
    %662 = vmatprep.subr.bf16.mxu0 0
    %663 = vmatpush1.bf16.msra.mxu0 0
    %664 = vmatprep.subr.bf16.mxu0 0
    %665 = vmatpush1.bf16.msra.mxu0 0
    %666 = vmatprep.subr.bf16.mxu0 0
    %667 = vmatpush1.bf16.msra.mxu0 0
    %668 = vmatprep.subr.bf16.mxu0 0
    %669 = vmatpush1.bf16.msra.mxu0 0
    %670 = vmatprep.subr.bf16.mxu0 0
    %671 = vmatpush1.bf16.msra.mxu0 0
    %672 = vmatprep.subr.bf16.mxu0 0
    %673 = vmatpush1.bf16.msra.mxu0 0
    %674 = vmatprep.subr.bf16.mxu0 0
    %675 = vmatpush1.bf16.msra.mxu0 0
    %676 = vmatprep.subr.bf16.mxu0 0
    %677 = vmatpush1.bf16.msra.mxu0 0
    %678 = vmatprep.subr.bf16.mxu0 0
    %679 = vmatpush1.bf16.msra.mxu0 0
    %680 = vmatprep.subr.bf16.mxu0 0
    %681 = vmatpush1.bf16.msra.mxu0 0
    %682 = vmatprep.subr.bf16.mxu0 0
    %683 = vmatpush1.bf16.msra.mxu0 0
    %684 = vmatprep.subr.bf16.mxu0 0
    %685 = vmatpush1.bf16.msra.mxu0 0
    %686 = vmatprep.subr.bf16.mxu0 0
    %687 = vmatpush1.bf16.msra.mxu0 0
    %688 = vmatprep.subr.bf16.mxu0 0
    %689 = vmatpush1.bf16.msra.mxu0 0
    %690 = vmatprep.mubr.bf16.mxu0 0
    %691 = vmatmul.mubr.bf16.gmra.mrb[0].mxu0 %v259
    %v692 = vpop.f32.mrb[0].mxu0
    %v693 = vadd.f32 %v653, %v692
    %v694 = vpop.f32.mrb[0].mxu0
    %v695 = vpop.f32.mrb[0].mxu0
    %v696 = vadd.f32 %v653, %v695
    %v697 = vpop.f32.mrb[0].mxu0
    %698 = vmatprep.mubr.bf16.mxu0 0
    %699 = vmatmul.mubr.bf16.gmra.mrb[0].mxu0 %v262
    %v700 = vpop.f32.mrb[0].mxu0
    %v701 = vadd.f32 %v653, %v700
    %v702 = vpop.f32.mrb[0].mxu0
    %v703 = vpop.f32.mrb[0].mxu0
    %v704 = vadd.f32 %v653, %v703
    %v705 = vpop.f32.mrb[0].mxu0
    %706 = vmatprep.mubr.bf16.mxu0 0
    %707 = vmatmul.mubr.bf16.gmra.mrb[0].mxu0 %v265
    %v708 = vpop.f32.mrb[0].mxu0
    %v709 = vadd.f32 %v653, %v708
    %v710 = vpop.f32.mrb[0].mxu0
    %v711 = vpop.f32.mrb[0].mxu0
    %v712 = vadd.f32 %v653, %v711
    %v713 = vpop.f32.mrb[0].mxu0
    %714 = vmatprep.mubr.bf16.mxu0 0
    %715 = vmatmul.mubr.bf16.gmra.mrb[0].mxu0 %v268
    %v716 = vpop.f32.mrb[0].mxu0
    %v717 = vadd.f32 %v653, %v716
    %v718 = vpop.f32.mrb[0].mxu0
    %v719 = vpop.f32.mrb[0].mxu0
    %v720 = vadd.f32 %v653, %v719
    %v721 = vpop.f32.mrb[0].mxu0
    %722 = vmatprep.mubr.bf16.mxu0 0
    %723 = vmatmul.mubr.bf16.gmra.mrb[0].mxu0 %v271
    %v724 = vpop.f32.mrb[0].mxu0
    %v725 = vadd.f32 %v653, %v724
    %v726 = vpop.f32.mrb[0].mxu0
    %v727 = vpop.f32.mrb[0].mxu0
    %v728 = vadd.f32 %v653, %v727
    %v729 = vpop.f32.mrb[0].mxu0
    %730 = vmatprep.mubr.bf16.mxu0 0
    %731 = vmatmul.mubr.bf16.gmra.mrb[0].mxu0 %v274
    %v732 = vpop.f32.mrb[0].mxu0
    %v733 = vadd.f32 %v653, %v732
    %v734 = vpop.f32.mrb[0].mxu0
    %v735 = vpop.f32.mrb[0].mxu0
    %v736 = vadd.f32 %v653, %v735
    %v737 = vpop.f32.mrb[0].mxu0
    %738 = vmatprep.mubr.bf16.mxu0 0
    %739 = vmatmul.mubr.bf16.gmra.mrb[0].mxu0 %v277
    %v740 = vpop.f32.mrb[0].mxu0
    %v741 = vadd.f32 %v653, %v740
    %v742 = vpop.f32.mrb[0].mxu0
    %v743 = vpop.f32.mrb[0].mxu0
    %v744 = vadd.f32 %v653, %v743
    %v745 = vpop.f32.mrb[0].mxu0
    %746 = vmatprep.mubr.bf16.mxu0 0
    %747 = vmatmul.mubr.bf16.gmra.mrb[0].mxu0 %v280
    %v748 = vpop.f32.mrb[0].mxu0
    %v749 = vadd.f32 %v653, %v748
    %v750 = vpop.f32.mrb[0].mxu0
    %v751 = vpop.f32.mrb[0].mxu0
    %v752 = vadd.f32 %v653, %v751
    %v753 = vpop.f32.mrb[0].mxu0
    %754 = vmatprep.mubr.bf16.mxu0 0
    %755 = vmatmul.mubr.bf16.gmra.mrb[0].mxu0 %v283
    %v756 = vpop.f32.mrb[0].mxu0
    %v757 = vadd.f32 %v653, %v756
    %v758 = vpop.f32.mrb[0].mxu0
    %v759 = vpop.f32.mrb[0].mxu0
    %v760 = vadd.f32 %v653, %v759
    %v761 = vpop.f32.mrb[0].mxu0
    %762 = vmatprep.mubr.bf16.mxu0 0
    %763 = vmatmul.mubr.bf16.gmra.mrb[0].mxu0 %v286
    %v764 = vpop.f32.mrb[0].mxu0
    %v765 = vadd.f32 %v653, %v764
    %v766 = vpop.f32.mrb[0].mxu0
    %v767 = vpop.f32.mrb[0].mxu0
    %v768 = vadd.f32 %v653, %v767
    %v769 = vpop.f32.mrb[0].mxu0
    %770 = vmatprep.mubr.bf16.mxu0 0
    %771 = vmatmul.mubr.bf16.gmra.mrb[0].mxu0 %v289
    %v772 = vpop.f32.mrb[0].mxu0
    %v773 = vadd.f32 %v653, %v772
    %v774 = vpop.f32.mrb[0].mxu0
    %v775 = vpop.f32.mrb[0].mxu0
    %v776 = vadd.f32 %v653, %v775
    %v777 = vpop.f32.mrb[0].mxu0
    %778 = vmatprep.mubr.bf16.mxu0 0
    %779 = vmatmul.mubr.bf16.gmra.mrb[0].mxu0 %v292
    %v780 = vpop.f32.mrb[0].mxu0
    %v781 = vadd.f32 %v653, %v780
    %v782 = vpop.f32.mrb[0].mxu0
    %v783 = vpop.f32.mrb[0].mxu0
    %v784 = vadd.f32 %v653, %v783
    %v785 = vpop.f32.mrb[0].mxu0
    %786 = vmatprep.mubr.bf16.mxu0 0
    %787 = vmatmul.mubr.bf16.gmra.mrb[0].mxu0 %v295
    %v788 = vpop.f32.mrb[0].mxu0
    %v789 = vadd.f32 %v653, %v788
    %v790 = vpop.f32.mrb[0].mxu0
    %v791 = vpop.f32.mrb[0].mxu0
    %v792 = vadd.f32 %v653, %v791
    %v793 = vpop.f32.mrb[0].mxu0
    %794 = vmatprep.mubr.bf16.mxu0 0
    %795 = vmatmul.mubr.bf16.gmra.mrb[0].mxu0 %v298
    %v796 = vpop.f32.mrb[0].mxu0
    %v797 = vadd.f32 %v653, %v796
    %v798 = vpop.f32.mrb[0].mxu0
    %v799 = vpop.f32.mrb[0].mxu0
    %v800 = vadd.f32 %v653, %v799
    %v801 = vpop.f32.mrb[0].mxu0
    %802 = vmatprep.mubr.bf16.mxu0 0
    %803 = vmatmul.mubr.bf16.gmra.mrb[0].mxu0 %v301
    %v804 = vpop.f32.mrb[0].mxu0
    %v805 = vadd.f32 %v653, %v804
    %v806 = vpop.f32.mrb[0].mxu0
    %v807 = vpop.f32.mrb[0].mxu0
    %v808 = vadd.f32 %v653, %v807
    %v809 = vpop.f32.mrb[0].mxu0
    %810 = vmatprep.mubr.bf16.mxu0 0
    %811 = vmatmul.mubr.bf16.gmra.mrb[0].mxu0 %v304
    %v812 = vpop.f32.mrb[0].mxu0
    %v813 = vadd.f32 %v653, %v812
    %v814 = vpop.f32.mrb[0].mxu0
    %v815 = vpop.f32.mrb[0].mxu0
    %v816 = vadd.f32 %v653, %v815
    %v817 = vpop.f32.mrb[0].mxu0
    %818 = vmatprep.mubr.bf16.mxu0 0
    %819 = vmatmul.mubr.bf16.gmra.mrb[0].mxu0 %v307
    %v820 = vpop.f32.mrb[0].mxu0
    %v821 = vadd.f32 %v653, %v820
    %v822 = vpop.f32.mrb[0].mxu0
    %v823 = vpop.f32.mrb[0].mxu0
    %v824 = vadd.f32 %v653, %v823
    %v825 = vpop.f32.mrb[0].mxu0
    %826 = vmatprep.mubr.bf16.mxu0 0
    %827 = vmatmul.mubr.bf16.gmra.mrb[0].mxu0 %v310
    %v828 = vpop.f32.mrb[0].mxu0
    %v829 = vadd.f32 %v653, %v828
    %v830 = vpop.f32.mrb[0].mxu0
    %v831 = vpop.f32.mrb[0].mxu0
    %v832 = vadd.f32 %v653, %v831
    %v833 = vpop.f32.mrb[0].mxu0
    %834 = vmatprep.mubr.bf16.mxu0 0
    %835 = vmatmul.mubr.bf16.gmra.mrb[0].mxu0 %v313
    %v836 = vpop.f32.mrb[0].mxu0
    %v837 = vadd.f32 %v653, %v836
    %v838 = vpop.f32.mrb[0].mxu0
    %v839 = vpop.f32.mrb[0].mxu0
    %v840 = vadd.f32 %v653, %v839
    %v841 = vpop.f32.mrb[0].mxu0
    %842 = vmatprep.mubr.bf16.mxu0 0
    %843 = vmatmul.mubr.bf16.gmra.mrb[0].mxu0 %v316
    %v844 = vpop.f32.mrb[0].mxu0
    %v845 = vadd.f32 %v653, %v844
    %v846 = vpop.f32.mrb[0].mxu0
    %v847 = vpop.f32.mrb[0].mxu0
    %v848 = vadd.f32 %v653, %v847
    %v849 = vpop.f32.mrb[0].mxu0
    %850 = vmatprep.mubr.bf16.mxu0 0
    %851 = vmatmul.mubr.bf16.gmra.mrb[0].mxu0 %v319
    %v852 = vpop.f32.mrb[0].mxu0
    %v853 = vadd.f32 %v653, %v852
    %v854 = vpop.f32.mrb[0].mxu0
    %v855 = vpop.f32.mrb[0].mxu0
    %v856 = vadd.f32 %v653, %v855
    %v857 = vpop.f32.mrb[0].mxu0
    %858 = vmatprep.mubr.bf16.mxu0 0
    %859 = vmatmul.mubr.bf16.gmra.mrb[0].mxu0 %v322
    %v860 = vpop.f32.mrb[0].mxu0
    %v861 = vadd.f32 %v653, %v860
    %v862 = vpop.f32.mrb[0].mxu0
    %v863 = vpop.f32.mrb[0].mxu0
    %v864 = vadd.f32 %v653, %v863
    %v865 = vpop.f32.mrb[0].mxu0
    %866 = vmatprep.mubr.bf16.mxu0 0
    %867 = vmatmul.mubr.bf16.gmra.mrb[0].mxu0 %v325
    %v868 = vpop.f32.mrb[0].mxu0
    %v869 = vadd.f32 %v653, %v868
    %v870 = vpop.f32.mrb[0].mxu0
    %v871 = vpop.f32.mrb[0].mxu0
    %v872 = vadd.f32 %v653, %v871
    %v873 = vpop.f32.mrb[0].mxu0
    %874 = vmatprep.mubr.bf16.mxu0 0
    %875 = vmatmul.mubr.bf16.gmra.mrb[0].mxu0 %v328
    %v876 = vpop.f32.mrb[0].mxu0
    %v877 = vadd.f32 %v653, %v876
    %v878 = vpop.f32.mrb[0].mxu0
    %v879 = vpop.f32.mrb[0].mxu0
    %v880 = vadd.f32 %v653, %v879
    %v881 = vpop.f32.mrb[0].mxu0
    %882 = vmatprep.mubr.bf16.mxu0 0
    %883 = vmatmul.mubr.bf16.gmra.mrb[0].mxu0 %v331
    %v884 = vpop.f32.mrb[0].mxu0
    %v885 = vadd.f32 %v653, %v884
    %v886 = vpop.f32.mrb[0].mxu0
    %v887 = vpop.f32.mrb[0].mxu0
    %v888 = vadd.f32 %v653, %v887
    %v889 = vpop.f32.mrb[0].mxu0
    %890 = vmatprep.mubr.bf16.mxu0 0
    %891 = vmatmul.mubr.bf16.gmra.mrb[0].mxu0 %v334
    %v892 = vpop.f32.mrb[0].mxu0
    %v893 = vadd.f32 %v653, %v892
    %v894 = vpop.f32.mrb[0].mxu0
    %v895 = vpop.f32.mrb[0].mxu0
    %v896 = vadd.f32 %v653, %v895
    %v897 = vpop.f32.mrb[0].mxu0
    %898 = vmatprep.mubr.bf16.mxu0 0
    %899 = vmatmul.mubr.bf16.gmra.mrb[0].mxu0 %v337
    %v900 = vpop.f32.mrb[0].mxu0
    %v901 = vadd.f32 %v653, %v900
    %v902 = vpop.f32.mrb[0].mxu0
    %v903 = vpop.f32.mrb[0].mxu0
    %v904 = vadd.f32 %v653, %v903
    %v905 = vpop.f32.mrb[0].mxu0
    %906 = vmatprep.mubr.bf16.mxu0 0
    %907 = vmatmul.mubr.bf16.gmra.mrb[0].mxu0 %v340
    %v908 = vpop.f32.mrb[0].mxu0
    %v909 = vadd.f32 %v653, %v908
    %v910 = vpop.f32.mrb[0].mxu0
    %v911 = vpop.f32.mrb[0].mxu0
    %v912 = vadd.f32 %v653, %v911
    %v913 = vpop.f32.mrb[0].mxu0
    %914 = vmatprep.mubr.bf16.mxu0 0
    %915 = vmatmul.mubr.bf16.gmra.mrb[0].mxu0 %v343
    %v916 = vpop.f32.mrb[0].mxu0
    %v917 = vadd.f32 %v653, %v916
    %v918 = vpop.f32.mrb[0].mxu0
    %v919 = vpop.f32.mrb[0].mxu0
    %v920 = vadd.f32 %v653, %v919
    %v921 = vpop.f32.mrb[0].mxu0
    %922 = vmatprep.mubr.bf16.mxu0 0
    %923 = vmatmul.mubr.bf16.gmra.mrb[0].mxu0 %v346
    %v924 = vpop.f32.mrb[0].mxu0
    %v925 = vadd.f32 %v653, %v924
    %v926 = vpop.f32.mrb[0].mxu0
    %v927 = vpop.f32.mrb[0].mxu0
    %v928 = vadd.f32 %v653, %v927
    %v929 = vpop.f32.mrb[0].mxu0
    %930 = vmatprep.mubr.bf16.mxu0 0
    %931 = vmatmul.mubr.bf16.gmra.mrb[0].mxu0 %v349
    %v932 = vpop.f32.mrb[0].mxu0
    %v933 = vadd.f32 %v653, %v932
    %v934 = vpop.f32.mrb[0].mxu0
    %v935 = vpop.f32.mrb[0].mxu0
    %v936 = vadd.f32 %v653, %v935
    %v937 = vpop.f32.mrb[0].mxu0
    %938 = vmatprep.mubr.bf16.mxu0 0
    %939 = vmatmul.mubr.bf16.gmra.mrb[0].mxu0 %v352
    %v940 = vpop.f32.mrb[0].mxu0
    %v941 = vadd.f32 %v653, %v940
    %v942 = vpop.f32.mrb[0].mxu0
    %v943 = vpop.f32.mrb[0].mxu0
    %v944 = vadd.f32 %v653, %v943
    %v945 = vpop.f32.mrb[0].mxu0
    %946 = vdwg.mxu0
    %v947 = vmin.f32 %v393, 20.0
    %v948 = vmin.f32 %v396, 20.0
    %v949 = vmin.f32 %v401, 20.0
    %v950 = vmin.f32 %v404, 20.0
    %v951 = vmin.f32 %v409, 20.0
    %v952 = vmin.f32 %v412, 20.0
    %v953 = vmin.f32 %v417, 20.0
    %v954 = vmin.f32 %v420, 20.0
    %v955 = vmin.f32 %v425, 20.0
    %v956 = vmin.f32 %v428, 20.0
    %v957 = vmin.f32 %v433, 20.0
    %v958 = vmin.f32 %v436, 20.0
    %v959 = vmin.f32 %v441, 20.0
    %v960 = vmin.f32 %v444, 20.0
    %v961 = vmin.f32 %v449, 20.0
    %v962 = vmin.f32 %v452, 20.0
    %v963 = vmin.f32 %v457, 20.0
    %v964 = vmin.f32 %v460, 20.0
    %v965 = vmin.f32 %v465, 20.0
    %v966 = vmin.f32 %v468, 20.0
    %v967 = vmin.f32 %v473, 20.0
    %v968 = vmin.f32 %v476, 20.0
    %v969 = vmin.f32 %v481, 20.0
    %v970 = vmin.f32 %v484, 20.0
    %v971 = vmin.f32 %v489, 20.0
    %v972 = vmin.f32 %v492, 20.0
    %v973 = vmin.f32 %v497, 20.0
    %v974 = vmin.f32 %v500, 20.0
    %v975 = vmin.f32 %v505, 20.0
    %v976 = vmin.f32 %v508, 20.0
    %v977 = vmin.f32 %v513, 20.0
    %v978 = vmin.f32 %v516, 20.0
    %v979 = vmin.f32 %v521, 20.0
    %v980 = vmin.f32 %v524, 20.0
    %v981 = vmin.f32 %v529, 20.0
    %v982 = vmin.f32 %v532, 20.0
    %v983 = vmin.f32 %v537, 20.0
    %v984 = vmin.f32 %v540, 20.0
    %v985 = vmin.f32 %v545, 20.0
    %v986 = vmin.f32 %v548, 20.0
    %v987 = vmin.f32 %v553, 20.0
    %v988 = vmin.f32 %v556, 20.0
    %v989 = vmin.f32 %v561, 20.0
    %v990 = vmin.f32 %v564, 20.0
    %v991 = vmin.f32 %v569, 20.0
    %v992 = vmin.f32 %v572, 20.0
    %v993 = vmin.f32 %v577, 20.0
    %v994 = vmin.f32 %v580, 20.0
    %v995 = vmin.f32 %v585, 20.0
    %v996 = vmin.f32 %v588, 20.0
    %v997 = vmin.f32 %v593, 20.0
    %v998 = vmin.f32 %v596, 20.0
    %v999 = vmin.f32 %v601, 20.0
    %v1000 = vmin.f32 %v604, 20.0
    %v1001 = vmin.f32 %v609, 20.0
    %v1002 = vmin.f32 %v612, 20.0
    %v1003 = vmin.f32 %v617, 20.0
    %v1004 = vmin.f32 %v620, 20.0
    %v1005 = vmin.f32 %v625, 20.0
    %v1006 = vmin.f32 %v628, 20.0
    %v1007 = vmin.f32 %v633, 20.0
    %v1008 = vmin.f32 %v636, 20.0
    %v1009 = vmin.f32 %v641, 20.0
    %v1010 = vmin.f32 %v644, 20.0
    %v1011 = vmul.f32 %v947, 1.442695
    %v1012 = vpow.pop %v1011
    %v1013 = vmul.f32 %v948, 1.442695
    %v1014 = vpow.pop %v1013
    %v1015 = vmul.f32 %v949, 1.442695
    %v1016 = vpow.pop %v1015
    %v1017 = vmul.f32 %v950, 1.442695
    %v1018 = vpow.pop %v1017
    %v1019 = vmul.f32 %v951, 1.442695
    %v1020 = vpow.pop %v1019
    %v1021 = vmul.f32 %v952, 1.442695
    %v1022 = vpow.pop %v1021
    %v1023 = vmul.f32 %v953, 1.442695
    %v1024 = vpow.pop %v1023
    %v1025 = vmul.f32 %v954, 1.442695
    %v1026 = vpow.pop %v1025
    %v1027 = vmul.f32 %v955, 1.442695
    %v1028 = vpow.pop %v1027
    %v1029 = vmul.f32 %v956, 1.442695
    %v1030 = vpow.pop %v1029
    %v1031 = vmul.f32 %v957, 1.442695
    %v1032 = vpow.pop %v1031
    %v1033 = vmul.f32 %v958, 1.442695
    %v1034 = vpow.pop %v1033
    %v1035 = vmul.f32 %v959, 1.442695
    %v1036 = vpow.pop %v1035
    %v1037 = vmul.f32 %v960, 1.442695
    %v1038 = vpow.pop %v1037
    %v1039 = vmul.f32 %v961, 1.442695
    %v1040 = vpow.pop %v1039
    %v1041 = vmul.f32 %v962, 1.442695
    %v1042 = vpow.pop %v1041
    %v1043 = vmul.f32 %v963, 1.442695
    %v1044 = vpow.pop %v1043
    %v1045 = vmul.f32 %v964, 1.442695
    %v1046 = vpow.pop %v1045
    %v1047 = vmul.f32 %v965, 1.442695
    %v1048 = vpow.pop %v1047
    %v1049 = vmul.f32 %v966, 1.442695
    %v1050 = vpow.pop %v1049
    %v1051 = vmul.f32 %v967, 1.442695
    %v1052 = vpow.pop %v1051
    %v1053 = vmul.f32 %v968, 1.442695
    %v1054 = vpow.pop %v1053
    %v1055 = vmul.f32 %v969, 1.442695
    %v1056 = vpow.pop %v1055
    %v1057 = vmul.f32 %v970, 1.442695
    %v1058 = vpow.pop %v1057
    %v1059 = vmul.f32 %v971, 1.442695
    %v1060 = vpow.pop %v1059
    %v1061 = vmul.f32 %v972, 1.442695
    %v1062 = vpow.pop %v1061
    %v1063 = vmul.f32 %v973, 1.442695
    %v1064 = vpow.pop %v1063
    %v1065 = vmul.f32 %v974, 1.442695
    %v1066 = vpow.pop %v1065
    %v1067 = vmul.f32 %v975, 1.442695
    %v1068 = vpow.pop %v1067
    %v1069 = vmul.f32 %v976, 1.442695
    %v1070 = vpow.pop %v1069
    %v1071 = vmul.f32 %v977, 1.442695
    %v1072 = vpow.pop %v1071
    %v1073 = vmul.f32 %v978, 1.442695
    %v1074 = vpow.pop %v1073
    %v1075 = vmul.f32 %v979, 1.442695
    %v1076 = vpow.pop %v1075
    %v1077 = vmul.f32 %v980, 1.442695
    %v1078 = vpow.pop %v1077
    %v1079 = vmul.f32 %v981, 1.442695
    %v1080 = vpow.pop %v1079
    %v1081 = vmul.f32 %v982, 1.442695
    %v1082 = vpow.pop %v1081
    %v1083 = vmul.f32 %v983, 1.442695
    %v1084 = vpow.pop %v1083
    %v1085 = vmul.f32 %v984, 1.442695
    %v1086 = vpow.pop %v1085
    %v1087 = vmul.f32 %v985, 1.442695
    %v1088 = vpow.pop %v1087
    %v1089 = vmul.f32 %v986, 1.442695
    %v1090 = vpow.pop %v1089
    %v1091 = vmul.f32 %v987, 1.442695
    %v1092 = vpow.pop %v1091
    %v1093 = vmul.f32 %v988, 1.442695
    %v1094 = vpow.pop %v1093
    %v1095 = vmul.f32 %v989, 1.442695
    %v1096 = vpow.pop %v1095
    %v1097 = vmul.f32 %v990, 1.442695
    %v1098 = vpow.pop %v1097
    %v1099 = vmul.f32 %v991, 1.442695
    %v1100 = vpow.pop %v1099
    %v1101 = vmul.f32 %v992, 1.442695
    %v1102 = vpow.pop %v1101
    %v1103 = vmul.f32 %v993, 1.442695
    %v1104 = vpow.pop %v1103
    %v1105 = vmul.f32 %v994, 1.442695
    %v1106 = vpow.pop %v1105
    %v1107 = vmul.f32 %v995, 1.442695
    %v1108 = vpow.pop %v1107
    %v1109 = vmul.f32 %v996, 1.442695
    %v1110 = vpow.pop %v1109
    %v1111 = vmul.f32 %v997, 1.442695
    %v1112 = vpow.pop %v1111
    %v1113 = vmul.f32 %v998, 1.442695
    %v1114 = vpow.pop %v1113
    %v1115 = vmul.f32 %v999, 1.442695
    %v1116 = vpow.pop %v1115
    %v1117 = vmul.f32 %v1000, 1.442695
    %v1118 = vpow.pop %v1117
    %v1119 = vmul.f32 %v1001, 1.442695
    %v1120 = vpow.pop %v1119
    %v1121 = vmul.f32 %v1002, 1.442695
    %v1122 = vpow.pop %v1121
    %v1123 = vmul.f32 %v1003, 1.442695
    %v1124 = vpow.pop %v1123
    %v1125 = vmul.f32 %v1004, 1.442695
    %v1126 = vpow.pop %v1125
    %v1127 = vmul.f32 %v1005, 1.442695
    %v1128 = vpow.pop %v1127
    %v1129 = vmul.f32 %v1006, 1.442695
    %v1130 = vpow.pop %v1129
    %v1131 = vmul.f32 %v1007, 1.442695
    %v1132 = vpow.pop %v1131
    %v1133 = vmul.f32 %v1008, 1.442695
    %v1134 = vpow.pop %v1133
    %v1135 = vmul.f32 %v1009, 1.442695
    %v1136 = vpow.pop %v1135
    %v1137 = vmul.f32 %v1010, 1.442695
    %v1138 = vpow.pop %v1137
    %v1139 = vadd.f32 %v1012, 1.0
    %v1140 = vadd.f32 %v1014, 1.0
    %v1141 = vadd.f32 %v1016, 1.0
    %v1142 = vadd.f32 %v1018, 1.0
    %v1143 = vadd.f32 %v1020, 1.0
    %v1144 = vadd.f32 %v1022, 1.0
    %v1145 = vadd.f32 %v1024, 1.0
    %v1146 = vadd.f32 %v1026, 1.0
    %v1147 = vadd.f32 %v1028, 1.0
    %v1148 = vadd.f32 %v1030, 1.0
    %v1149 = vadd.f32 %v1032, 1.0
    %v1150 = vadd.f32 %v1034, 1.0
    %v1151 = vadd.f32 %v1036, 1.0
    %v1152 = vadd.f32 %v1038, 1.0
    %v1153 = vadd.f32 %v1040, 1.0
    %v1154 = vadd.f32 %v1042, 1.0
    %v1155 = vadd.f32 %v1044, 1.0
    %v1156 = vadd.f32 %v1046, 1.0
    %v1157 = vadd.f32 %v1048, 1.0
    %v1158 = vadd.f32 %v1050, 1.0
    %v1159 = vadd.f32 %v1052, 1.0
    %v1160 = vadd.f32 %v1054, 1.0
    %v1161 = vadd.f32 %v1056, 1.0
    %v1162 = vadd.f32 %v1058, 1.0
    %v1163 = vadd.f32 %v1060, 1.0
    %v1164 = vadd.f32 %v1062, 1.0
    %v1165 = vadd.f32 %v1064, 1.0
    %v1166 = vadd.f32 %v1066, 1.0
    %v1167 = vadd.f32 %v1068, 1.0
    %v1168 = vadd.f32 %v1070, 1.0
    %v1169 = vadd.f32 %v1072, 1.0
    %v1170 = vadd.f32 %v1074, 1.0
    %v1171 = vadd.f32 %v1076, 1.0
    %v1172 = vadd.f32 %v1078, 1.0
    %v1173 = vadd.f32 %v1080, 1.0
    %v1174 = vadd.f32 %v1082, 1.0
    %v1175 = vadd.f32 %v1084, 1.0
    %v1176 = vadd.f32 %v1086, 1.0
    %v1177 = vadd.f32 %v1088, 1.0
    %v1178 = vadd.f32 %v1090, 1.0
    %v1179 = vadd.f32 %v1092, 1.0
    %v1180 = vadd.f32 %v1094, 1.0
    %v1181 = vadd.f32 %v1096, 1.0
    %v1182 = vadd.f32 %v1098, 1.0
    %v1183 = vadd.f32 %v1100, 1.0
    %v1184 = vadd.f32 %v1102, 1.0
    %v1185 = vadd.f32 %v1104, 1.0
    %v1186 = vadd.f32 %v1106, 1.0
    %v1187 = vadd.f32 %v1108, 1.0
    %v1188 = vadd.f32 %v1110, 1.0
    %v1189 = vadd.f32 %v1112, 1.0
    %v1190 = vadd.f32 %v1114, 1.0
    %v1191 = vadd.f32 %v1116, 1.0
    %v1192 = vadd.f32 %v1118, 1.0
    %v1193 = vadd.f32 %v1120, 1.0
    %v1194 = vadd.f32 %v1122, 1.0
    %v1195 = vadd.f32 %v1124, 1.0
    %v1196 = vadd.f32 %v1126, 1.0
    %v1197 = vadd.f32 %v1128, 1.0
    %v1198 = vadd.f32 %v1130, 1.0
    %v1199 = vadd.f32 %v1132, 1.0
    %v1200 = vadd.f32 %v1134, 1.0
    %v1201 = vadd.f32 %v1136, 1.0
    %v1202 = vadd.f32 %v1138, 1.0
    %v1203 = vmul.f32 %v1139, %v1139
    %v1204 = vmul.f32 %v1140, %v1140
    %v1205 = vmul.f32 %v1141, %v1141
    %v1206 = vmul.f32 %v1142, %v1142
    %v1207 = vmul.f32 %v1143, %v1143
    %v1208 = vmul.f32 %v1144, %v1144
    %v1209 = vmul.f32 %v1145, %v1145
    %v1210 = vmul.f32 %v1146, %v1146
    %v1211 = vmul.f32 %v1147, %v1147
    %v1212 = vmul.f32 %v1148, %v1148
    %v1213 = vmul.f32 %v1149, %v1149
    %v1214 = vmul.f32 %v1150, %v1150
    %v1215 = vmul.f32 %v1151, %v1151
    %v1216 = vmul.f32 %v1152, %v1152
    %v1217 = vmul.f32 %v1153, %v1153
    %v1218 = vmul.f32 %v1154, %v1154
    %v1219 = vmul.f32 %v1155, %v1155
    %v1220 = vmul.f32 %v1156, %v1156
    %v1221 = vmul.f32 %v1157, %v1157
    %v1222 = vmul.f32 %v1158, %v1158
    %v1223 = vmul.f32 %v1159, %v1159
    %v1224 = vmul.f32 %v1160, %v1160
    %v1225 = vmul.f32 %v1161, %v1161
    %v1226 = vmul.f32 %v1162, %v1162
    %v1227 = vmul.f32 %v1163, %v1163
    %v1228 = vmul.f32 %v1164, %v1164
    %v1229 = vmul.f32 %v1165, %v1165
    %v1230 = vmul.f32 %v1166, %v1166
    %v1231 = vmul.f32 %v1167, %v1167
    %v1232 = vmul.f32 %v1168, %v1168
    %v1233 = vmul.f32 %v1169, %v1169
    %v1234 = vmul.f32 %v1170, %v1170
    %v1235 = vmul.f32 %v1171, %v1171
    %v1236 = vmul.f32 %v1172, %v1172
    %v1237 = vmul.f32 %v1173, %v1173
    %v1238 = vmul.f32 %v1174, %v1174
    %v1239 = vmul.f32 %v1175, %v1175
    %v1240 = vmul.f32 %v1176, %v1176
    %v1241 = vmul.f32 %v1177, %v1177
    %v1242 = vmul.f32 %v1178, %v1178
    %v1243 = vmul.f32 %v1179, %v1179
    %v1244 = vmul.f32 %v1180, %v1180
    %v1245 = vmul.f32 %v1181, %v1181
    %v1246 = vmul.f32 %v1182, %v1182
    %v1247 = vmul.f32 %v1183, %v1183
    %v1248 = vmul.f32 %v1184, %v1184
    %v1249 = vmul.f32 %v1185, %v1185
    %v1250 = vmul.f32 %v1186, %v1186
    %v1251 = vmul.f32 %v1187, %v1187
    %v1252 = vmul.f32 %v1188, %v1188
    %v1253 = vmul.f32 %v1189, %v1189
    %v1254 = vmul.f32 %v1190, %v1190
    %v1255 = vmul.f32 %v1191, %v1191
    %v1256 = vmul.f32 %v1192, %v1192
    %v1257 = vmul.f32 %v1193, %v1193
    %v1258 = vmul.f32 %v1194, %v1194
    %v1259 = vmul.f32 %v1195, %v1195
    %v1260 = vmul.f32 %v1196, %v1196
    %v1261 = vmul.f32 %v1197, %v1197
    %v1262 = vmul.f32 %v1198, %v1198
    %v1263 = vmul.f32 %v1199, %v1199
    %v1264 = vmul.f32 %v1200, %v1200
    %v1265 = vmul.f32 %v1201, %v1201
    %v1266 = vmul.f32 %v1202, %v1202
    %v1267 = vsub.f32 %v1203, 1.0
    %v1268 = vsub.f32 %v1204, 1.0
    %v1269 = vsub.f32 %v1205, 1.0
    %v1270 = vsub.f32 %v1206, 1.0
    %v1271 = vsub.f32 %v1207, 1.0
    %v1272 = vsub.f32 %v1208, 1.0
    %v1273 = vsub.f32 %v1209, 1.0
    %v1274 = vsub.f32 %v1210, 1.0
    %v1275 = vsub.f32 %v1211, 1.0
    %v1276 = vsub.f32 %v1212, 1.0
    %v1277 = vsub.f32 %v1213, 1.0
    %v1278 = vsub.f32 %v1214, 1.0
    %v1279 = vsub.f32 %v1215, 1.0
    %v1280 = vsub.f32 %v1216, 1.0
    %v1281 = vsub.f32 %v1217, 1.0
    %v1282 = vsub.f32 %v1218, 1.0
    %v1283 = vsub.f32 %v1219, 1.0
    %v1284 = vsub.f32 %v1220, 1.0
    %v1285 = vsub.f32 %v1221, 1.0
    %v1286 = vsub.f32 %v1222, 1.0
    %v1287 = vsub.f32 %v1223, 1.0
    %v1288 = vsub.f32 %v1224, 1.0
    %v1289 = vsub.f32 %v1225, 1.0
    %v1290 = vsub.f32 %v1226, 1.0
    %v1291 = vsub.f32 %v1227, 1.0
    %v1292 = vsub.f32 %v1228, 1.0
    %v1293 = vsub.f32 %v1229, 1.0
    %v1294 = vsub.f32 %v1230, 1.0
    %v1295 = vsub.f32 %v1231, 1.0
    %v1296 = vsub.f32 %v1232, 1.0
    %v1297 = vsub.f32 %v1233, 1.0
    %v1298 = vsub.f32 %v1234, 1.0
    %v1299 = vsub.f32 %v1235, 1.0
    %v1300 = vsub.f32 %v1236, 1.0
    %v1301 = vsub.f32 %v1237, 1.0
    %v1302 = vsub.f32 %v1238, 1.0
    %v1303 = vsub.f32 %v1239, 1.0
    %v1304 = vsub.f32 %v1240, 1.0
    %v1305 = vsub.f32 %v1241, 1.0
    %v1306 = vsub.f32 %v1242, 1.0
    %v1307 = vsub.f32 %v1243, 1.0
    %v1308 = vsub.f32 %v1244, 1.0
    %v1309 = vsub.f32 %v1245, 1.0
    %v1310 = vsub.f32 %v1246, 1.0
    %v1311 = vsub.f32 %v1247, 1.0
    %v1312 = vsub.f32 %v1248, 1.0
    %v1313 = vsub.f32 %v1249, 1.0
    %v1314 = vsub.f32 %v1250, 1.0
    %v1315 = vsub.f32 %v1251, 1.0
    %v1316 = vsub.f32 %v1252, 1.0
    %v1317 = vsub.f32 %v1253, 1.0
    %v1318 = vsub.f32 %v1254, 1.0
    %v1319 = vsub.f32 %v1255, 1.0
    %v1320 = vsub.f32 %v1256, 1.0
    %v1321 = vsub.f32 %v1257, 1.0
    %v1322 = vsub.f32 %v1258, 1.0
    %v1323 = vsub.f32 %v1259, 1.0
    %v1324 = vsub.f32 %v1260, 1.0
    %v1325 = vsub.f32 %v1261, 1.0
    %v1326 = vsub.f32 %v1262, 1.0
    %v1327 = vsub.f32 %v1263, 1.0
    %v1328 = vsub.f32 %v1264, 1.0
    %v1329 = vsub.f32 %v1265, 1.0
    %v1330 = vsub.f32 %v1266, 1.0
    %v1331 = vadd.f32 %v1203, 1.0
    %v1332 = vadd.f32 %v1204, 1.0
    %v1333 = vadd.f32 %v1205, 1.0
    %v1334 = vadd.f32 %v1206, 1.0
    %v1335 = vadd.f32 %v1207, 1.0
    %v1336 = vadd.f32 %v1208, 1.0
    %v1337 = vadd.f32 %v1209, 1.0
    %v1338 = vadd.f32 %v1210, 1.0
    %v1339 = vadd.f32 %v1211, 1.0
    %v1340 = vadd.f32 %v1212, 1.0
    %v1341 = vadd.f32 %v1213, 1.0
    %v1342 = vadd.f32 %v1214, 1.0
    %v1343 = vadd.f32 %v1215, 1.0
    %v1344 = vadd.f32 %v1216, 1.0
    %v1345 = vadd.f32 %v1217, 1.0
    %v1346 = vadd.f32 %v1218, 1.0
    %v1347 = vadd.f32 %v1219, 1.0
    %v1348 = vadd.f32 %v1220, 1.0
    %v1349 = vadd.f32 %v1221, 1.0
    %v1350 = vadd.f32 %v1222, 1.0
    %v1351 = vadd.f32 %v1223, 1.0
    %v1352 = vadd.f32 %v1224, 1.0
    %v1353 = vadd.f32 %v1225, 1.0
    %v1354 = vadd.f32 %v1226, 1.0
    %v1355 = vadd.f32 %v1227, 1.0
    %v1356 = vadd.f32 %v1228, 1.0
    %v1357 = vadd.f32 %v1229, 1.0
    %v1358 = vadd.f32 %v1230, 1.0
    %v1359 = vadd.f32 %v1231, 1.0
    %v1360 = vadd.f32 %v1232, 1.0
    %v1361 = vadd.f32 %v1233, 1.0
    %v1362 = vadd.f32 %v1234, 1.0
    %v1363 = vadd.f32 %v1235, 1.0
    %v1364 = vadd.f32 %v1236, 1.0
    %v1365 = vadd.f32 %v1237, 1.0
    %v1366 = vadd.f32 %v1238, 1.0
    %v1367 = vadd.f32 %v1239, 1.0
    %v1368 = vadd.f32 %v1240, 1.0
    %v1369 = vadd.f32 %v1241, 1.0
    %v1370 = vadd.f32 %v1242, 1.0
    %v1371 = vadd.f32 %v1243, 1.0
    %v1372 = vadd.f32 %v1244, 1.0
    %v1373 = vadd.f32 %v1245, 1.0
    %v1374 = vadd.f32 %v1246, 1.0
    %v1375 = vadd.f32 %v1247, 1.0
    %v1376 = vadd.f32 %v1248, 1.0
    %v1377 = vadd.f32 %v1249, 1.0
    %v1378 = vadd.f32 %v1250, 1.0
    %v1379 = vadd.f32 %v1251, 1.0
    %v1380 = vadd.f32 %v1252, 1.0
    %v1381 = vadd.f32 %v1253, 1.0
    %v1382 = vadd.f32 %v1254, 1.0
    %v1383 = vadd.f32 %v1255, 1.0
    %v1384 = vadd.f32 %v1256, 1.0
    %v1385 = vadd.f32 %v1257, 1.0
    %v1386 = vadd.f32 %v1258, 1.0
    %v1387 = vadd.f32 %v1259, 1.0
    %v1388 = vadd.f32 %v1260, 1.0
    %v1389 = vadd.f32 %v1261, 1.0
    %v1390 = vadd.f32 %v1262, 1.0
    %v1391 = vadd.f32 %v1263, 1.0
    %v1392 = vadd.f32 %v1264, 1.0
    %v1393 = vadd.f32 %v1265, 1.0
    %v1394 = vadd.f32 %v1266, 1.0
    %v1395 = vrcp.pop %v1331
    %v1396 = vrcp.pop %v1332
    %v1397 = vrcp.pop %v1333
    %v1398 = vrcp.pop %v1334
    %v1399 = vrcp.pop %v1335
    %v1400 = vrcp.pop %v1336
    %v1401 = vrcp.pop %v1337
    %v1402 = vrcp.pop %v1338
    %v1403 = vrcp.pop %v1339
    %v1404 = vrcp.pop %v1340
    %v1405 = vrcp.pop %v1341
    %v1406 = vrcp.pop %v1342
    %v1407 = vrcp.pop %v1343
    %v1408 = vrcp.pop %v1344
    %v1409 = vrcp.pop %v1345
    %v1410 = vrcp.pop %v1346
    %v1411 = vrcp.pop %v1347
    %v1412 = vrcp.pop %v1348
    %v1413 = vrcp.pop %v1349
    %v1414 = vrcp.pop %v1350
    %v1415 = vrcp.pop %v1351
    %v1416 = vrcp.pop %v1352
    %v1417 = vrcp.pop %v1353
    %v1418 = vrcp.pop %v1354
    %v1419 = vrcp.pop %v1355
    %v1420 = vrcp.pop %v1356
    %v1421 = vrcp.pop %v1357
    %v1422 = vrcp.pop %v1358
    %v1423 = vrcp.pop %v1359
    %v1424 = vrcp.pop %v1360
    %v1425 = vrcp.pop %v1361
    %v1426 = vrcp.pop %v1362
    %v1427 = vrcp.pop %v1363
    %v1428 = vrcp.pop %v1364
    %v1429 = vrcp.pop %v1365
    %v1430 = vrcp.pop %v1366
    %v1431 = vrcp.pop %v1367
    %v1432 = vrcp.pop %v1368
    %v1433 = vrcp.pop %v1369
    %v1434 = vrcp.pop %v1370
    %v1435 = vrcp.pop %v1371
    %v1436 = vrcp.pop %v1372
    %v1437 = vrcp.pop %v1373
    %v1438 = vrcp.pop %v1374
    %v1439 = vrcp.pop %v1375
    %v1440 = vrcp.pop %v1376
    %v1441 = vrcp.pop %v1377
    %v1442 = vrcp.pop %v1378
    %v1443 = vrcp.pop %v1379
    %v1444 = vrcp.pop %v1380
    %v1445 = vrcp.pop %v1381
    %v1446 = vrcp.pop %v1382
    %v1447 = vrcp.pop %v1383
    %v1448 = vrcp.pop %v1384
    %v1449 = vrcp.pop %v1385
    %v1450 = vrcp.pop %v1386
    %v1451 = vrcp.pop %v1387
    %v1452 = vrcp.pop %v1388
    %v1453 = vrcp.pop %v1389
    %v1454 = vrcp.pop %v1390
    %v1455 = vrcp.pop %v1391
    %v1456 = vrcp.pop %v1392
    %v1457 = vrcp.pop %v1393
    %v1458 = vrcp.pop %v1394
    %v1459 = vmul.f32 %v1267, %v1395
    %v1460 = vmul.f32 %v1268, %v1396
    %v1461 = vmul.f32 %v1269, %v1397
    %v1462 = vmul.f32 %v1270, %v1398
    %v1463 = vmul.f32 %v1271, %v1399
    %v1464 = vmul.f32 %v1272, %v1400
    %v1465 = vmul.f32 %v1273, %v1401
    %v1466 = vmul.f32 %v1274, %v1402
    %v1467 = vmul.f32 %v1275, %v1403
    %v1468 = vmul.f32 %v1276, %v1404
    %v1469 = vmul.f32 %v1277, %v1405
    %v1470 = vmul.f32 %v1278, %v1406
    %v1471 = vmul.f32 %v1279, %v1407
    %v1472 = vmul.f32 %v1280, %v1408
    %v1473 = vmul.f32 %v1281, %v1409
    %v1474 = vmul.f32 %v1282, %v1410
    %v1475 = vmul.f32 %v1283, %v1411
    %v1476 = vmul.f32 %v1284, %v1412
    %v1477 = vmul.f32 %v1285, %v1413
    %v1478 = vmul.f32 %v1286, %v1414
    %v1479 = vmul.f32 %v1287, %v1415
    %v1480 = vmul.f32 %v1288, %v1416
    %v1481 = vmul.f32 %v1289, %v1417
    %v1482 = vmul.f32 %v1290, %v1418
    %v1483 = vmul.f32 %v1291, %v1419
    %v1484 = vmul.f32 %v1292, %v1420
    %v1485 = vmul.f32 %v1293, %v1421
    %v1486 = vmul.f32 %v1294, %v1422
    %v1487 = vmul.f32 %v1295, %v1423
    %v1488 = vmul.f32 %v1296, %v1424
    %v1489 = vmul.f32 %v1297, %v1425
    %v1490 = vmul.f32 %v1298, %v1426
    %v1491 = vmul.f32 %v1299, %v1427
    %v1492 = vmul.f32 %v1300, %v1428
    %v1493 = vmul.f32 %v1301, %v1429
    %v1494 = vmul.f32 %v1302, %v1430
    %v1495 = vmul.f32 %v1303, %v1431
    %v1496 = vmul.f32 %v1304, %v1432
    %v1497 = vmul.f32 %v1305, %v1433
    %v1498 = vmul.f32 %v1306, %v1434
    %v1499 = vmul.f32 %v1307, %v1435
    %v1500 = vmul.f32 %v1308, %v1436
    %v1501 = vmul.f32 %v1309, %v1437
    %v1502 = vmul.f32 %v1310, %v1438
    %v1503 = vmul.f32 %v1311, %v1439
    %v1504 = vmul.f32 %v1312, %v1440
    %v1505 = vmul.f32 %v1313, %v1441
    %v1506 = vmul.f32 %v1314, %v1442
    %v1507 = vmul.f32 %v1315, %v1443
    %v1508 = vmul.f32 %v1316, %v1444
    %v1509 = vmul.f32 %v1317, %v1445
    %v1510 = vmul.f32 %v1318, %v1446
    %v1511 = vmul.f32 %v1319, %v1447
    %v1512 = vmul.f32 %v1320, %v1448
    %v1513 = vmul.f32 %v1321, %v1449
    %v1514 = vmul.f32 %v1322, %v1450
    %v1515 = vmul.f32 %v1323, %v1451
    %v1516 = vmul.f32 %v1324, %v1452
    %v1517 = vmul.f32 %v1325, %v1453
    %v1518 = vmul.f32 %v1326, %v1454
    %v1519 = vmul.f32 %v1327, %v1455
    %v1520 = vmul.f32 %v1328, %v1456
    %v1521 = vmul.f32 %v1329, %v1457
    %v1522 = vmul.f32 %v1330, %v1458
    %vm1523 = vcmp.gt.f32.partialorder %v393, 20.0
    %vm1524 = vcmp.gt.f32.partialorder %v396, 20.0
    %vm1525 = vcmp.gt.f32.partialorder %v401, 20.0
    %vm1526 = vcmp.gt.f32.partialorder %v404, 20.0
    %vm1527 = vcmp.gt.f32.partialorder %v409, 20.0
    %vm1528 = vcmp.gt.f32.partialorder %v412, 20.0
    %vm1529 = vcmp.gt.f32.partialorder %v417, 20.0
    %vm1530 = vcmp.gt.f32.partialorder %v420, 20.0
    %vm1531 = vcmp.gt.f32.partialorder %v425, 20.0
    %vm1532 = vcmp.gt.f32.partialorder %v428, 20.0
    %vm1533 = vcmp.gt.f32.partialorder %v433, 20.0
    %vm1534 = vcmp.gt.f32.partialorder %v436, 20.0
    %vm1535 = vcmp.gt.f32.partialorder %v441, 20.0
    %vm1536 = vcmp.gt.f32.partialorder %v444, 20.0
    %vm1537 = vcmp.gt.f32.partialorder %v449, 20.0
    %vm1538 = vcmp.gt.f32.partialorder %v452, 20.0
    %vm1539 = vcmp.gt.f32.partialorder %v457, 20.0
    %vm1540 = vcmp.gt.f32.partialorder %v460, 20.0
    %vm1541 = vcmp.gt.f32.partialorder %v465, 20.0
    %vm1542 = vcmp.gt.f32.partialorder %v468, 20.0
    %vm1543 = vcmp.gt.f32.partialorder %v473, 20.0
    %vm1544 = vcmp.gt.f32.partialorder %v476, 20.0
    %vm1545 = vcmp.gt.f32.partialorder %v481, 20.0
    %vm1546 = vcmp.gt.f32.partialorder %v484, 20.0
    %vm1547 = vcmp.gt.f32.partialorder %v489, 20.0
    %vm1548 = vcmp.gt.f32.partialorder %v492, 20.0
    %vm1549 = vcmp.gt.f32.partialorder %v497, 20.0
    %vm1550 = vcmp.gt.f32.partialorder %v500, 20.0
    %vm1551 = vcmp.gt.f32.partialorder %v505, 20.0
    %vm1552 = vcmp.gt.f32.partialorder %v508, 20.0
    %vm1553 = vcmp.gt.f32.partialorder %v513, 20.0
    %vm1554 = vcmp.gt.f32.partialorder %v516, 20.0
    %vm1555 = vcmp.gt.f32.partialorder %v521, 20.0
    %vm1556 = vcmp.gt.f32.partialorder %v524, 20.0
    %vm1557 = vcmp.gt.f32.partialorder %v529, 20.0
    %vm1558 = vcmp.gt.f32.partialorder %v532, 20.0
    %vm1559 = vcmp.gt.f32.partialorder %v537, 20.0
    %vm1560 = vcmp.gt.f32.partialorder %v540, 20.0
    %vm1561 = vcmp.gt.f32.partialorder %v545, 20.0
    %vm1562 = vcmp.gt.f32.partialorder %v548, 20.0
    %vm1563 = vcmp.gt.f32.partialorder %v553, 20.0
    %vm1564 = vcmp.gt.f32.partialorder %v556, 20.0
    %vm1565 = vcmp.gt.f32.partialorder %v561, 20.0
    %vm1566 = vcmp.gt.f32.partialorder %v564, 20.0
    %vm1567 = vcmp.gt.f32.partialorder %v569, 20.0
    %vm1568 = vcmp.gt.f32.partialorder %v572, 20.0
    %vm1569 = vcmp.gt.f32.partialorder %v577, 20.0
    %vm1570 = vcmp.gt.f32.partialorder %v580, 20.0
    %vm1571 = vcmp.gt.f32.partialorder %v585, 20.0
    %vm1572 = vcmp.gt.f32.partialorder %v588, 20.0
    %vm1573 = vcmp.gt.f32.partialorder %v593, 20.0
    %vm1574 = vcmp.gt.f32.partialorder %v596, 20.0
    %vm1575 = vcmp.gt.f32.partialorder %v601, 20.0
    %vm1576 = vcmp.gt.f32.partialorder %v604, 20.0
    %vm1577 = vcmp.gt.f32.partialorder %v609, 20.0
    %vm1578 = vcmp.gt.f32.partialorder %v612, 20.0
    %vm1579 = vcmp.gt.f32.partialorder %v617, 20.0
    %vm1580 = vcmp.gt.f32.partialorder %v620, 20.0
    %vm1581 = vcmp.gt.f32.partialorder %v625, 20.0
    %vm1582 = vcmp.gt.f32.partialorder %v628, 20.0
    %vm1583 = vcmp.gt.f32.partialorder %v633, 20.0
    %vm1584 = vcmp.gt.f32.partialorder %v636, 20.0
    %vm1585 = vcmp.gt.f32.partialorder %v641, 20.0
    %vm1586 = vcmp.gt.f32.partialorder %v644, 20.0
    %v1587 = vmul.f32 %v393, %v1459
    %v1588 = vmul.f32 %v396, %v1460
    %v1589 = vmul.f32 %v401, %v1461
    %v1590 = vmul.f32 %v404, %v1462
    %v1591 = vmul.f32 %v409, %v1463
    %v1592 = vmul.f32 %v412, %v1464
    %v1593 = vmul.f32 %v417, %v1465
    %v1594 = vmul.f32 %v420, %v1466
    %v1595 = vmul.f32 %v425, %v1467
    %v1596 = vmul.f32 %v428, %v1468
    %v1597 = vmul.f32 %v433, %v1469
    %v1598 = vmul.f32 %v436, %v1470
    %v1599 = vmul.f32 %v441, %v1471
    %v1600 = vmul.f32 %v444, %v1472
    %v1601 = vmul.f32 %v449, %v1473
    %v1602 = vmul.f32 %v452, %v1474
    %v1603 = vmul.f32 %v457, %v1475
    %v1604 = vmul.f32 %v460, %v1476
    %v1605 = vmul.f32 %v465, %v1477
    %v1606 = vmul.f32 %v468, %v1478
    %v1607 = vmul.f32 %v473, %v1479
    %v1608 = vmul.f32 %v476, %v1480
    %v1609 = vmul.f32 %v481, %v1481
    %v1610 = vmul.f32 %v484, %v1482
    %v1611 = vmul.f32 %v489, %v1483
    %v1612 = vmul.f32 %v492, %v1484
    %v1613 = vmul.f32 %v497, %v1485
    %v1614 = vmul.f32 %v500, %v1486
    %v1615 = vmul.f32 %v505, %v1487
    %v1616 = vmul.f32 %v508, %v1488
    %v1617 = vmul.f32 %v513, %v1489
    %v1618 = vmul.f32 %v516, %v1490
    %v1619 = vmul.f32 %v521, %v1491
    %v1620 = vmul.f32 %v524, %v1492
    %v1621 = vmul.f32 %v529, %v1493
    %v1622 = vmul.f32 %v532, %v1494
    %v1623 = vmul.f32 %v537, %v1495
    %v1624 = vmul.f32 %v540, %v1496
    %v1625 = vmul.f32 %v545, %v1497
    %v1626 = vmul.f32 %v548, %v1498
    %v1627 = vmul.f32 %v553, %v1499
    %v1628 = vmul.f32 %v556, %v1500
    %v1629 = vmul.f32 %v561, %v1501
    %v1630 = vmul.f32 %v564, %v1502
    %v1631 = vmul.f32 %v569, %v1503
    %v1632 = vmul.f32 %v572, %v1504
    %v1633 = vmul.f32 %v577, %v1505
    %v1634 = vmul.f32 %v580, %v1506
    %v1635 = vmul.f32 %v585, %v1507
    %v1636 = vmul.f32 %v588, %v1508
    %v1637 = vmul.f32 %v593, %v1509
    %v1638 = vmul.f32 %v596, %v1510
    %v1639 = vmul.f32 %v601, %v1511
    %v1640 = vmul.f32 %v604, %v1512
    %v1641 = vmul.f32 %v609, %v1513
    %v1642 = vmul.f32 %v612, %v1514
    %v1643 = vmul.f32 %v617, %v1515
    %v1644 = vmul.f32 %v620, %v1516
    %v1645 = vmul.f32 %v625, %v1517
    %v1646 = vmul.f32 %v628, %v1518
    %v1647 = vmul.f32 %v633, %v1519
    %v1648 = vmul.f32 %v636, %v1520
    %v1649 = vmul.f32 %v641, %v1521
    %v1650 = vmul.f32 %v644, %v1522
    %v1651 = vsel %vm1523, %v393, %v1587
    %v1652 = vsel %vm1524, %v396, %v1588
    %v1653 = vsel %vm1525, %v401, %v1589
    %v1654 = vsel %vm1526, %v404, %v1590
    %v1655 = vsel %vm1527, %v409, %v1591
    %v1656 = vsel %vm1528, %v412, %v1592
    %v1657 = vsel %vm1529, %v417, %v1593
    %v1658 = vsel %vm1530, %v420, %v1594
    %v1659 = vsel %vm1531, %v425, %v1595
    %v1660 = vsel %vm1532, %v428, %v1596
    %v1661 = vsel %vm1533, %v433, %v1597
    %v1662 = vsel %vm1534, %v436, %v1598
    %v1663 = vsel %vm1535, %v441, %v1599
    %v1664 = vsel %vm1536, %v444, %v1600
    %v1665 = vsel %vm1537, %v449, %v1601
    %v1666 = vsel %vm1538, %v452, %v1602
    %v1667 = vsel %vm1539, %v457, %v1603
    %v1668 = vsel %vm1540, %v460, %v1604
    %v1669 = vsel %vm1541, %v465, %v1605
    %v1670 = vsel %vm1542, %v468, %v1606
    %v1671 = vsel %vm1543, %v473, %v1607
    %v1672 = vsel %vm1544, %v476, %v1608
    %v1673 = vsel %vm1545, %v481, %v1609
    %v1674 = vsel %vm1546, %v484, %v1610
    %v1675 = vsel %vm1547, %v489, %v1611
    %v1676 = vsel %vm1548, %v492, %v1612
    %v1677 = vsel %vm1549, %v497, %v1613
    %v1678 = vsel %vm1550, %v500, %v1614
    %v1679 = vsel %vm1551, %v505, %v1615
    %v1680 = vsel %vm1552, %v508, %v1616
    %v1681 = vsel %vm1553, %v513, %v1617
    %v1682 = vsel %vm1554, %v516, %v1618
    %v1683 = vsel %vm1555, %v521, %v1619
    %v1684 = vsel %vm1556, %v524, %v1620
    %v1685 = vsel %vm1557, %v529, %v1621
    %v1686 = vsel %vm1558, %v532, %v1622
    %v1687 = vsel %vm1559, %v537, %v1623
    %v1688 = vsel %vm1560, %v540, %v1624
    %v1689 = vsel %vm1561, %v545, %v1625
    %v1690 = vsel %vm1562, %v548, %v1626
    %v1691 = vsel %vm1563, %v553, %v1627
    %v1692 = vsel %vm1564, %v556, %v1628
    %v1693 = vsel %vm1565, %v561, %v1629
    %v1694 = vsel %vm1566, %v564, %v1630
    %v1695 = vsel %vm1567, %v569, %v1631
    %v1696 = vsel %vm1568, %v572, %v1632
    %v1697 = vsel %vm1569, %v577, %v1633
    %v1698 = vsel %vm1570, %v580, %v1634
    %v1699 = vsel %vm1571, %v585, %v1635
    %v1700 = vsel %vm1572, %v588, %v1636
    %v1701 = vsel %vm1573, %v593, %v1637
    %v1702 = vsel %vm1574, %v596, %v1638
    %v1703 = vsel %vm1575, %v601, %v1639
    %v1704 = vsel %vm1576, %v604, %v1640
    %v1705 = vsel %vm1577, %v609, %v1641
    %v1706 = vsel %vm1578, %v612, %v1642
    %v1707 = vsel %vm1579, %v617, %v1643
    %v1708 = vsel %vm1580, %v620, %v1644
    %v1709 = vsel %vm1581, %v625, %v1645
    %v1710 = vsel %vm1582, %v628, %v1646
    %v1711 = vsel %vm1583, %v633, %v1647
    %v1712 = vsel %vm1584, %v636, %v1648
    %v1713 = vsel %vm1585, %v641, %v1649
    %v1714 = vsel %vm1586, %v644, %v1650
    %v1715 = vpack.c.bf16 %v1652, %v1651
    %v1716 = vpack.c.bf16 %v1654, %v1653
    %v1717 = vpack.c.bf16 %v1656, %v1655
    %v1718 = vpack.c.bf16 %v1658, %v1657
    %v1719 = vpack.c.bf16 %v1660, %v1659
    %v1720 = vpack.c.bf16 %v1662, %v1661
    %v1721 = vpack.c.bf16 %v1664, %v1663
    %v1722 = vpack.c.bf16 %v1666, %v1665
    %v1723 = vpack.c.bf16 %v1668, %v1667
    %v1724 = vpack.c.bf16 %v1670, %v1669
    %v1725 = vpack.c.bf16 %v1672, %v1671
    %v1726 = vpack.c.bf16 %v1674, %v1673
    %v1727 = vpack.c.bf16 %v1676, %v1675
    %v1728 = vpack.c.bf16 %v1678, %v1677
    %v1729 = vpack.c.bf16 %v1680, %v1679
    %v1730 = vpack.c.bf16 %v1682, %v1681
    %v1731 = vpack.c.bf16 %v1684, %v1683
    %v1732 = vpack.c.bf16 %v1686, %v1685
    %v1733 = vpack.c.bf16 %v1688, %v1687
    %v1734 = vpack.c.bf16 %v1690, %v1689
    %v1735 = vpack.c.bf16 %v1692, %v1691
    %v1736 = vpack.c.bf16 %v1694, %v1693
    %v1737 = vpack.c.bf16 %v1696, %v1695
    %v1738 = vpack.c.bf16 %v1698, %v1697
    %v1739 = vpack.c.bf16 %v1700, %v1699
    %v1740 = vpack.c.bf16 %v1702, %v1701
    %v1741 = vpack.c.bf16 %v1704, %v1703
    %v1742 = vpack.c.bf16 %v1706, %v1705
    %v1743 = vpack.c.bf16 %v1708, %v1707
    %v1744 = vpack.c.bf16 %v1710, %v1709
    %v1745 = vpack.c.bf16 %v1712, %v1711
    %v1746 = vpack.c.bf16 %v1714, %v1713
    %v1779 = vunpack.c.l.b16 %v1715
    %v1780 = vunpack.c.h.b16 %v1715
    %v1781 = vunpack.c.l.b16 %v1716
    %v1782 = vunpack.c.h.b16 %v1716
    %v1783 = vunpack.c.l.b16 %v1717
    %v1784 = vunpack.c.h.b16 %v1717
    %v1785 = vunpack.c.l.b16 %v1718
    %v1786 = vunpack.c.h.b16 %v1718
    %v1787 = vunpack.c.l.b16 %v1719
    %v1788 = vunpack.c.h.b16 %v1719
    %v1789 = vunpack.c.l.b16 %v1720
    %v1790 = vunpack.c.h.b16 %v1720
    %v1791 = vunpack.c.l.b16 %v1721
    %v1792 = vunpack.c.h.b16 %v1721
    %v1793 = vunpack.c.l.b16 %v1722
    %v1794 = vunpack.c.h.b16 %v1722
    %v1795 = vunpack.c.l.b16 %v1723
    %v1796 = vunpack.c.h.b16 %v1723
    %v1797 = vunpack.c.l.b16 %v1724
    %v1798 = vunpack.c.h.b16 %v1724
    %v1799 = vunpack.c.l.b16 %v1725
    %v1800 = vunpack.c.h.b16 %v1725
    %v1801 = vunpack.c.l.b16 %v1726
    %v1802 = vunpack.c.h.b16 %v1726
    %v1803 = vunpack.c.l.b16 %v1727
    %v1804 = vunpack.c.h.b16 %v1727
    %v1805 = vunpack.c.l.b16 %v1728
    %v1806 = vunpack.c.h.b16 %v1728
    %v1807 = vunpack.c.l.b16 %v1729
    %v1808 = vunpack.c.h.b16 %v1729
    %v1809 = vunpack.c.l.b16 %v1730
    %v1810 = vunpack.c.h.b16 %v1730
    %v1811 = vunpack.c.l.b16 %v1731
    %v1812 = vunpack.c.h.b16 %v1731
    %v1813 = vunpack.c.l.b16 %v1732
    %v1814 = vunpack.c.h.b16 %v1732
    %v1815 = vunpack.c.l.b16 %v1733
    %v1816 = vunpack.c.h.b16 %v1733
    %v1817 = vunpack.c.l.b16 %v1734
    %v1818 = vunpack.c.h.b16 %v1734
    %v1819 = vunpack.c.l.b16 %v1735
    %v1820 = vunpack.c.h.b16 %v1735
    %v1821 = vunpack.c.l.b16 %v1736
    %v1822 = vunpack.c.h.b16 %v1736
    %v1823 = vunpack.c.l.b16 %v1737
    %v1824 = vunpack.c.h.b16 %v1737
    %v1825 = vunpack.c.l.b16 %v1738
    %v1826 = vunpack.c.h.b16 %v1738
    %v1827 = vunpack.c.l.b16 %v1739
    %v1828 = vunpack.c.h.b16 %v1739
    %v1829 = vunpack.c.l.b16 %v1740
    %v1830 = vunpack.c.h.b16 %v1740
    %v1831 = vunpack.c.l.b16 %v1741
    %v1832 = vunpack.c.h.b16 %v1741
    %v1833 = vunpack.c.l.b16 %v1742
    %v1834 = vunpack.c.h.b16 %v1742
    %v1835 = vunpack.c.l.b16 %v1743
    %v1836 = vunpack.c.h.b16 %v1743
    %v1837 = vunpack.c.l.b16 %v1744
    %v1838 = vunpack.c.h.b16 %v1744
    %v1839 = vunpack.c.l.b16 %v1745
    %v1840 = vunpack.c.h.b16 %v1745
    %v1841 = vunpack.c.l.b16 %v1746
    %v1842 = vunpack.c.h.b16 %v1746
    %v1843 = vpack.c.b16 %v1779, %v1779
    %v1844 = vpack.c.b16 %v1780, %v1780
    %v1845 = vpack.c.b16 %v1781, %v1781
    %v1846 = vpack.c.b16 %v1782, %v1782
    %v1847 = vpack.c.b16 %v1783, %v1783
    %v1848 = vpack.c.b16 %v1784, %v1784
    %v1849 = vpack.c.b16 %v1785, %v1785
    %v1850 = vpack.c.b16 %v1786, %v1786
    %v1851 = vpack.c.b16 %v1787, %v1787
    %v1852 = vpack.c.b16 %v1788, %v1788
    %v1853 = vpack.c.b16 %v1789, %v1789
    %v1854 = vpack.c.b16 %v1790, %v1790
    %v1855 = vpack.c.b16 %v1791, %v1791
    %v1856 = vpack.c.b16 %v1792, %v1792
    %v1857 = vpack.c.b16 %v1793, %v1793
    %v1858 = vpack.c.b16 %v1794, %v1794
    %v1859 = vpack.c.b16 %v1795, %v1795
    %v1860 = vpack.c.b16 %v1796, %v1796
    %v1861 = vpack.c.b16 %v1797, %v1797
    %v1862 = vpack.c.b16 %v1798, %v1798
    %v1863 = vpack.c.b16 %v1799, %v1799
    %v1864 = vpack.c.b16 %v1800, %v1800
    %v1865 = vpack.c.b16 %v1801, %v1801
    %v1866 = vpack.c.b16 %v1802, %v1802
    %v1867 = vpack.c.b16 %v1803, %v1803
    %v1868 = vpack.c.b16 %v1804, %v1804
    %v1869 = vpack.c.b16 %v1805, %v1805
    %v1870 = vpack.c.b16 %v1806, %v1806
    %v1871 = vpack.c.b16 %v1807, %v1807
    %v1872 = vpack.c.b16 %v1808, %v1808
    %v1873 = vpack.c.b16 %v1809, %v1809
    %v1874 = vpack.c.b16 %v1810, %v1810
    %v1875 = vpack.c.b16 %v1811, %v1811
    %v1876 = vpack.c.b16 %v1812, %v1812
    %v1877 = vpack.c.b16 %v1813, %v1813
    %v1878 = vpack.c.b16 %v1814, %v1814
    %v1879 = vpack.c.b16 %v1815, %v1815
    %v1880 = vpack.c.b16 %v1816, %v1816
    %v1881 = vpack.c.b16 %v1817, %v1817
    %v1882 = vpack.c.b16 %v1818, %v1818
    %v1883 = vpack.c.b16 %v1819, %v1819
    %v1884 = vpack.c.b16 %v1820, %v1820
    %v1885 = vpack.c.b16 %v1821, %v1821
    %v1886 = vpack.c.b16 %v1822, %v1822
    %v1887 = vpack.c.b16 %v1823, %v1823
    %v1888 = vpack.c.b16 %v1824, %v1824
    %v1889 = vpack.c.b16 %v1825, %v1825
    %v1890 = vpack.c.b16 %v1826, %v1826
    %v1891 = vpack.c.b16 %v1827, %v1827
    %v1892 = vpack.c.b16 %v1828, %v1828
    %v1893 = vpack.c.b16 %v1829, %v1829
    %v1894 = vpack.c.b16 %v1830, %v1830
    %v1895 = vpack.c.b16 %v1831, %v1831
    %v1896 = vpack.c.b16 %v1832, %v1832
    %v1897 = vpack.c.b16 %v1833, %v1833
    %v1898 = vpack.c.b16 %v1834, %v1834
    %v1899 = vpack.c.b16 %v1835, %v1835
    %v1900 = vpack.c.b16 %v1836, %v1836
    %v1901 = vpack.c.b16 %v1837, %v1837
    %v1902 = vpack.c.b16 %v1838, %v1838
    %v1903 = vpack.c.b16 %v1839, %v1839
    %v1904 = vpack.c.b16 %v1840, %v1840
    %v1905 = vpack.c.b16 %v1841, %v1841
    %v1906 = vpack.c.b16 %v1842, %v1842
    %1971 = vst [vmem:[#allocation2] sm:$0xf] %v1843
    %1972 = vst [vmem:[#allocation2 + $0x4] sm:$0xf] %v1844
    %1973 = vst [vmem:[#allocation2 + $0x8] sm:$0xf] %v1845
    %1974 = vst [vmem:[#allocation2 + $0xc] sm:$0xf] %v1846
    %1975 = vst [vmem:[#allocation2 + $0x10] sm:$0xf] %v1847
    %1976 = vst [vmem:[#allocation2 + $0x14] sm:$0xf] %v1848
    %1977 = vst [vmem:[#allocation2 + $0x18] sm:$0xf] %v1849
    %1978 = vst [vmem:[#allocation2 + $0x1c] sm:$0xf] %v1850
    %1979 = vst [vmem:[#allocation2 + $0x20] sm:$0xf] %v1851
    %1980 = vst [vmem:[#allocation2 + $0x24] sm:$0xf] %v1852
    %1981 = vst [vmem:[#allocation2 + $0x28] sm:$0xf] %v1853
    %1982 = vst [vmem:[#allocation2 + $0x2c] sm:$0xf] %v1854
    %1983 = vst [vmem:[#allocation2 + $0x30] sm:$0xf] %v1855
    %1984 = vst [vmem:[#allocation2 + $0x34] sm:$0xf] %v1856
    %1985 = vst [vmem:[#allocation2 + $0x38] sm:$0xf] %v1857
    %1986 = vst [vmem:[#allocation2 + $0x3c] sm:$0xf] %v1858
    %1987 = vst [vmem:[#allocation2 + $0x40] sm:$0xf] %v1859
    %1988 = vst [vmem:[#allocation2 + $0x44] sm:$0xf] %v1860
    %1989 = vst [vmem:[#allocation2 + $0x48] sm:$0xf] %v1861
    %1990 = vst [vmem:[#allocation2 + $0x4c] sm:$0xf] %v1862
    %1991 = vst [vmem:[#allocation2 + $0x50] sm:$0xf] %v1863
    %1992 = vst [vmem:[#allocation2 + $0x54] sm:$0xf] %v1864
    %1993 = vst [vmem:[#allocation2 + $0x58] sm:$0xf] %v1865
    %1994 = vst [vmem:[#allocation2 + $0x5c] sm:$0xf] %v1866
    %1995 = vst [vmem:[#allocation2 + $0x60] sm:$0xf] %v1867
    %1996 = vst [vmem:[#allocation2 + $0x64] sm:$0xf] %v1868
    %1997 = vst [vmem:[#allocation2 + $0x68] sm:$0xf] %v1869
    %1998 = vst [vmem:[#allocation2 + $0x6c] sm:$0xf] %v1870
    %1999 = vst [vmem:[#allocation2 + $0x70] sm:$0xf] %v1871
    %2000 = vst [vmem:[#allocation2 + $0x74] sm:$0xf] %v1872
    %2001 = vst [vmem:[#allocation2 + $0x78] sm:$0xf] %v1873
    %2002 = vst [vmem:[#allocation2 + $0x7c] sm:$0xf] %v1874
    %2003 = vst [vmem:[#allocation2 + $0x80] sm:$0xf] %v1875
    %2004 = vst [vmem:[#allocation2 + $0x84] sm:$0xf] %v1876
    %2005 = vst [vmem:[#allocation2 + $0x88] sm:$0xf] %v1877
    %2006 = vst [vmem:[#allocation2 + $0x8c] sm:$0xf] %v1878
    %2007 = vst [vmem:[#allocation2 + $0x90] sm:$0xf] %v1879
    %2008 = vst [vmem:[#allocation2 + $0x94] sm:$0xf] %v1880
    %2009 = vst [vmem:[#allocation2 + $0x98] sm:$0xf] %v1881
    %2010 = vst [vmem:[#allocation2 + $0x9c] sm:$0xf] %v1882
    %2011 = vst [vmem:[#allocation2 + $0xa0] sm:$0xf] %v1883
    %2012 = vst [vmem:[#allocation2 + $0xa4] sm:$0xf] %v1884
    %2013 = vst [vmem:[#allocation2 + $0xa8] sm:$0xf] %v1885
    %2014 = vst [vmem:[#allocation2 + $0xac] sm:$0xf] %v1886
    %2015 = vst [vmem:[#allocation2 + $0xb0] sm:$0xf] %v1887
    %2016 = vst [vmem:[#allocation2 + $0xb4] sm:$0xf] %v1888
    %2017 = vst [vmem:[#allocation2 + $0xb8] sm:$0xf] %v1889
    %2018 = vst [vmem:[#allocation2 + $0xbc] sm:$0xf] %v1890
    %2019 = vst [vmem:[#allocation2 + $0xc0] sm:$0xf] %v1891
    %2020 = vst [vmem:[#allocation2 + $0xc4] sm:$0xf] %v1892
    %2021 = vst [vmem:[#allocation2 + $0xc8] sm:$0xf] %v1893
    %2022 = vst [vmem:[#allocation2 + $0xcc] sm:$0xf] %v1894
    %2023 = vst [vmem:[#allocation2 + $0xd0] sm:$0xf] %v1895
    %2024 = vst [vmem:[#allocation2 + $0xd4] sm:$0xf] %v1896
    %2025 = vst [vmem:[#allocation2 + $0xd8] sm:$0xf] %v1897
    %2026 = vst [vmem:[#allocation2 + $0xdc] sm:$0xf] %v1898
    %2027 = vst [vmem:[#allocation2 + $0xe0] sm:$0xf] %v1899
    %2028 = vst [vmem:[#allocation2 + $0xe4] sm:$0xf] %v1900
    %2029 = vst [vmem:[#allocation2 + $0xe8] sm:$0xf] %v1901
    %2030 = vst [vmem:[#allocation2 + $0xec] sm:$0xf] %v1902
    %2031 = vst [vmem:[#allocation2 + $0xf0] sm:$0xf] %v1903
    %2032 = vst [vmem:[#allocation2 + $0xf4] sm:$0xf] %v1904
    %2033 = vst [vmem:[#allocation2 + $0xf8] sm:$0xf] %v1905
    %2034 = vst [vmem:[#allocation2 + $0xfc] sm:$0xf] %v1906
    %v2035 = vmin.f32 %v693, 20.0
    %v2036 = vmin.f32 %v696, 20.0
    %v2037 = vmin.f32 %v701, 20.0
    %v2038 = vmin.f32 %v704, 20.0
    %v2039 = vmin.f32 %v709, 20.0
    %v2040 = vmin.f32 %v712, 20.0
    %v2041 = vmin.f32 %v717, 20.0
    %v2042 = vmin.f32 %v720, 20.0
    %v2043 = vmin.f32 %v725, 20.0
    %v2044 = vmin.f32 %v728, 20.0
    %v2045 = vmin.f32 %v733, 20.0
    %v2046 = vmin.f32 %v736, 20.0
    %v2047 = vmin.f32 %v741, 20.0
    %v2048 = vmin.f32 %v744, 20.0
    %v2049 = vmin.f32 %v749, 20.0
    %v2050 = vmin.f32 %v752, 20.0
    %v2051 = vmin.f32 %v757, 20.0
    %v2052 = vmin.f32 %v760, 20.0
    %v2053 = vmin.f32 %v765, 20.0
    %v2054 = vmin.f32 %v768, 20.0
    %v2055 = vmin.f32 %v773, 20.0
    %v2056 = vmin.f32 %v776, 20.0
    %v2057 = vmin.f32 %v781, 20.0
    %v2058 = vmin.f32 %v784, 20.0
    %v2059 = vmin.f32 %v789, 20.0
    %v2060 = vmin.f32 %v792, 20.0
    %v2061 = vmin.f32 %v797, 20.0
    %v2062 = vmin.f32 %v800, 20.0
    %v2063 = vmin.f32 %v805, 20.0
    %v2064 = vmin.f32 %v808, 20.0
    %v2065 = vmin.f32 %v813, 20.0
    %v2066 = vmin.f32 %v816, 20.0
    %v2067 = vmin.f32 %v821, 20.0
    %v2068 = vmin.f32 %v824, 20.0
    %v2069 = vmin.f32 %v829, 20.0
    %v2070 = vmin.f32 %v832, 20.0
    %v2071 = vmin.f32 %v837, 20.0
    %v2072 = vmin.f32 %v840, 20.0
    %v2073 = vmin.f32 %v845, 20.0
    %v2074 = vmin.f32 %v848, 20.0
    %v2075 = vmin.f32 %v853, 20.0
    %v2076 = vmin.f32 %v856, 20.0
    %v2077 = vmin.f32 %v861, 20.0
    %v2078 = vmin.f32 %v864, 20.0
    %v2079 = vmin.f32 %v869, 20.0
    %v2080 = vmin.f32 %v872, 20.0
    %v2081 = vmin.f32 %v877, 20.0
    %v2082 = vmin.f32 %v880, 20.0
    %v2083 = vmin.f32 %v885, 20.0
    %v2084 = vmin.f32 %v888, 20.0
    %v2085 = vmin.f32 %v893, 20.0
    %v2086 = vmin.f32 %v896, 20.0
    %v2087 = vmin.f32 %v901, 20.0
    %v2088 = vmin.f32 %v904, 20.0
    %v2089 = vmin.f32 %v909, 20.0
    %v2090 = vmin.f32 %v912, 20.0
    %v2091 = vmin.f32 %v917, 20.0
    %v2092 = vmin.f32 %v920, 20.0
    %v2093 = vmin.f32 %v925, 20.0
    %v2094 = vmin.f32 %v928, 20.0
    %v2095 = vmin.f32 %v933, 20.0
    %v2096 = vmin.f32 %v936, 20.0
    %v2097 = vmin.f32 %v941, 20.0
    %v2098 = vmin.f32 %v944, 20.0
    %v2099 = vmul.f32 %v2035, 1.442695
    %v2100 = vpow.pop %v2099
    %v2101 = vmul.f32 %v2036, 1.442695
    %v2102 = vpow.pop %v2101
    %v2103 = vmul.f32 %v2037, 1.442695
    %v2104 = vpow.pop %v2103
    %v2105 = vmul.f32 %v2038, 1.442695
    %v2106 = vpow.pop %v2105
    %v2107 = vmul.f32 %v2039, 1.442695
    %v2108 = vpow.pop %v2107
    %v2109 = vmul.f32 %v2040, 1.442695
    %v2110 = vpow.pop %v2109
    %v2111 = vmul.f32 %v2041, 1.442695
    %v2112 = vpow.pop %v2111
    %v2113 = vmul.f32 %v2042, 1.442695
    %v2114 = vpow.pop %v2113
    %v2115 = vmul.f32 %v2043, 1.442695
    %v2116 = vpow.pop %v2115
    %v2117 = vmul.f32 %v2044, 1.442695
    %v2118 = vpow.pop %v2117
    %v2119 = vmul.f32 %v2045, 1.442695
    %v2120 = vpow.pop %v2119
    %v2121 = vmul.f32 %v2046, 1.442695
    %v2122 = vpow.pop %v2121
    %v2123 = vmul.f32 %v2047, 1.442695
    %v2124 = vpow.pop %v2123
    %v2125 = vmul.f32 %v2048, 1.442695
    %v2126 = vpow.pop %v2125
    %v2127 = vmul.f32 %v2049, 1.442695
    %v2128 = vpow.pop %v2127
    %v2129 = vmul.f32 %v2050, 1.442695
    %v2130 = vpow.pop %v2129
    %v2131 = vmul.f32 %v2051, 1.442695
    %v2132 = vpow.pop %v2131
    %v2133 = vmul.f32 %v2052, 1.442695
    %v2134 = vpow.pop %v2133
    %v2135 = vmul.f32 %v2053, 1.442695
    %v2136 = vpow.pop %v2135
    %v2137 = vmul.f32 %v2054, 1.442695
    %v2138 = vpow.pop %v2137
    %v2139 = vmul.f32 %v2055, 1.442695
    %v2140 = vpow.pop %v2139
    %v2141 = vmul.f32 %v2056, 1.442695
    %v2142 = vpow.pop %v2141
    %v2143 = vmul.f32 %v2057, 1.442695
    %v2144 = vpow.pop %v2143
    %v2145 = vmul.f32 %v2058, 1.442695
    %v2146 = vpow.pop %v2145
    %v2147 = vmul.f32 %v2059, 1.442695
    %v2148 = vpow.pop %v2147
    %v2149 = vmul.f32 %v2060, 1.442695
    %v2150 = vpow.pop %v2149
    %v2151 = vmul.f32 %v2061, 1.442695
    %v2152 = vpow.pop %v2151
    %v2153 = vmul.f32 %v2062, 1.442695
    %v2154 = vpow.pop %v2153
    %v2155 = vmul.f32 %v2063, 1.442695
    %v2156 = vpow.pop %v2155
    %v2157 = vmul.f32 %v2064, 1.442695
    %v2158 = vpow.pop %v2157
    %v2159 = vmul.f32 %v2065, 1.442695
    %v2160 = vpow.pop %v2159
    %v2161 = vmul.f32 %v2066, 1.442695
    %v2162 = vpow.pop %v2161
    %v2163 = vmul.f32 %v2067, 1.442695
    %v2164 = vpow.pop %v2163
    %v2165 = vmul.f32 %v2068, 1.442695
    %v2166 = vpow.pop %v2165
    %v2167 = vmul.f32 %v2069, 1.442695
    %v2168 = vpow.pop %v2167
    %v2169 = vmul.f32 %v2070, 1.442695
    %v2170 = vpow.pop %v2169
    %v2171 = vmul.f32 %v2071, 1.442695
    %v2172 = vpow.pop %v2171
    %v2173 = vmul.f32 %v2072, 1.442695
    %v2174 = vpow.pop %v2173
    %v2175 = vmul.f32 %v2073, 1.442695
    %v2176 = vpow.pop %v2175
    %v2177 = vmul.f32 %v2074, 1.442695
    %v2178 = vpow.pop %v2177
    %v2179 = vmul.f32 %v2075, 1.442695
    %v2180 = vpow.pop %v2179
    %v2181 = vmul.f32 %v2076, 1.442695
    %v2182 = vpow.pop %v2181
    %v2183 = vmul.f32 %v2077, 1.442695
    %v2184 = vpow.pop %v2183
    %v2185 = vmul.f32 %v2078, 1.442695
    %v2186 = vpow.pop %v2185
    %v2187 = vmul.f32 %v2079, 1.442695
    %v2188 = vpow.pop %v2187
    %v2189 = vmul.f32 %v2080, 1.442695
    %v2190 = vpow.pop %v2189
    %v2191 = vmul.f32 %v2081, 1.442695
    %v2192 = vpow.pop %v2191
    %v2193 = vmul.f32 %v2082, 1.442695
    %v2194 = vpow.pop %v2193
    %v2195 = vmul.f32 %v2083, 1.442695
    %v2196 = vpow.pop %v2195
    %v2197 = vmul.f32 %v2084, 1.442695
    %v2198 = vpow.pop %v2197
    %v2199 = vmul.f32 %v2085, 1.442695
    %v2200 = vpow.pop %v2199
    %v2201 = vmul.f32 %v2086, 1.442695
    %v2202 = vpow.pop %v2201
    %v2203 = vmul.f32 %v2087, 1.442695
    %v2204 = vpow.pop %v2203
    %v2205 = vmul.f32 %v2088, 1.442695
    %v2206 = vpow.pop %v2205
    %v2207 = vmul.f32 %v2089, 1.442695
    %v2208 = vpow.pop %v2207
    %v2209 = vmul.f32 %v2090, 1.442695
    %v2210 = vpow.pop %v2209
    %v2211 = vmul.f32 %v2091, 1.442695
    %v2212 = vpow.pop %v2211
    %v2213 = vmul.f32 %v2092, 1.442695
    %v2214 = vpow.pop %v2213
    %v2215 = vmul.f32 %v2093, 1.442695
    %v2216 = vpow.pop %v2215
    %v2217 = vmul.f32 %v2094, 1.442695
    %v2218 = vpow.pop %v2217
    %v2219 = vmul.f32 %v2095, 1.442695
    %v2220 = vpow.pop %v2219
    %v2221 = vmul.f32 %v2096, 1.442695
    %v2222 = vpow.pop %v2221
    %v2223 = vmul.f32 %v2097, 1.442695
    %v2224 = vpow.pop %v2223
    %v2225 = vmul.f32 %v2098, 1.442695
    %v2226 = vpow.pop %v2225
    %v2227 = vadd.f32 %v2100, 1.0
    %v2228 = vadd.f32 %v2102, 1.0
    %v2229 = vadd.f32 %v2104, 1.0
    %v2230 = vadd.f32 %v2106, 1.0
    %v2231 = vadd.f32 %v2108, 1.0
    %v2232 = vadd.f32 %v2110, 1.0
    %v2233 = vadd.f32 %v2112, 1.0
    %v2234 = vadd.f32 %v2114, 1.0
    %v2235 = vadd.f32 %v2116, 1.0
    %v2236 = vadd.f32 %v2118, 1.0
    %v2237 = vadd.f32 %v2120, 1.0
    %v2238 = vadd.f32 %v2122, 1.0
    %v2239 = vadd.f32 %v2124, 1.0
    %v2240 = vadd.f32 %v2126, 1.0
    %v2241 = vadd.f32 %v2128, 1.0
    %v2242 = vadd.f32 %v2130, 1.0
    %v2243 = vadd.f32 %v2132, 1.0
    %v2244 = vadd.f32 %v2134, 1.0
    %v2245 = vadd.f32 %v2136, 1.0
    %v2246 = vadd.f32 %v2138, 1.0
    %v2247 = vadd.f32 %v2140, 1.0
    %v2248 = vadd.f32 %v2142, 1.0
    %v2249 = vadd.f32 %v2144, 1.0
    %v2250 = vadd.f32 %v2146, 1.0
    %v2251 = vadd.f32 %v2148, 1.0
    %v2252 = vadd.f32 %v2150, 1.0
    %v2253 = vadd.f32 %v2152, 1.0
    %v2254 = vadd.f32 %v2154, 1.0
    %v2255 = vadd.f32 %v2156, 1.0
    %v2256 = vadd.f32 %v2158, 1.0
    %v2257 = vadd.f32 %v2160, 1.0
    %v2258 = vadd.f32 %v2162, 1.0
    %v2259 = vadd.f32 %v2164, 1.0
    %v2260 = vadd.f32 %v2166, 1.0
    %v2261 = vadd.f32 %v2168, 1.0
    %v2262 = vadd.f32 %v2170, 1.0
    %v2263 = vadd.f32 %v2172, 1.0
    %v2264 = vadd.f32 %v2174, 1.0
    %v2265 = vadd.f32 %v2176, 1.0
    %v2266 = vadd.f32 %v2178, 1.0
    %v2267 = vadd.f32 %v2180, 1.0
    %v2268 = vadd.f32 %v2182, 1.0
    %v2269 = vadd.f32 %v2184, 1.0
    %v2270 = vadd.f32 %v2186, 1.0
    %v2271 = vadd.f32 %v2188, 1.0
    %v2272 = vadd.f32 %v2190, 1.0
    %v2273 = vadd.f32 %v2192, 1.0
    %v2274 = vadd.f32 %v2194, 1.0
    %v2275 = vadd.f32 %v2196, 1.0
    %v2276 = vadd.f32 %v2198, 1.0
    %v2277 = vadd.f32 %v2200, 1.0
    %v2278 = vadd.f32 %v2202, 1.0
    %v2279 = vadd.f32 %v2204, 1.0
    %v2280 = vadd.f32 %v2206, 1.0
    %v2281 = vadd.f32 %v2208, 1.0
    %v2282 = vadd.f32 %v2210, 1.0
    %v2283 = vadd.f32 %v2212, 1.0
    %v2284 = vadd.f32 %v2214, 1.0
    %v2285 = vadd.f32 %v2216, 1.0
    %v2286 = vadd.f32 %v2218, 1.0
    %v2287 = vadd.f32 %v2220, 1.0
    %v2288 = vadd.f32 %v2222, 1.0
    %v2289 = vadd.f32 %v2224, 1.0
    %v2290 = vadd.f32 %v2226, 1.0
    %v2291 = vmul.f32 %v2227, %v2227
    %v2292 = vmul.f32 %v2228, %v2228
    %v2293 = vmul.f32 %v2229, %v2229
    %v2294 = vmul.f32 %v2230, %v2230
    %v2295 = vmul.f32 %v2231, %v2231
    %v2296 = vmul.f32 %v2232, %v2232
    %v2297 = vmul.f32 %v2233, %v2233
    %v2298 = vmul.f32 %v2234, %v2234
    %v2299 = vmul.f32 %v2235, %v2235
    %v2300 = vmul.f32 %v2236, %v2236
    %v2301 = vmul.f32 %v2237, %v2237
    %v2302 = vmul.f32 %v2238, %v2238
    %v2303 = vmul.f32 %v2239, %v2239
    %v2304 = vmul.f32 %v2240, %v2240
    %v2305 = vmul.f32 %v2241, %v2241
    %v2306 = vmul.f32 %v2242, %v2242
    %v2307 = vmul.f32 %v2243, %v2243
    %v2308 = vmul.f32 %v2244, %v2244
    %v2309 = vmul.f32 %v2245, %v2245
    %v2310 = vmul.f32 %v2246, %v2246
    %v2311 = vmul.f32 %v2247, %v2247
    %v2312 = vmul.f32 %v2248, %v2248
    %v2313 = vmul.f32 %v2249, %v2249
    %v2314 = vmul.f32 %v2250, %v2250
    %v2315 = vmul.f32 %v2251, %v2251
    %v2316 = vmul.f32 %v2252, %v2252
    %v2317 = vmul.f32 %v2253, %v2253
    %v2318 = vmul.f32 %v2254, %v2254
    %v2319 = vmul.f32 %v2255, %v2255
    %v2320 = vmul.f32 %v2256, %v2256
    %v2321 = vmul.f32 %v2257, %v2257
    %v2322 = vmul.f32 %v2258, %v2258
    %v2323 = vmul.f32 %v2259, %v2259
    %v2324 = vmul.f32 %v2260, %v2260
    %v2325 = vmul.f32 %v2261, %v2261
    %v2326 = vmul.f32 %v2262, %v2262
    %v2327 = vmul.f32 %v2263, %v2263
    %v2328 = vmul.f32 %v2264, %v2264
    %v2329 = vmul.f32 %v2265, %v2265
    %v2330 = vmul.f32 %v2266, %v2266
    %v2331 = vmul.f32 %v2267, %v2267
    %v2332 = vmul.f32 %v2268, %v2268
    %v2333 = vmul.f32 %v2269, %v2269
    %v2334 = vmul.f32 %v2270, %v2270
    %v2335 = vmul.f32 %v2271, %v2271
    %v2336 = vmul.f32 %v2272, %v2272
    %v2337 = vmul.f32 %v2273, %v2273
    %v2338 = vmul.f32 %v2274, %v2274
    %v2339 = vmul.f32 %v2275, %v2275
    %v2340 = vmul.f32 %v2276, %v2276
    %v2341 = vmul.f32 %v2277, %v2277
    %v2342 = vmul.f32 %v2278, %v2278
    %v2343 = vmul.f32 %v2279, %v2279
    %v2344 = vmul.f32 %v2280, %v2280
    %v2345 = vmul.f32 %v2281, %v2281
    %v2346 = vmul.f32 %v2282, %v2282
    %v2347 = vmul.f32 %v2283, %v2283
    %v2348 = vmul.f32 %v2284, %v2284
    %v2349 = vmul.f32 %v2285, %v2285
    %v2350 = vmul.f32 %v2286, %v2286
    %v2351 = vmul.f32 %v2287, %v2287
    %v2352 = vmul.f32 %v2288, %v2288
    %v2353 = vmul.f32 %v2289, %v2289
    %v2354 = vmul.f32 %v2290, %v2290
    %v2355 = vsub.f32 %v2291, 1.0
    %v2356 = vsub.f32 %v2292, 1.0
    %v2357 = vsub.f32 %v2293, 1.0
    %v2358 = vsub.f32 %v2294, 1.0
    %v2359 = vsub.f32 %v2295, 1.0
    %v2360 = vsub.f32 %v2296, 1.0
    %v2361 = vsub.f32 %v2297, 1.0
    %v2362 = vsub.f32 %v2298, 1.0
    %v2363 = vsub.f32 %v2299, 1.0
    %v2364 = vsub.f32 %v2300, 1.0
    %v2365 = vsub.f32 %v2301, 1.0
    %v2366 = vsub.f32 %v2302, 1.0
    %v2367 = vsub.f32 %v2303, 1.0
    %v2368 = vsub.f32 %v2304, 1.0
    %v2369 = vsub.f32 %v2305, 1.0
    %v2370 = vsub.f32 %v2306, 1.0
    %v2371 = vsub.f32 %v2307, 1.0
    %v2372 = vsub.f32 %v2308, 1.0
    %v2373 = vsub.f32 %v2309, 1.0
    %v2374 = vsub.f32 %v2310, 1.0
    %v2375 = vsub.f32 %v2311, 1.0
    %v2376 = vsub.f32 %v2312, 1.0
    %v2377 = vsub.f32 %v2313, 1.0
    %v2378 = vsub.f32 %v2314, 1.0
    %v2379 = vsub.f32 %v2315, 1.0
    %v2380 = vsub.f32 %v2316, 1.0
    %v2381 = vsub.f32 %v2317, 1.0
    %v2382 = vsub.f32 %v2318, 1.0
    %v2383 = vsub.f32 %v2319, 1.0
    %v2384 = vsub.f32 %v2320, 1.0
    %v2385 = vsub.f32 %v2321, 1.0
    %v2386 = vsub.f32 %v2322, 1.0
    %v2387 = vsub.f32 %v2323, 1.0
    %v2388 = vsub.f32 %v2324, 1.0
    %v2389 = vsub.f32 %v2325, 1.0
    %v2390 = vsub.f32 %v2326, 1.0
    %v2391 = vsub.f32 %v2327, 1.0
    %v2392 = vsub.f32 %v2328, 1.0
    %v2393 = vsub.f32 %v2329, 1.0
    %v2394 = vsub.f32 %v2330, 1.0
    %v2395 = vsub.f32 %v2331, 1.0
    %v2396 = vsub.f32 %v2332, 1.0
    %v2397 = vsub.f32 %v2333, 1.0
    %v2398 = vsub.f32 %v2334, 1.0
    %v2399 = vsub.f32 %v2335, 1.0
    %v2400 = vsub.f32 %v2336, 1.0
    %v2401 = vsub.f32 %v2337, 1.0
    %v2402 = vsub.f32 %v2338, 1.0
    %v2403 = vsub.f32 %v2339, 1.0
    %v2404 = vsub.f32 %v2340, 1.0
    %v2405 = vsub.f32 %v2341, 1.0
    %v2406 = vsub.f32 %v2342, 1.0
    %v2407 = vsub.f32 %v2343, 1.0
    %v2408 = vsub.f32 %v2344, 1.0
    %v2409 = vsub.f32 %v2345, 1.0
    %v2410 = vsub.f32 %v2346, 1.0
    %v2411 = vsub.f32 %v2347, 1.0
    %v2412 = vsub.f32 %v2348, 1.0
    %v2413 = vsub.f32 %v2349, 1.0
    %v2414 = vsub.f32 %v2350, 1.0
    %v2415 = vsub.f32 %v2351, 1.0
    %v2416 = vsub.f32 %v2352, 1.0
    %v2417 = vsub.f32 %v2353, 1.0
    %v2418 = vsub.f32 %v2354, 1.0
    %v2419 = vadd.f32 %v2291, 1.0
    %v2420 = vadd.f32 %v2292, 1.0
    %v2421 = vadd.f32 %v2293, 1.0
    %v2422 = vadd.f32 %v2294, 1.0
    %v2423 = vadd.f32 %v2295, 1.0
    %v2424 = vadd.f32 %v2296, 1.0
    %v2425 = vadd.f32 %v2297, 1.0
    %v2426 = vadd.f32 %v2298, 1.0
    %v2427 = vadd.f32 %v2299, 1.0
    %v2428 = vadd.f32 %v2300, 1.0
    %v2429 = vadd.f32 %v2301, 1.0
    %v2430 = vadd.f32 %v2302, 1.0
    %v2431 = vadd.f32 %v2303, 1.0
    %v2432 = vadd.f32 %v2304, 1.0
    %v2433 = vadd.f32 %v2305, 1.0
    %v2434 = vadd.f32 %v2306, 1.0
    %v2435 = vadd.f32 %v2307, 1.0
    %v2436 = vadd.f32 %v2308, 1.0
    %v2437 = vadd.f32 %v2309, 1.0
    %v2438 = vadd.f32 %v2310, 1.0
    %v2439 = vadd.f32 %v2311, 1.0
    %v2440 = vadd.f32 %v2312, 1.0
    %v2441 = vadd.f32 %v2313, 1.0
    %v2442 = vadd.f32 %v2314, 1.0
    %v2443 = vadd.f32 %v2315, 1.0
    %v2444 = vadd.f32 %v2316, 1.0
    %v2445 = vadd.f32 %v2317, 1.0
    %v2446 = vadd.f32 %v2318, 1.0
    %v2447 = vadd.f32 %v2319, 1.0
    %v2448 = vadd.f32 %v2320, 1.0
    %v2449 = vadd.f32 %v2321, 1.0
    %v2450 = vadd.f32 %v2322, 1.0
    %v2451 = vadd.f32 %v2323, 1.0
    %v2452 = vadd.f32 %v2324, 1.0
    %v2453 = vadd.f32 %v2325, 1.0
    %v2454 = vadd.f32 %v2326, 1.0
    %v2455 = vadd.f32 %v2327, 1.0
    %v2456 = vadd.f32 %v2328, 1.0
    %v2457 = vadd.f32 %v2329, 1.0
    %v2458 = vadd.f32 %v2330, 1.0
    %v2459 = vadd.f32 %v2331, 1.0
    %v2460 = vadd.f32 %v2332, 1.0
    %v2461 = vadd.f32 %v2333, 1.0
    %v2462 = vadd.f32 %v2334, 1.0
    %v2463 = vadd.f32 %v2335, 1.0
    %v2464 = vadd.f32 %v2336, 1.0
    %v2465 = vadd.f32 %v2337, 1.0
    %v2466 = vadd.f32 %v2338, 1.0
    %v2467 = vadd.f32 %v2339, 1.0
    %v2468 = vadd.f32 %v2340, 1.0
    %v2469 = vadd.f32 %v2341, 1.0
    %v2470 = vadd.f32 %v2342, 1.0
    %v2471 = vadd.f32 %v2343, 1.0
    %v2472 = vadd.f32 %v2344, 1.0
    %v2473 = vadd.f32 %v2345, 1.0
    %v2474 = vadd.f32 %v2346, 1.0
    %v2475 = vadd.f32 %v2347, 1.0
    %v2476 = vadd.f32 %v2348, 1.0
    %v2477 = vadd.f32 %v2349, 1.0
    %v2478 = vadd.f32 %v2350, 1.0
    %v2479 = vadd.f32 %v2351, 1.0
    %v2480 = vadd.f32 %v2352, 1.0
    %v2481 = vadd.f32 %v2353, 1.0
    %v2482 = vadd.f32 %v2354, 1.0
    %v2483 = vrcp.pop %v2419
    %v2484 = vrcp.pop %v2420
    %v2485 = vrcp.pop %v2421
    %v2486 = vrcp.pop %v2422
    %v2487 = vrcp.pop %v2423
    %v2488 = vrcp.pop %v2424
    %v2489 = vrcp.pop %v2425
    %v2490 = vrcp.pop %v2426
    %v2491 = vrcp.pop %v2427
    %v2492 = vrcp.pop %v2428
    %v2493 = vrcp.pop %v2429
    %v2494 = vrcp.pop %v2430
    %v2495 = vrcp.pop %v2431
    %v2496 = vrcp.pop %v2432
    %v2497 = vrcp.pop %v2433
    %v2498 = vrcp.pop %v2434
    %v2499 = vrcp.pop %v2435
    %v2500 = vrcp.pop %v2436
    %v2501 = vrcp.pop %v2437
    %v2502 = vrcp.pop %v2438
    %v2503 = vrcp.pop %v2439
    %v2504 = vrcp.pop %v2440
    %v2505 = vrcp.pop %v2441
    %v2506 = vrcp.pop %v2442
    %v2507 = vrcp.pop %v2443
    %v2508 = vrcp.pop %v2444
    %v2509 = vrcp.pop %v2445
    %v2510 = vrcp.pop %v2446
    %v2511 = vrcp.pop %v2447
    %v2512 = vrcp.pop %v2448
    %v2513 = vrcp.pop %v2449
    %v2514 = vrcp.pop %v2450
    %v2515 = vrcp.pop %v2451
    %v2516 = vrcp.pop %v2452
    %v2517 = vrcp.pop %v2453
    %v2518 = vrcp.pop %v2454
    %v2519 = vrcp.pop %v2455
    %v2520 = vrcp.pop %v2456
    %v2521 = vrcp.pop %v2457
    %v2522 = vrcp.pop %v2458
    %v2523 = vrcp.pop %v2459
    %v2524 = vrcp.pop %v2460
    %v2525 = vrcp.pop %v2461
    %v2526 = vrcp.pop %v2462
    %v2527 = vrcp.pop %v2463
    %v2528 = vrcp.pop %v2464
    %v2529 = vrcp.pop %v2465
    %v2530 = vrcp.pop %v2466
    %v2531 = vrcp.pop %v2467
    %v2532 = vrcp.pop %v2468
    %v2533 = vrcp.pop %v2469
    %v2534 = vrcp.pop %v2470
    %v2535 = vrcp.pop %v2471
    %v2536 = vrcp.pop %v2472
    %v2537 = vrcp.pop %v2473
    %v2538 = vrcp.pop %v2474
    %v2539 = vrcp.pop %v2475
    %v2540 = vrcp.pop %v2476
    %v2541 = vrcp.pop %v2477
    %v2542 = vrcp.pop %v2478
    %v2543 = vrcp.pop %v2479
    %v2544 = vrcp.pop %v2480
    %v2545 = vrcp.pop %v2481
    %v2546 = vrcp.pop %v2482
    %v2547 = vmul.f32 %v2355, %v2483
    %v2548 = vmul.f32 %v2356, %v2484
    %v2549 = vmul.f32 %v2357, %v2485
    %v2550 = vmul.f32 %v2358, %v2486
    %v2551 = vmul.f32 %v2359, %v2487
    %v2552 = vmul.f32 %v2360, %v2488
    %v2553 = vmul.f32 %v2361, %v2489
    %v2554 = vmul.f32 %v2362, %v2490
    %v2555 = vmul.f32 %v2363, %v2491
    %v2556 = vmul.f32 %v2364, %v2492
    %v2557 = vmul.f32 %v2365, %v2493
    %v2558 = vmul.f32 %v2366, %v2494
    %v2559 = vmul.f32 %v2367, %v2495
    %v2560 = vmul.f32 %v2368, %v2496
    %v2561 = vmul.f32 %v2369, %v2497
    %v2562 = vmul.f32 %v2370, %v2498
    %v2563 = vmul.f32 %v2371, %v2499
    %v2564 = vmul.f32 %v2372, %v2500
    %v2565 = vmul.f32 %v2373, %v2501
    %v2566 = vmul.f32 %v2374, %v2502
    %v2567 = vmul.f32 %v2375, %v2503
    %v2568 = vmul.f32 %v2376, %v2504
    %v2569 = vmul.f32 %v2377, %v2505
    %v2570 = vmul.f32 %v2378, %v2506
    %v2571 = vmul.f32 %v2379, %v2507
    %v2572 = vmul.f32 %v2380, %v2508
    %v2573 = vmul.f32 %v2381, %v2509
    %v2574 = vmul.f32 %v2382, %v2510
    %v2575 = vmul.f32 %v2383, %v2511
    %v2576 = vmul.f32 %v2384, %v2512
    %v2577 = vmul.f32 %v2385, %v2513
    %v2578 = vmul.f32 %v2386, %v2514
    %v2579 = vmul.f32 %v2387, %v2515
    %v2580 = vmul.f32 %v2388, %v2516
    %v2581 = vmul.f32 %v2389, %v2517
    %v2582 = vmul.f32 %v2390, %v2518
    %v2583 = vmul.f32 %v2391, %v2519
    %v2584 = vmul.f32 %v2392, %v2520
    %v2585 = vmul.f32 %v2393, %v2521
    %v2586 = vmul.f32 %v2394, %v2522
    %v2587 = vmul.f32 %v2395, %v2523
    %v2588 = vmul.f32 %v2396, %v2524
    %v2589 = vmul.f32 %v2397, %v2525
    %v2590 = vmul.f32 %v2398, %v2526
    %v2591 = vmul.f32 %v2399, %v2527
    %v2592 = vmul.f32 %v2400, %v2528
    %v2593 = vmul.f32 %v2401, %v2529
    %v2594 = vmul.f32 %v2402, %v2530
    %v2595 = vmul.f32 %v2403, %v2531
    %v2596 = vmul.f32 %v2404, %v2532
    %v2597 = vmul.f32 %v2405, %v2533
    %v2598 = vmul.f32 %v2406, %v2534
    %v2599 = vmul.f32 %v2407, %v2535
    %v2600 = vmul.f32 %v2408, %v2536
    %v2601 = vmul.f32 %v2409, %v2537
    %v2602 = vmul.f32 %v2410, %v2538
    %v2603 = vmul.f32 %v2411, %v2539
    %v2604 = vmul.f32 %v2412, %v2540
    %v2605 = vmul.f32 %v2413, %v2541
    %v2606 = vmul.f32 %v2414, %v2542
    %v2607 = vmul.f32 %v2415, %v2543
    %v2608 = vmul.f32 %v2416, %v2544
    %v2609 = vmul.f32 %v2417, %v2545
    %v2610 = vmul.f32 %v2418, %v2546
    %vm2611 = vcmp.gt.f32.partialorder %v693, 20.0
    %vm2612 = vcmp.gt.f32.partialorder %v696, 20.0
    %vm2613 = vcmp.gt.f32.partialorder %v701, 20.0
    %vm2614 = vcmp.gt.f32.partialorder %v704, 20.0
    %vm2615 = vcmp.gt.f32.partialorder %v709, 20.0
    %vm2616 = vcmp.gt.f32.partialorder %v712, 20.0
    %vm2617 = vcmp.gt.f32.partialorder %v717, 20.0
    %vm2618 = vcmp.gt.f32.partialorder %v720, 20.0
    %vm2619 = vcmp.gt.f32.partialorder %v725, 20.0
    %vm2620 = vcmp.gt.f32.partialorder %v728, 20.0
    %vm2621 = vcmp.gt.f32.partialorder %v733, 20.0
    %vm2622 = vcmp.gt.f32.partialorder %v736, 20.0
    %vm2623 = vcmp.gt.f32.partialorder %v741, 20.0
    %vm2624 = vcmp.gt.f32.partialorder %v744, 20.0
    %vm2625 = vcmp.gt.f32.partialorder %v749, 20.0
    %vm2626 = vcmp.gt.f32.partialorder %v752, 20.0
    %vm2627 = vcmp.gt.f32.partialorder %v757, 20.0
    %vm2628 = vcmp.gt.f32.partialorder %v760, 20.0
    %vm2629 = vcmp.gt.f32.partialorder %v765, 20.0
    %vm2630 = vcmp.gt.f32.partialorder %v768, 20.0
    %vm2631 = vcmp.gt.f32.partialorder %v773, 20.0
    %vm2632 = vcmp.gt.f32.partialorder %v776, 20.0
    %vm2633 = vcmp.gt.f32.partialorder %v781, 20.0
    %vm2634 = vcmp.gt.f32.partialorder %v784, 20.0
    %vm2635 = vcmp.gt.f32.partialorder %v789, 20.0
    %vm2636 = vcmp.gt.f32.partialorder %v792, 20.0
    %vm2637 = vcmp.gt.f32.partialorder %v797, 20.0
    %vm2638 = vcmp.gt.f32.partialorder %v800, 20.0
    %vm2639 = vcmp.gt.f32.partialorder %v805, 20.0
    %vm2640 = vcmp.gt.f32.partialorder %v808, 20.0
    %vm2641 = vcmp.gt.f32.partialorder %v813, 20.0
    %vm2642 = vcmp.gt.f32.partialorder %v816, 20.0
    %vm2643 = vcmp.gt.f32.partialorder %v821, 20.0
    %vm2644 = vcmp.gt.f32.partialorder %v824, 20.0
    %vm2645 = vcmp.gt.f32.partialorder %v829, 20.0
    %vm2646 = vcmp.gt.f32.partialorder %v832, 20.0
    %vm2647 = vcmp.gt.f32.partialorder %v837, 20.0
    %vm2648 = vcmp.gt.f32.partialorder %v840, 20.0
    %vm2649 = vcmp.gt.f32.partialorder %v845, 20.0
    %vm2650 = vcmp.gt.f32.partialorder %v848, 20.0
    %vm2651 = vcmp.gt.f32.partialorder %v853, 20.0
    %vm2652 = vcmp.gt.f32.partialorder %v856, 20.0
    %vm2653 = vcmp.gt.f32.partialorder %v861, 20.0
    %vm2654 = vcmp.gt.f32.partialorder %v864, 20.0
    %vm2655 = vcmp.gt.f32.partialorder %v869, 20.0
    %vm2656 = vcmp.gt.f32.partialorder %v872, 20.0
    %vm2657 = vcmp.gt.f32.partialorder %v877, 20.0
    %vm2658 = vcmp.gt.f32.partialorder %v880, 20.0
    %vm2659 = vcmp.gt.f32.partialorder %v885, 20.0
    %vm2660 = vcmp.gt.f32.partialorder %v888, 20.0
    %vm2661 = vcmp.gt.f32.partialorder %v893, 20.0
    %vm2662 = vcmp.gt.f32.partialorder %v896, 20.0
    %vm2663 = vcmp.gt.f32.partialorder %v901, 20.0
    %vm2664 = vcmp.gt.f32.partialorder %v904, 20.0
    %vm2665 = vcmp.gt.f32.partialorder %v909, 20.0
    %vm2666 = vcmp.gt.f32.partialorder %v912, 20.0
    %vm2667 = vcmp.gt.f32.partialorder %v917, 20.0
    %vm2668 = vcmp.gt.f32.partialorder %v920, 20.0
    %vm2669 = vcmp.gt.f32.partialorder %v925, 20.0
    %vm2670 = vcmp.gt.f32.partialorder %v928, 20.0
    %vm2671 = vcmp.gt.f32.partialorder %v933, 20.0
    %vm2672 = vcmp.gt.f32.partialorder %v936, 20.0
    %vm2673 = vcmp.gt.f32.partialorder %v941, 20.0
    %vm2674 = vcmp.gt.f32.partialorder %v944, 20.0
    %v2675 = vmul.f32 %v693, %v2547
    %v2676 = vmul.f32 %v696, %v2548
    %v2677 = vmul.f32 %v701, %v2549
    %v2678 = vmul.f32 %v704, %v2550
    %v2679 = vmul.f32 %v709, %v2551
    %v2680 = vmul.f32 %v712, %v2552
    %v2681 = vmul.f32 %v717, %v2553
    %v2682 = vmul.f32 %v720, %v2554
    %v2683 = vmul.f32 %v725, %v2555
    %v2684 = vmul.f32 %v728, %v2556
    %v2685 = vmul.f32 %v733, %v2557
    %v2686 = vmul.f32 %v736, %v2558
    %v2687 = vmul.f32 %v741, %v2559
    %v2688 = vmul.f32 %v744, %v2560
    %v2689 = vmul.f32 %v749, %v2561
    %v2690 = vmul.f32 %v752, %v2562
    %v2691 = vmul.f32 %v757, %v2563
    %v2692 = vmul.f32 %v760, %v2564
    %v2693 = vmul.f32 %v765, %v2565
    %v2694 = vmul.f32 %v768, %v2566
    %v2695 = vmul.f32 %v773, %v2567
    %v2696 = vmul.f32 %v776, %v2568
    %v2697 = vmul.f32 %v781, %v2569
    %v2698 = vmul.f32 %v784, %v2570
    %v2699 = vmul.f32 %v789, %v2571
    %v2700 = vmul.f32 %v792, %v2572
    %v2701 = vmul.f32 %v797, %v2573
    %v2702 = vmul.f32 %v800, %v2574
    %v2703 = vmul.f32 %v805, %v2575
    %v2704 = vmul.f32 %v808, %v2576
    %v2705 = vmul.f32 %v813, %v2577
    %v2706 = vmul.f32 %v816, %v2578
    %v2707 = vmul.f32 %v821, %v2579
    %v2708 = vmul.f32 %v824, %v2580
    %v2709 = vmul.f32 %v829, %v2581
    %v2710 = vmul.f32 %v832, %v2582
    %v2711 = vmul.f32 %v837, %v2583
    %v2712 = vmul.f32 %v840, %v2584
    %v2713 = vmul.f32 %v845, %v2585
    %v2714 = vmul.f32 %v848, %v2586
    %v2715 = vmul.f32 %v853, %v2587
    %v2716 = vmul.f32 %v856, %v2588
    %v2717 = vmul.f32 %v861, %v2589
    %v2718 = vmul.f32 %v864, %v2590
    %v2719 = vmul.f32 %v869, %v2591
    %v2720 = vmul.f32 %v872, %v2592
    %v2721 = vmul.f32 %v877, %v2593
    %v2722 = vmul.f32 %v880, %v2594
    %v2723 = vmul.f32 %v885, %v2595
    %v2724 = vmul.f32 %v888, %v2596
    %v2725 = vmul.f32 %v893, %v2597
    %v2726 = vmul.f32 %v896, %v2598
    %v2727 = vmul.f32 %v901, %v2599
    %v2728 = vmul.f32 %v904, %v2600
    %v2729 = vmul.f32 %v909, %v2601
    %v2730 = vmul.f32 %v912, %v2602
    %v2731 = vmul.f32 %v917, %v2603
    %v2732 = vmul.f32 %v920, %v2604
    %v2733 = vmul.f32 %v925, %v2605
    %v2734 = vmul.f32 %v928, %v2606
    %v2735 = vmul.f32 %v933, %v2607
    %v2736 = vmul.f32 %v936, %v2608
    %v2737 = vmul.f32 %v941, %v2609
    %v2738 = vmul.f32 %v944, %v2610
    %v2739 = vsel %vm2611, %v693, %v2675
    %v2740 = vsel %vm2612, %v696, %v2676
    %v2741 = vsel %vm2613, %v701, %v2677
    %v2742 = vsel %vm2614, %v704, %v2678
    %v2743 = vsel %vm2615, %v709, %v2679
    %v2744 = vsel %vm2616, %v712, %v2680
    %v2745 = vsel %vm2617, %v717, %v2681
    %v2746 = vsel %vm2618, %v720, %v2682
    %v2747 = vsel %vm2619, %v725, %v2683
    %v2748 = vsel %vm2620, %v728, %v2684
    %v2749 = vsel %vm2621, %v733, %v2685
    %v2750 = vsel %vm2622, %v736, %v2686
    %v2751 = vsel %vm2623, %v741, %v2687
    %v2752 = vsel %vm2624, %v744, %v2688
    %v2753 = vsel %vm2625, %v749, %v2689
    %v2754 = vsel %vm2626, %v752, %v2690
    %v2755 = vsel %vm2627, %v757, %v2691
    %v2756 = vsel %vm2628, %v760, %v2692
    %v2757 = vsel %vm2629, %v765, %v2693
    %v2758 = vsel %vm2630, %v768, %v2694
    %v2759 = vsel %vm2631, %v773, %v2695
    %v2760 = vsel %vm2632, %v776, %v2696
    %v2761 = vsel %vm2633, %v781, %v2697
    %v2762 = vsel %vm2634, %v784, %v2698
    %v2763 = vsel %vm2635, %v789, %v2699
    %v2764 = vsel %vm2636, %v792, %v2700
    %v2765 = vsel %vm2637, %v797, %v2701
    %v2766 = vsel %vm2638, %v800, %v2702
    %v2767 = vsel %vm2639, %v805, %v2703
    %v2768 = vsel %vm2640, %v808, %v2704
    %v2769 = vsel %vm2641, %v813, %v2705
    %v2770 = vsel %vm2642, %v816, %v2706
    %v2771 = vsel %vm2643, %v821, %v2707
    %v2772 = vsel %vm2644, %v824, %v2708
    %v2773 = vsel %vm2645, %v829, %v2709
    %v2774 = vsel %vm2646, %v832, %v2710
    %v2775 = vsel %vm2647, %v837, %v2711
    %v2776 = vsel %vm2648, %v840, %v2712
    %v2777 = vsel %vm2649, %v845, %v2713
    %v2778 = vsel %vm2650, %v848, %v2714
    %v2779 = vsel %vm2651, %v853, %v2715
    %v2780 = vsel %vm2652, %v856, %v2716
    %v2781 = vsel %vm2653, %v861, %v2717
    %v2782 = vsel %vm2654, %v864, %v2718
    %v2783 = vsel %vm2655, %v869, %v2719
    %v2784 = vsel %vm2656, %v872, %v2720
    %v2785 = vsel %vm2657, %v877, %v2721
    %v2786 = vsel %vm2658, %v880, %v2722
    %v2787 = vsel %vm2659, %v885, %v2723
    %v2788 = vsel %vm2660, %v888, %v2724
    %v2789 = vsel %vm2661, %v893, %v2725
    %v2790 = vsel %vm2662, %v896, %v2726
    %v2791 = vsel %vm2663, %v901, %v2727
    %v2792 = vsel %vm2664, %v904, %v2728
    %v2793 = vsel %vm2665, %v909, %v2729
    %v2794 = vsel %vm2666, %v912, %v2730
    %v2795 = vsel %vm2667, %v917, %v2731
    %v2796 = vsel %vm2668, %v920, %v2732
    %v2797 = vsel %vm2669, %v925, %v2733
    %v2798 = vsel %vm2670, %v928, %v2734
    %v2799 = vsel %vm2671, %v933, %v2735
    %v2800 = vsel %vm2672, %v936, %v2736
    %v2801 = vsel %vm2673, %v941, %v2737
    %v2802 = vsel %vm2674, %v944, %v2738
    %v2803 = vpack.c.bf16 %v2740, %v2739
    %v2804 = vpack.c.bf16 %v2742, %v2741
    %v2805 = vpack.c.bf16 %v2744, %v2743
    %v2806 = vpack.c.bf16 %v2746, %v2745
    %v2807 = vpack.c.bf16 %v2748, %v2747
    %v2808 = vpack.c.bf16 %v2750, %v2749
    %v2809 = vpack.c.bf16 %v2752, %v2751
    %v2810 = vpack.c.bf16 %v2754, %v2753
    %v2811 = vpack.c.bf16 %v2756, %v2755
    %v2812 = vpack.c.bf16 %v2758, %v2757
    %v2813 = vpack.c.bf16 %v2760, %v2759
    %v2814 = vpack.c.bf16 %v2762, %v2761
    %v2815 = vpack.c.bf16 %v2764, %v2763
    %v2816 = vpack.c.bf16 %v2766, %v2765
    %v2817 = vpack.c.bf16 %v2768, %v2767
    %v2818 = vpack.c.bf16 %v2770, %v2769
    %v2819 = vpack.c.bf16 %v2772, %v2771
    %v2820 = vpack.c.bf16 %v2774, %v2773
    %v2821 = vpack.c.bf16 %v2776, %v2775
    %v2822 = vpack.c.bf16 %v2778, %v2777
    %v2823 = vpack.c.bf16 %v2780, %v2779
    %v2824 = vpack.c.bf16 %v2782, %v2781
    %v2825 = vpack.c.bf16 %v2784, %v2783
    %v2826 = vpack.c.bf16 %v2786, %v2785
    %v2827 = vpack.c.bf16 %v2788, %v2787
    %v2828 = vpack.c.bf16 %v2790, %v2789
    %v2829 = vpack.c.bf16 %v2792, %v2791
    %v2830 = vpack.c.bf16 %v2794, %v2793
    %v2831 = vpack.c.bf16 %v2796, %v2795
    %v2832 = vpack.c.bf16 %v2798, %v2797
    %v2833 = vpack.c.bf16 %v2800, %v2799
    %v2834 = vpack.c.bf16 %v2802, %v2801
    %v2867 = vunpack.c.l.b16 %v2803
    %v2868 = vunpack.c.h.b16 %v2803
    %v2869 = vunpack.c.l.b16 %v2804
    %v2870 = vunpack.c.h.b16 %v2804
    %v2871 = vunpack.c.l.b16 %v2805
    %v2872 = vunpack.c.h.b16 %v2805
    %v2873 = vunpack.c.l.b16 %v2806
    %v2874 = vunpack.c.h.b16 %v2806
    %v2875 = vunpack.c.l.b16 %v2807
    %v2876 = vunpack.c.h.b16 %v2807
    %v2877 = vunpack.c.l.b16 %v2808
    %v2878 = vunpack.c.h.b16 %v2808
    %v2879 = vunpack.c.l.b16 %v2809
    %v2880 = vunpack.c.h.b16 %v2809
    %v2881 = vunpack.c.l.b16 %v2810
    %v2882 = vunpack.c.h.b16 %v2810
    %v2883 = vunpack.c.l.b16 %v2811
    %v2884 = vunpack.c.h.b16 %v2811
    %v2885 = vunpack.c.l.b16 %v2812
    %v2886 = vunpack.c.h.b16 %v2812
    %v2887 = vunpack.c.l.b16 %v2813
    %v2888 = vunpack.c.h.b16 %v2813
    %v2889 = vunpack.c.l.b16 %v2814
    %v2890 = vunpack.c.h.b16 %v2814
    %v2891 = vunpack.c.l.b16 %v2815
    %v2892 = vunpack.c.h.b16 %v2815
    %v2893 = vunpack.c.l.b16 %v2816
    %v2894 = vunpack.c.h.b16 %v2816
    %v2895 = vunpack.c.l.b16 %v2817
    %v2896 = vunpack.c.h.b16 %v2817
    %v2897 = vunpack.c.l.b16 %v2818
    %v2898 = vunpack.c.h.b16 %v2818
    %v2899 = vunpack.c.l.b16 %v2819
    %v2900 = vunpack.c.h.b16 %v2819
    %v2901 = vunpack.c.l.b16 %v2820
    %v2902 = vunpack.c.h.b16 %v2820
    %v2903 = vunpack.c.l.b16 %v2821
    %v2904 = vunpack.c.h.b16 %v2821
    %v2905 = vunpack.c.l.b16 %v2822
    %v2906 = vunpack.c.h.b16 %v2822
    %v2907 = vunpack.c.l.b16 %v2823
    %v2908 = vunpack.c.h.b16 %v2823
    %v2909 = vunpack.c.l.b16 %v2824
    %v2910 = vunpack.c.h.b16 %v2824
    %v2911 = vunpack.c.l.b16 %v2825
    %v2912 = vunpack.c.h.b16 %v2825
    %v2913 = vunpack.c.l.b16 %v2826
    %v2914 = vunpack.c.h.b16 %v2826
    %v2915 = vunpack.c.l.b16 %v2827
    %v2916 = vunpack.c.h.b16 %v2827
    %v2917 = vunpack.c.l.b16 %v2828
    %v2918 = vunpack.c.h.b16 %v2828
    %v2919 = vunpack.c.l.b16 %v2829
    %v2920 = vunpack.c.h.b16 %v2829
    %v2921 = vunpack.c.l.b16 %v2830
    %v2922 = vunpack.c.h.b16 %v2830
    %v2923 = vunpack.c.l.b16 %v2831
    %v2924 = vunpack.c.h.b16 %v2831
    %v2925 = vunpack.c.l.b16 %v2832
    %v2926 = vunpack.c.h.b16 %v2832
    %v2927 = vunpack.c.l.b16 %v2833
    %v2928 = vunpack.c.h.b16 %v2833
    %v2929 = vunpack.c.l.b16 %v2834
    %v2930 = vunpack.c.h.b16 %v2834
    %v2931 = vpack.c.b16 %v2867, %v2867
    %v2932 = vpack.c.b16 %v2868, %v2868
    %v2933 = vpack.c.b16 %v2869, %v2869
    %v2934 = vpack.c.b16 %v2870, %v2870
    %v2935 = vpack.c.b16 %v2871, %v2871
    %v2936 = vpack.c.b16 %v2872, %v2872
    %v2937 = vpack.c.b16 %v2873, %v2873
    %v2938 = vpack.c.b16 %v2874, %v2874
    %v2939 = vpack.c.b16 %v2875, %v2875
    %v2940 = vpack.c.b16 %v2876, %v2876
    %v2941 = vpack.c.b16 %v2877, %v2877
    %v2942 = vpack.c.b16 %v2878, %v2878
    %v2943 = vpack.c.b16 %v2879, %v2879
    %v2944 = vpack.c.b16 %v2880, %v2880
    %v2945 = vpack.c.b16 %v2881, %v2881
    %v2946 = vpack.c.b16 %v2882, %v2882
    %v2947 = vpack.c.b16 %v2883, %v2883
    %v2948 = vpack.c.b16 %v2884, %v2884
    %v2949 = vpack.c.b16 %v2885, %v2885
    %v2950 = vpack.c.b16 %v2886, %v2886
    %v2951 = vpack.c.b16 %v2887, %v2887
    %v2952 = vpack.c.b16 %v2888, %v2888
    %v2953 = vpack.c.b16 %v2889, %v2889
    %v2954 = vpack.c.b16 %v2890, %v2890
    %v2955 = vpack.c.b16 %v2891, %v2891
    %v2956 = vpack.c.b16 %v2892, %v2892
    %v2957 = vpack.c.b16 %v2893, %v2893
    %v2958 = vpack.c.b16 %v2894, %v2894
    %v2959 = vpack.c.b16 %v2895, %v2895
    %v2960 = vpack.c.b16 %v2896, %v2896
    %v2961 = vpack.c.b16 %v2897, %v2897
    %v2962 = vpack.c.b16 %v2898, %v2898
    %v2963 = vpack.c.b16 %v2899, %v2899
    %v2964 = vpack.c.b16 %v2900, %v2900
    %v2965 = vpack.c.b16 %v2901, %v2901
    %v2966 = vpack.c.b16 %v2902, %v2902
    %v2967 = vpack.c.b16 %v2903, %v2903
    %v2968 = vpack.c.b16 %v2904, %v2904
    %v2969 = vpack.c.b16 %v2905, %v2905
    %v2970 = vpack.c.b16 %v2906, %v2906
    %v2971 = vpack.c.b16 %v2907, %v2907
    %v2972 = vpack.c.b16 %v2908, %v2908
    %v2973 = vpack.c.b16 %v2909, %v2909
    %v2974 = vpack.c.b16 %v2910, %v2910
    %v2975 = vpack.c.b16 %v2911, %v2911
    %v2976 = vpack.c.b16 %v2912, %v2912
    %v2977 = vpack.c.b16 %v2913, %v2913
    %v2978 = vpack.c.b16 %v2914, %v2914
    %v2979 = vpack.c.b16 %v2915, %v2915
    %v2980 = vpack.c.b16 %v2916, %v2916
    %v2981 = vpack.c.b16 %v2917, %v2917
    %v2982 = vpack.c.b16 %v2918, %v2918
    %v2983 = vpack.c.b16 %v2919, %v2919
    %v2984 = vpack.c.b16 %v2920, %v2920
    %v2985 = vpack.c.b16 %v2921, %v2921
    %v2986 = vpack.c.b16 %v2922, %v2922
    %v2987 = vpack.c.b16 %v2923, %v2923
    %v2988 = vpack.c.b16 %v2924, %v2924
    %v2989 = vpack.c.b16 %v2925, %v2925
    %v2990 = vpack.c.b16 %v2926, %v2926
    %v2991 = vpack.c.b16 %v2927, %v2927
    %v2992 = vpack.c.b16 %v2928, %v2928
    %v2993 = vpack.c.b16 %v2929, %v2929
    %v2994 = vpack.c.b16 %v2930, %v2930
    %3059 = vst [vmem:[#allocation4] sm:$0xf] %v2931
    %3060 = vst [vmem:[#allocation4 + $0x4] sm:$0xf] %v2932
    %3061 = vst [vmem:[#allocation4 + $0x8] sm:$0xf] %v2933
    %3062 = vst [vmem:[#allocation4 + $0xc] sm:$0xf] %v2934
    %3063 = vst [vmem:[#allocation4 + $0x10] sm:$0xf] %v2935
    %3064 = vst [vmem:[#allocation4 + $0x14] sm:$0xf] %v2936
    %3065 = vst [vmem:[#allocation4 + $0x18] sm:$0xf] %v2937
    %3066 = vst [vmem:[#allocation4 + $0x1c] sm:$0xf] %v2938
    %3067 = vst [vmem:[#allocation4 + $0x20] sm:$0xf] %v2939
    %3068 = vst [vmem:[#allocation4 + $0x24] sm:$0xf] %v2940
    %3069 = vst [vmem:[#allocation4 + $0x28] sm:$0xf] %v2941
    %3070 = vst [vmem:[#allocation4 + $0x2c] sm:$0xf] %v2942
    %3071 = vst [vmem:[#allocation4 + $0x30] sm:$0xf] %v2943
    %3072 = vst [vmem:[#allocation4 + $0x34] sm:$0xf] %v2944
    %3073 = vst [vmem:[#allocation4 + $0x38] sm:$0xf] %v2945
    %3074 = vst [vmem:[#allocation4 + $0x3c] sm:$0xf] %v2946
    %3075 = vst [vmem:[#allocation4 + $0x40] sm:$0xf] %v2947
    %3076 = vst [vmem:[#allocation4 + $0x44] sm:$0xf] %v2948
    %3077 = vst [vmem:[#allocation4 + $0x48] sm:$0xf] %v2949
    %3078 = vst [vmem:[#allocation4 + $0x4c] sm:$0xf] %v2950
    %3079 = vst [vmem:[#allocation4 + $0x50] sm:$0xf] %v2951
    %3080 = vst [vmem:[#allocation4 + $0x54] sm:$0xf] %v2952
    %3081 = vst [vmem:[#allocation4 + $0x58] sm:$0xf] %v2953
    %3082 = vst [vmem:[#allocation4 + $0x5c] sm:$0xf] %v2954
    %3083 = vst [vmem:[#allocation4 + $0x60] sm:$0xf] %v2955
    %3084 = vst [vmem:[#allocation4 + $0x64] sm:$0xf] %v2956
    %3085 = vst [vmem:[#allocation4 + $0x68] sm:$0xf] %v2957
    %3086 = vst [vmem:[#allocation4 + $0x6c] sm:$0xf] %v2958
    %3087 = vst [vmem:[#allocation4 + $0x70] sm:$0xf] %v2959
    %3088 = vst [vmem:[#allocation4 + $0x74] sm:$0xf] %v2960
    %3089 = vst [vmem:[#allocation4 + $0x78] sm:$0xf] %v2961
    %3090 = vst [vmem:[#allocation4 + $0x7c] sm:$0xf] %v2962
    %3091 = vst [vmem:[#allocation4 + $0x80] sm:$0xf] %v2963
    %3092 = vst [vmem:[#allocation4 + $0x84] sm:$0xf] %v2964
    %3093 = vst [vmem:[#allocation4 + $0x88] sm:$0xf] %v2965
    %3094 = vst [vmem:[#allocation4 + $0x8c] sm:$0xf] %v2966
    %3095 = vst [vmem:[#allocation4 + $0x90] sm:$0xf] %v2967
    %3096 = vst [vmem:[#allocation4 + $0x94] sm:$0xf] %v2968
    %3097 = vst [vmem:[#allocation4 + $0x98] sm:$0xf] %v2969
    %3098 = vst [vmem:[#allocation4 + $0x9c] sm:$0xf] %v2970
    %3099 = vst [vmem:[#allocation4 + $0xa0] sm:$0xf] %v2971
    %3100 = vst [vmem:[#allocation4 + $0xa4] sm:$0xf] %v2972
    %3101 = vst [vmem:[#allocation4 + $0xa8] sm:$0xf] %v2973
    %3102 = vst [vmem:[#allocation4 + $0xac] sm:$0xf] %v2974
    %3103 = vst [vmem:[#allocation4 + $0xb0] sm:$0xf] %v2975
    %3104 = vst [vmem:[#allocation4 + $0xb4] sm:$0xf] %v2976
    %3105 = vst [vmem:[#allocation4 + $0xb8] sm:$0xf] %v2977
    %3106 = vst [vmem:[#allocation4 + $0xbc] sm:$0xf] %v2978
    %3107 = vst [vmem:[#allocation4 + $0xc0] sm:$0xf] %v2979
    %3108 = vst [vmem:[#allocation4 + $0xc4] sm:$0xf] %v2980
    %3109 = vst [vmem:[#allocation4 + $0xc8] sm:$0xf] %v2981
    %3110 = vst [vmem:[#allocation4 + $0xcc] sm:$0xf] %v2982
    %3111 = vst [vmem:[#allocation4 + $0xd0] sm:$0xf] %v2983
    %3112 = vst [vmem:[#allocation4 + $0xd4] sm:$0xf] %v2984
    %3113 = vst [vmem:[#allocation4 + $0xd8] sm:$0xf] %v2985
    %3114 = vst [vmem:[#allocation4 + $0xdc] sm:$0xf] %v2986
    %3115 = vst [vmem:[#allocation4 + $0xe0] sm:$0xf] %v2987
    %3116 = vst [vmem:[#allocation4 + $0xe4] sm:$0xf] %v2988
    %3117 = vst [vmem:[#allocation4 + $0xe8] sm:$0xf] %v2989
    %3118 = vst [vmem:[#allocation4 + $0xec] sm:$0xf] %v2990
    %3119 = vst [vmem:[#allocation4 + $0xf0] sm:$0xf] %v2991
    %3120 = vst [vmem:[#allocation4 + $0xf4] sm:$0xf] %v2992
    %3121 = vst [vmem:[#allocation4 + $0xf8] sm:$0xf] %v2993
    %3122 = vst [vmem:[#allocation4 + $0xfc] sm:$0xf] %v2994
    // Predicated region
    $region22: #{tpu_custom_call.1} parent=1 // pred_check
      _
    $region23: #{tpu_custom_call.1} parent=1 // pred_check_branch
      %3124 = sbr.rel (0) target = $region25
    $region24: #{tpu_custom_call.1} parent=1 // pred_region
      %s3126 = ssub.s32 4096, 4096
      %3127 = vsyncadd [#allocation3], %s3126
      %s3128 = sshll.u32 [#allocation2], 4
      %s3129 = int_to_ptr.vmem [resolvable:$true] %s3128
      %3134 = dma.vmem_to_hbm [thread:$0]  %s3129, 4096, %s5, [#allocation3], 64, 64, 4
    $region25: #{tpu_custom_call.1} parent=1 // pred_fallthru
      _
    // Predicated region
    $region26: #{tpu_custom_call.1} parent=1 // pred_check
      _
    $region27: #{tpu_custom_call.1} parent=1 // pred_check_branch
      %3136 = sbr.rel (0) target = $region29
    $region28: #{tpu_custom_call.1} parent=1 // pred_region
      %s3138 = ssub.s32 4096, 4096
      %3139 = vsyncadd [#allocation5], %s3138
      %s3140 = sshll.u32 [#allocation4], 4
      %s3141 = int_to_ptr.vmem [resolvable:$true] %s3140
      %3146 = dma.vmem_to_hbm [thread:$0]  %s3141, 4096, %s6, [#allocation5], 64, 64, 4
    $region29: #{tpu_custom_call.1} parent=1 // pred_fallthru
      _
    // Predicated region
    $region30: #{tpu_custom_call.1} parent=1 // pred_check
      _
    $region31: #{tpu_custom_call.1} parent=1 // pred_check_branch
      %3148 = sbr.rel (0) target = $region33
    $region32: #{tpu_custom_call.1} parent=1 // pred_region
      %3149 = dma.done [#allocation3], 4096
    $region33: #{tpu_custom_call.1} parent=1 // pred_fallthru
      _
    // Predicated region
    $region34: #{tpu_custom_call.1} parent=1 // pred_check
      _
    $region35: #{tpu_custom_call.1} parent=1 // pred_check_branch
      %3151 = sbr.rel (0) target = $region37
    $region36: #{tpu_custom_call.1} parent=1 // pred_region
      %3152 = dma.done [#allocation5], 4096
    $region37: #{tpu_custom_call.1} parent=1 // pred_fallthru
      _
    %3153 = vsyncpa [#allocation3], 1
    %3154 = vsyncpa [#allocation5], 1

</llo_original>
